<compile_context>
chip_gen: v7x
topology: tpu7x:2x2x1
jax: 0.10.0
libtpu: 0.0.40
codegen_flags: <defaults>
</compile_context>

<pallas_src>
import numpy as np
import jax
import jax.numpy as jnp
from jax.experimental import pallas as pl
from jax.experimental.pallas import tpu as pltpu

NV = 778     # MANO vertices
NVP = 896    # lane-padded vertex count (7 * 128)
NJ = 16      # MANO joints
NB = 10      # shape (beta) coefficients
NP = 135     # pose-blendshape features (15 joints * 9)
NK = NB + NP                       # 145 fused blendshape coefficients
KP = 160                           # padded K (multiple of 16 for bf16 tiling)


# -----------------------------------------------------------------------------
# Pallas kernel: fused blendshapes + LBS skinning + joint regression per tile
# -----------------------------------------------------------------------------
def skin_kernel(bp_ref, a_ref, sdpd_ref, vt_ref, wT_ref, jreg_ref,
                verts_ref, joints_ref):
    # bp_ref:   (Nb, KP) f32      -- [beta | pose_feature | 0-pad]
    # a_ref:    (3, 4*Nb, 16) bf16-- a_ref[r, c*Nb+n, j] = A[n, j, r, c]
    # sdpd_ref: (KP, 3*NVP) bf16  -- [shapedirs ; posedirs ; 0], coord-major
    # vt_ref:   (1, 3*NVP) f32    -- v_template, coord-major, lane-padded
    # wT_ref:   (16, NVP) bf16    -- LBS weights^T, lane-padded
    # jreg_ref: (NVP, 16) bf16    -- joint regressor, sublane-padded
    # verts_ref:(3, Nb, NVP) f32   joints_ref:(3, Nb, 16) f32
    nb = bp_ref.shape[0]
    nvp = wT_ref.shape[1]

    # Single fused blendshape gemm (bf16 operands, f32 acc) + f32 template add.
    bp = bp_ref[...].astype(jnp.bfloat16)
    vposed = (jnp.dot(bp, sdpd_ref[...], preferred_element_type=jnp.float32)
              + vt_ref[...])                                  # (Nb, 3*NVP) f32
    vpx = vposed[:, 0 * nvp:1 * nvp]
    vpy = vposed[:, 1 * nvp:2 * nvp]
    vpz = vposed[:, 2 * nvp:3 * nvp]

    wT = wT_ref[...]
    # One output coordinate at a time: each (4*Nb,16)@(16,NVP) gemm is consumed
    # immediately into vx/vy/vz and stored, so no 12*Nb x NVP slab is ever live.
    for r in range(3):
        s = jnp.dot(a_ref[r], wT, preferred_element_type=jnp.float32)
        v_r = (s[0 * nb:1 * nb, :] * vpx
               + s[1 * nb:2 * nb, :] * vpy
               + s[2 * nb:3 * nb, :] * vpz
               + s[3 * nb:4 * nb, :])
        verts_ref[r, :, :] = v_r

    # Joint regression as ONE (3*Nb, NVP) @ (NVP, 16) gemm on the written verts.
    vall = verts_ref[...].reshape(3 * nb, nvp).astype(jnp.bfloat16)
    jall = jnp.dot(vall, jreg_ref[...], preferred_element_type=jnp.float32)
    joints_ref[...] = jall.reshape(3, nb, NJ)


# -----------------------------------------------------------------------------
# Plain-JAX glue (tiny / sequential math)
# -----------------------------------------------------------------------------
def quat2mat(quat):
    nq = quat / jnp.linalg.norm(quat, axis=1, keepdims=True)
    w, x, y, z = nq[:, 0], nq[:, 1], nq[:, 2], nq[:, 3]
    w2, x2, y2, z2 = w * w, x * x, y * y, z * z
    wx, wy, wz = w * x, w * y, w * z
    xy, xz, yz = x * y, x * z, y * z
    rot = jnp.stack([w2 + x2 - y2 - z2, 2 * xy - 2 * wz, 2 * wy + 2 * xz,
                     2 * wz + 2 * xy, w2 - x2 + y2 - z2, 2 * yz - 2 * wx,
                     2 * xz - 2 * wy, 2 * wx + 2 * yz, w2 - x2 - y2 + z2],
                    axis=1).reshape(-1, 3, 3)
    return rot


def batch_rodrigues(theta):
    # theta: (K, 3) axis-angle
    angle = jnp.sqrt(jnp.sum((theta + 1e-8) ** 2, axis=1, keepdims=True))
    normalized = theta / angle
    half = angle * 0.5
    quat = jnp.concatenate([jnp.cos(half), jnp.sin(half) * normalized], axis=1)
    return quat2mat(quat)


def batch_global_rigid_transformation(Rs, Js, parents, rotate_base=True):
    N = Rs.shape[0]
    if rotate_base:
        rot_x = jnp.array([[1., 0., 0.], [0., -1., 0.], [0., 0., -1.]],
                          dtype=jnp.float32)
        root_rotation = jnp.matmul(Rs[:, 0], rot_x)
    else:
        root_rotation = Rs[:, 0]
    Js_e = Js[..., None]                                   # (N, 16, 3, 1)

    def make_A(R, t):
        R_homo = jnp.pad(R, ((0, 0), (0, 1), (0, 0)))      # (N, 4, 3)
        t_homo = jnp.concatenate(
            [t, jnp.ones((N, 1, 1), dtype=jnp.float32)], axis=1)  # (N, 4, 1)
        return jnp.concatenate([R_homo, t_homo], axis=2)   # (N, 4, 4)

    results = [make_A(root_rotation, Js_e[:, 0])]
    for i in range(1, parents.shape[0]):
        j_here = Js_e[:, i] - Js_e[:, int(parents[i])]
        A_here = make_A(Rs[:, i], j_here)
        results.append(jnp.matmul(results[int(parents[i])], A_here))
    results = jnp.stack(results, axis=1)                   # (N, 16, 4, 4)

    new_J = results[:, :, :3, 3]
    Js_w0 = jnp.concatenate(
        [Js_e, jnp.zeros((N, NJ, 1, 1), dtype=jnp.float32)], axis=2)
    init_bone = jnp.matmul(results, Js_w0)                 # (N, 16, 4, 1)
    init_bone = jnp.pad(init_bone, ((0, 0), (0, 0), (0, 0), (3, 0)))
    A = results - init_bone
    return new_J, A


def _round_up(x, m):
    return (x + m - 1) // m * m


# -----------------------------------------------------------------------------
# Pallas-backed MANO forward
# -----------------------------------------------------------------------------
def mano_forward(P, beta, theta, get_skin=True, block_n=128):
    N = beta.shape[0]
    # Batch tile: multiple of 8, and sized so that small / medium batches still
    # produce >= 2 grid steps (keeps both v7x TensorCores busy).
    if N <= 2 * block_n:
        Nb = min(block_n, max(8, _round_up(-(-N // 2), 8)))
    else:
        Nb = block_n
    n_tiles = max(2, -(-N // Nb))
    N_pad = n_tiles * Nb

    # ---- shape blendshapes + joint regression (tiny; kept in XLA) ----
    v_shaped = (beta @ P["shapedirs_mat"]).reshape(N, NV, 3) + P["v_template"]
    J = jnp.stack([v_shaped[:, :, c] @ P["jreg"] for c in range(3)], axis=2)

    # ---- rotations + sequential kinematic chain (plain JAX) ----
    Rs = batch_rodrigues(theta.reshape(-1, 3)).reshape(N, NJ, 3, 3)
    pose_feature = (Rs[:, 1:, :, :]
                    - jnp.eye(3, dtype=jnp.float32)).reshape(N, NP)
    _J_transformed, A = batch_global_rigid_transformation(
        Rs, J, P["parents"], rotate_base=True)             # A: (N, 16, 4, 4)

    # Fused blendshape coefficients [beta | pose_feature], padded to KP cols.
    bp = jnp.concatenate([beta, pose_feature], axis=1)      # (N, 145)
    bp_p = jnp.pad(bp, ((0, N_pad - N), (0, KP - NK)))      # (N_pad, 160) f32

    # Per-coordinate A layout: block row [r, c*Nb + n] = A[tile*Nb+n, :, r, c]
    A12 = jnp.transpose(A[:, :, :3, :], (2, 3, 0, 1))       # (3, 4, N, 16)
    A12 = jnp.pad(A12, ((0, 0), (0, 0), (0, N_pad - N), (0, 0)))
    A_stack = (A12.reshape(3, 4, n_tiles, Nb, NJ)
                  .transpose(2, 0, 1, 3, 4)
                  .reshape(n_tiles * 3, 4 * Nb, NJ)
                  .astype(jnp.bfloat16))                    # (3*n_tiles, 4Nb, 16)

    # Advisory cost estimate (helps XLA overlap the JAX glue with the kernel).
    flops_per_tile = (2 * Nb * KP * 3 * NVP
                      + 3 * 2 * (4 * Nb) * NJ * NVP
                      + 2 * (3 * Nb) * NVP * NJ)
    const_bytes = (KP * 3 * NVP * 2 + 3 * NVP * 4
                   + NJ * NVP * 2 + NVP * NJ * 2)
    bytes_accessed = (N_pad * KP * 4 + n_tiles * 3 * 4 * Nb * NJ * 2
                      + const_bytes
                      + 3 * N_pad * NVP * 4 + 3 * N_pad * NJ * 4)

    verts_xyz, joints_xyz = pl.pallas_call(
        skin_kernel,
        grid=(n_tiles,),
        in_specs=[
            pl.BlockSpec((Nb, KP), lambda i: (i, 0)),            # [beta|pose]
            pl.BlockSpec((3, 4 * Nb, NJ), lambda i: (i, 0, 0)),  # A entries
            pl.BlockSpec((KP, 3 * NVP), lambda i: (0, 0)),       # sd+pd bf16
            pl.BlockSpec((1, 3 * NVP), lambda i: (0, 0)),        # v_template
            pl.BlockSpec((NJ, NVP), lambda i: (0, 0)),           # weights^T
            pl.BlockSpec((NVP, NJ), lambda i: (0, 0)),           # J regressor
        ],
        out_specs=[
            pl.BlockSpec((3, Nb, NVP), lambda i: (0, i, 0)),
            pl.BlockSpec((3, Nb, NJ), lambda i: (0, i, 0)),
        ],
        out_shape=[
            jax.ShapeDtypeStruct((3, N_pad, NVP), jnp.float32),
            jax.ShapeDtypeStruct((3, N_pad, NJ), jnp.float32),
        ],
        compiler_params=pltpu.CompilerParams(
            dimension_semantics=("parallel",),
            vmem_limit_bytes=32 * 1024 * 1024),
        cost_estimate=pl.CostEstimate(
            flops=n_tiles * flops_per_tile,
            transcendentals=0,
            bytes_accessed=bytes_accessed),
    )(bp_p, A_stack, P["sdpd_flat"], P["vt_flat"], P["wT_pad"], P["jreg_pad"])

    # Match the PyTorch return layout (N, 778, 3) / (N, 16, 3).
    verts = jnp.transpose(verts_xyz[:, :N, :NV], (1, 2, 0))
    joints = jnp.transpose(joints_xyz[:, :N, :], (1, 2, 0))
    if get_skin:
        return verts, joints, Rs
    return joints


# -----------------------------------------------------------------------------
# Pure-JAX reference (mirrors the PyTorch forward exactly) for validation
# -----------------------------------------------------------------------------
def mano_forward_ref(P, beta, theta):
    N = beta.shape[0]
    v_shaped = (beta @ P["shapedirs_mat"]).reshape(N, NV, 3) + P["v_template"]
    J = jnp.stack([v_shaped[:, :, c] @ P["jreg"] for c in range(3)], axis=2)
    Rs = batch_rodrigues(theta.reshape(-1, 3)).reshape(N, NJ, 3, 3)
    pose_feature = (Rs[:, 1:, :, :]
                    - jnp.eye(3, dtype=jnp.float32)).reshape(N, NP)
    v_posed = (pose_feature @ P["posedirs_mat"]).reshape(N, NV, 3) + v_shaped
    _, A = batch_global_rigid_transformation(Rs, J, P["parents"], rotate_base=True)
    W = jnp.broadcast_to(P["weights"], (N, NV, NJ))
    # NOTE: relies on 4*4 == NJ == 16 (true for MANO).
    T = jnp.matmul(W, A.reshape(N, NJ, 16)).reshape(N, NV, 4, 4)
    vph = jnp.concatenate(
        [v_posed, jnp.ones((N, NV, 1), dtype=jnp.float32)], axis=2)
    v_homo = jnp.matmul(T, vph[..., None])
    verts = v_homo[:, :, :3, 0]
    joints = jnp.stack([verts[:, :, c] @ P["jreg"] for c in range(3)], axis=2)
    return verts, joints, Rs


# -----------------------------------------------------------------------------
# Deterministic synthetic MANO parameters (shapes as in the real model data)
# -----------------------------------------------------------------------------
def init_params(key):
    k0, k1, k2, k3, k4 = jax.random.split(key, 5)
    v_template = jax.random.normal(k0, (NV, 3), jnp.float32) * 0.1
    shapedirs = jax.random.normal(k1, (NV, 3, NB), jnp.float32) * 0.01
    posedirs = jax.random.normal(k2, (NV, 3, NP), jnp.float32) * 0.005
    # J_regressor.T.todense() -> (778, 16); columns sum to 1 like a regressor
    jreg = jax.nn.softmax(jax.random.normal(k3, (NV, NJ), jnp.float32), axis=0)
    # LBS weights, rows sum to 1
    weights = jax.nn.softmax(
        jax.random.normal(k4, (NV, NJ), jnp.float32) * 2.0, axis=1)
    parents = np.array([-1, 0, 1, 2, 0, 4, 5, 0, 7, 8, 0, 10, 11, 0, 13, 14],
                       dtype=np.int32)   # kintree_table[0]

    pad = NVP - NV
    # Coordinate-major, lane-padded kernel layouts: column = c * NVP + v.
    sd_c = jnp.transpose(shapedirs, (2, 1, 0))                # (10, 3, 778)
    pd_c = jnp.transpose(posedirs, (2, 1, 0))                 # (135, 3, 778)
    sdpd = jnp.concatenate([sd_c, pd_c], axis=0)              # (145, 3, 778)
    sdpd = jnp.pad(sdpd, ((0, KP - NK), (0, 0), (0, pad)))
    sdpd_flat = sdpd.reshape(KP, 3 * NVP).astype(jnp.bfloat16)
    vt_flat = jnp.pad(v_template.T, ((0, 0), (0, pad))).reshape(1, 3 * NVP)
    wT_pad = jnp.pad(weights.T, ((0, 0), (0, pad))).astype(jnp.bfloat16)
    jreg_pad = jnp.pad(jreg, ((0, pad), (0, 0))).astype(jnp.bfloat16)

    P = {
        # reference-layout parameters (match the PyTorch buffers)
        "v_template": v_template,
        "shapedirs_mat": shapedirs.reshape(NV * 3, NB).T,     # (10, 2334)
        "posedirs_mat": posedirs.reshape(NV * 3, NP).T,       # (135, 2334)
        "jreg": jreg,                                         # (778, 16)
        "weights": weights,                                   # (778, 16)
        "parents": parents,
        # kernel-layout variants (lane-padded to 896, coordinate-major, bf16)
        "sdpd_flat": sdpd_flat,                               # (160, 2688) bf16
        "vt_flat": vt_flat,                                   # (1, 2688) f32
        "wT_pad": wT_pad,                                     # (16, 896) bf16
        "jreg_pad": jreg_pad,                                 # (896, 16) bf16
    }
    return P


if __name__ == "__main__":
    key = jax.random.PRNGKey(0)
    kp, kb, kt = jax.random.split(key, 3)
    P = init_params(kp)

    N = 2
    beta = jax.random.normal(kb, (N, NB), jnp.float32)             # N x 10
    theta = jax.random.normal(kt, (N, 48), jnp.float32) * 0.3      # N x 48

    verts, joints, Rs = mano_forward(P, beta, theta, get_skin=True)
    jax.block_until_ready((verts, joints, Rs))

    v_ref, j_ref2, r_ref = mano_forward_ref(P, beta, theta)
    np.testing.assert_allclose(np.asarray(verts), np.asarray(v_ref),
                               atol=1e-2, rtol=1e-2)
    np.testing.assert_allclose(np.asarray(joints), np.asarray(j_ref2),
                               atol=1e-2, rtol=1e-2)
    np.testing.assert_allclose(np.asarray(Rs), np.asarray(r_ref),
                               atol=1e-4, rtol=1e-4)

    print("KERNEL_OK")
</pallas_src>

<mosaic_0001>
module attributes {stable_mosaic.version = 11 : i64} {
  func.func @skin_kernel(%arg0: i32, %arg1: memref<8x160xf32, #tpu.memory_space<vmem>>, %arg2: memref<3x32x16xbf16, #tpu.memory_space<vmem>>, %arg3: memref<160x2688xbf16, #tpu.memory_space<vmem>>, %arg4: memref<1x2688xf32, #tpu.memory_space<vmem>>, %arg5: memref<16x896xbf16, #tpu.memory_space<vmem>>, %arg6: memref<896x16xbf16, #tpu.memory_space<vmem>>, %arg7: memref<3x8x896xf32, #tpu.memory_space<vmem>>, %arg8: memref<3x8x16xf32, #tpu.memory_space<vmem>>) attributes {dimension_semantics = [#tpu.dimension_semantics<parallel>], iteration_bounds = array<i64: 2>, scalar_prefetch = 0 : i64, scratch_operands = 0 : i64, tpu.core_type = #tpu.core_type<tc>, window_params = [{transform_indices = @transform_0, window_bounds = array<i64: 8, 160>}, {transform_indices = @transform_1, window_bounds = array<i64: 3, 32, 16>}, {pipeline_mode = #tpu.pipeline_mode<synchronous>, transform_indices = @transform_2, window_bounds = array<i64: 160, 2688>}, {pipeline_mode = #tpu.pipeline_mode<synchronous>, transform_indices = @transform_3, window_bounds = array<i64: 1, 2688>}, {pipeline_mode = #tpu.pipeline_mode<synchronous>, transform_indices = @transform_4, window_bounds = array<i64: 16, 896>}, {pipeline_mode = #tpu.pipeline_mode<synchronous>, transform_indices = @transform_5, window_bounds = array<i64: 896, 16>}, {transform_indices = @transform_6, window_bounds = array<i64: 3, 8, 896>}, {transform_indices = @transform_7, window_bounds = array<i64: 3, 8, 16>}]} {
    %c0 = arith.constant 0 : index
    %c0_0 = arith.constant 0 : index
    %0 = vector.load %arg1[%c0, %c0_0] : memref<8x160xf32, #tpu.memory_space<vmem>>, vector<8x160xf32>
    %1 = arith.truncf %0 : vector<8x160xf32> to vector<8x160xbf16>
    %c0_1 = arith.constant 0 : index
    %c0_2 = arith.constant 0 : index
    %2 = vector.load %arg3[%c0_1, %c0_2] : memref<160x2688xbf16, #tpu.memory_space<vmem>>, vector<160x2688xbf16>
    %cst = arith.constant dense<0.000000e+00> : vector<8x2688xf32>
    %3 = tpu.matmul %1, %2, %cst {dimension_numbers = #tpu.dot_dimension_numbers<[1], [0], [0], [1], [0, 0, 1, 1], [], []>} : vector<8x160xbf16>, vector<160x2688xbf16>, vector<8x2688xf32> -> vector<8x2688xf32>
    %c0_3 = arith.constant 0 : index
    %c0_4 = arith.constant 0 : index
    %4 = vector.load %arg4[%c0_3, %c0_4] : memref<1x2688xf32, #tpu.memory_space<vmem>>, vector<1x2688xf32>
    %5 = vector.broadcast %4 : vector<1x2688xf32> to vector<8x2688xf32>
    %6 = arith.addf %3, %5 : vector<8x2688xf32>
    %7 = vector.extract_strided_slice %6 {offsets = [0, 0], sizes = [8, 896], strides = [1, 1]} : vector<8x2688xf32> to vector<8x896xf32>
    %8 = vector.extract_strided_slice %6 {offsets = [0, 896], sizes = [8, 896], strides = [1, 1]} : vector<8x2688xf32> to vector<8x896xf32>
    %9 = vector.extract_strided_slice %6 {offsets = [0, 1792], sizes = [8, 896], strides = [1, 1]} : vector<8x2688xf32> to vector<8x896xf32>
    %c0_5 = arith.constant 0 : index
    %c0_6 = arith.constant 0 : index
    %10 = vector.load %arg5[%c0_5, %c0_6] : memref<16x896xbf16, #tpu.memory_space<vmem>>, vector<16x896xbf16>
    %c0_7 = arith.constant 0 : index
    %c0_8 = arith.constant 0 : index
    %c0_9 = arith.constant 0 : index
    %11 = vector.load %arg2[%c0_7, %c0_8, %c0_9] : memref<3x32x16xbf16, #tpu.memory_space<vmem>>, vector<1x32x16xbf16>
    %12 = vector.shape_cast %11 : vector<1x32x16xbf16> to vector<32x16xbf16>
    %cst_10 = arith.constant dense<0.000000e+00> : vector<32x896xf32>
    %13 = tpu.matmul %12, %10, %cst_10 {dimension_numbers = #tpu.dot_dimension_numbers<[1], [0], [0], [1], [0, 0, 1, 1], [], []>} : vector<32x16xbf16>, vector<16x896xbf16>, vector<32x896xf32> -> vector<32x896xf32>
    %14 = vector.extract_strided_slice %13 {offsets = [0, 0], sizes = [8, 896], strides = [1, 1]} : vector<32x896xf32> to vector<8x896xf32>
    %15 = arith.mulf %14, %7 : vector<8x896xf32>
    %16 = vector.extract_strided_slice %13 {offsets = [8, 0], sizes = [8, 896], strides = [1, 1]} : vector<32x896xf32> to vector<8x896xf32>
    %17 = arith.mulf %16, %8 : vector<8x896xf32>
    %18 = arith.addf %15, %17 : vector<8x896xf32>
    %19 = vector.extract_strided_slice %13 {offsets = [16, 0], sizes = [8, 896], strides = [1, 1]} : vector<32x896xf32> to vector<8x896xf32>
    %20 = arith.mulf %19, %9 : vector<8x896xf32>
    %21 = arith.addf %18, %20 : vector<8x896xf32>
    %22 = vector.extract_strided_slice %13 {offsets = [24, 0], sizes = [8, 896], strides = [1, 1]} : vector<32x896xf32> to vector<8x896xf32>
    %23 = arith.addf %21, %22 : vector<8x896xf32>
    %c0_11 = arith.constant 0 : index
    %c0_12 = arith.constant 0 : index
    %c0_13 = arith.constant 0 : index
    %24 = vector.load %arg7[%c0_11, %c0_12, %c0_13] : memref<3x8x896xf32, #tpu.memory_space<vmem>>, vector<1x8x896xf32>
    %25 = vector.shape_cast %24 : vector<1x8x896xf32> to vector<8x896xf32>
    %26 = vector.shape_cast %23 : vector<8x896xf32> to vector<1x8x896xf32>
    tpu.vector_store %arg7[%c0_11, %c0_12, %c0_13], %26 {strides = array<i32>} : memref<3x8x896xf32, #tpu.memory_space<vmem>>, vector<1x8x896xf32>,
    %c1 = arith.constant 1 : index
    %c0_14 = arith.constant 0 : index
    %c0_15 = arith.constant 0 : index
    %27 = vector.load %arg2[%c1, %c0_14, %c0_15] : memref<3x32x16xbf16, #tpu.memory_space<vmem>>, vector<1x32x16xbf16>
    %28 = vector.shape_cast %27 : vector<1x32x16xbf16> to vector<32x16xbf16>
    %cst_16 = arith.constant dense<0.000000e+00> : vector<32x896xf32>
    %29 = tpu.matmul %28, %10, %cst_16 {dimension_numbers = #tpu.dot_dimension_numbers<[1], [0], [0], [1], [0, 0, 1, 1], [], []>} : vector<32x16xbf16>, vector<16x896xbf16>, vector<32x896xf32> -> vector<32x896xf32>
    %30 = vector.extract_strided_slice %29 {offsets = [0, 0], sizes = [8, 896], strides = [1, 1]} : vector<32x896xf32> to vector<8x896xf32>
    %31 = arith.mulf %30, %7 : vector<8x896xf32>
    %32 = vector.extract_strided_slice %29 {offsets = [8, 0], sizes = [8, 896], strides = [1, 1]} : vector<32x896xf32> to vector<8x896xf32>
    %33 = arith.mulf %32, %8 : vector<8x896xf32>
    %34 = arith.addf %31, %33 : vector<8x896xf32>
    %35 = vector.extract_strided_slice %29 {offsets = [16, 0], sizes = [8, 896], strides = [1, 1]} : vector<32x896xf32> to vector<8x896xf32>
    %36 = arith.mulf %35, %9 : vector<8x896xf32>
    %37 = arith.addf %34, %36 : vector<8x896xf32>
    %38 = vector.extract_strided_slice %29 {offsets = [24, 0], sizes = [8, 896], strides = [1, 1]} : vector<32x896xf32> to vector<8x896xf32>
    %39 = arith.addf %37, %38 : vector<8x896xf32>
    %c1_17 = arith.constant 1 : index
    %c0_18 = arith.constant 0 : index
    %c0_19 = arith.constant 0 : index
    %40 = vector.load %arg7[%c1_17, %c0_18, %c0_19] : memref<3x8x896xf32, #tpu.memory_space<vmem>>, vector<1x8x896xf32>
    %41 = vector.shape_cast %40 : vector<1x8x896xf32> to vector<8x896xf32>
    %42 = vector.shape_cast %39 : vector<8x896xf32> to vector<1x8x896xf32>
    tpu.vector_store %arg7[%c1_17, %c0_18, %c0_19], %42 {strides = array<i32>} : memref<3x8x896xf32, #tpu.memory_space<vmem>>, vector<1x8x896xf32>,
    %c2 = arith.constant 2 : index
    %c0_20 = arith.constant 0 : index
    %c0_21 = arith.constant 0 : index
    %43 = vector.load %arg2[%c2, %c0_20, %c0_21] : memref<3x32x16xbf16, #tpu.memory_space<vmem>>, vector<1x32x16xbf16>
    %44 = vector.shape_cast %43 : vector<1x32x16xbf16> to vector<32x16xbf16>
    %cst_22 = arith.constant dense<0.000000e+00> : vector<32x896xf32>
    %45 = tpu.matmul %44, %10, %cst_22 {dimension_numbers = #tpu.dot_dimension_numbers<[1], [0], [0], [1], [0, 0, 1, 1], [], []>} : vector<32x16xbf16>, vector<16x896xbf16>, vector<32x896xf32> -> vector<32x896xf32>
    %46 = vector.extract_strided_slice %45 {offsets = [0, 0], sizes = [8, 896], strides = [1, 1]} : vector<32x896xf32> to vector<8x896xf32>
    %47 = arith.mulf %46, %7 : vector<8x896xf32>
    %48 = vector.extract_strided_slice %45 {offsets = [8, 0], sizes = [8, 896], strides = [1, 1]} : vector<32x896xf32> to vector<8x896xf32>
    %49 = arith.mulf %48, %8 : vector<8x896xf32>
    %50 = arith.addf %47, %49 : vector<8x896xf32>
    %51 = vector.extract_strided_slice %45 {offsets = [16, 0], sizes = [8, 896], strides = [1, 1]} : vector<32x896xf32> to vector<8x896xf32>
    %52 = arith.mulf %51, %9 : vector<8x896xf32>
    %53 = arith.addf %50, %52 : vector<8x896xf32>
    %54 = vector.extract_strided_slice %45 {offsets = [24, 0], sizes = [8, 896], strides = [1, 1]} : vector<32x896xf32> to vector<8x896xf32>
    %55 = arith.addf %53, %54 : vector<8x896xf32>
    %c2_23 = arith.constant 2 : index
    %c0_24 = arith.constant 0 : index
    %c0_25 = arith.constant 0 : index
    %56 = vector.load %arg7[%c2_23, %c0_24, %c0_25] : memref<3x8x896xf32, #tpu.memory_space<vmem>>, vector<1x8x896xf32>
    %57 = vector.shape_cast %56 : vector<1x8x896xf32> to vector<8x896xf32>
    %58 = vector.shape_cast %55 : vector<8x896xf32> to vector<1x8x896xf32>
    tpu.vector_store %arg7[%c2_23, %c0_24, %c0_25], %58 {strides = array<i32>} : memref<3x8x896xf32, #tpu.memory_space<vmem>>, vector<1x8x896xf32>,
    %c0_26 = arith.constant 0 : index
    %c0_27 = arith.constant 0 : index
    %c0_28 = arith.constant 0 : index
    %59 = vector.load %arg7[%c0_26, %c0_27, %c0_28] : memref<3x8x896xf32, #tpu.memory_space<vmem>>, vector<3x8x896xf32>
    %60 = vector.shape_cast %59 : vector<3x8x896xf32> to vector<24x896xf32>
    %61 = arith.truncf %60 : vector<24x896xf32> to vector<24x896xbf16>
    %c0_29 = arith.constant 0 : index
    %c0_30 = arith.constant 0 : index
    %62 = vector.load %arg6[%c0_29, %c0_30] : memref<896x16xbf16, #tpu.memory_space<vmem>>, vector<896x16xbf16>
    %cst_31 = arith.constant dense<0.000000e+00> : vector<24x16xf32>
    %63 = tpu.matmul %61, %62, %cst_31 {dimension_numbers = #tpu.dot_dimension_numbers<[1], [0], [0], [1], [0, 0, 1, 1], [], []>} : vector<24x896xbf16>, vector<896x16xbf16>, vector<24x16xf32> -> vector<24x16xf32>
    %64 = vector.shape_cast %63 : vector<24x16xf32> to vector<3x8x16xf32>
    %c0_32 = arith.constant 0 : index
    %c0_33 = arith.constant 0 : index
    %c0_34 = arith.constant 0 : index
    %65 = vector.load %arg8[%c0_32, %c0_33, %c0_34] : memref<3x8x16xf32, #tpu.memory_space<vmem>>, vector<3x8x16xf32>
    tpu.vector_store %arg8[%c0_32, %c0_33, %c0_34], %64 {strides = array<i32>} : memref<3x8x16xf32, #tpu.memory_space<vmem>>, vector<3x8x16xf32>,
    return
  }
  func.func @transform_0(%arg0: i32) -> (i32, i32) {
    %c0_i32 = arith.constant 0 : i32
    %c0_i32_0 = arith.constant 0 : i32
    return %arg0, %c0_i32 : i32, i32
  }
  func.func @transform_1(%arg0: i32) -> (i32, i32, i32) {
    %c0_i32 = arith.constant 0 : i32
    %c0_i32_0 = arith.constant 0 : i32
    %c0_i32_1 = arith.constant 0 : i32
    return %arg0, %c0_i32, %c0_i32_0 : i32, i32, i32
  }
  func.func @transform_2(%arg0: i32) -> (i32, i32) {
    %c0_i32 = arith.constant 0 : i32
    %c0_i32_0 = arith.constant 0 : i32
    %c0_i32_1 = arith.constant 0 : i32
    return %c0_i32, %c0_i32_0 : i32, i32
  }
  func.func @transform_3(%arg0: i32) -> (i32, i32) {
    %c0_i32 = arith.constant 0 : i32
    %c0_i32_0 = arith.constant 0 : i32
    %c0_i32_1 = arith.constant 0 : i32
    return %c0_i32, %c0_i32_0 : i32, i32
  }
  func.func @transform_4(%arg0: i32) -> (i32, i32) {
    %c0_i32 = arith.constant 0 : i32
    %c0_i32_0 = arith.constant 0 : i32
    %c0_i32_1 = arith.constant 0 : i32
    return %c0_i32, %c0_i32_0 : i32, i32
  }
  func.func @transform_5(%arg0: i32) -> (i32, i32) {
    %c0_i32 = arith.constant 0 : i32
    %c0_i32_0 = arith.constant 0 : i32
    %c0_i32_1 = arith.constant 0 : i32
    return %c0_i32, %c0_i32_0 : i32, i32
  }
  func.func @transform_6(%arg0: i32) -> (i32, i32, i32) {
    %c0_i32 = arith.constant 0 : i32
    %c0_i32_0 = arith.constant 0 : i32
    %c0_i32_1 = arith.constant 0 : i32
    return %c0_i32, %arg0, %c0_i32_0 : i32, i32, i32
  }
  func.func @transform_7(%arg0: i32) -> (i32, i32, i32) {
    %c0_i32 = arith.constant 0 : i32
    %c0_i32_0 = arith.constant 0 : i32
    %c0_i32_1 = arith.constant 0 : i32
    return %c0_i32, %arg0, %c0_i32_0 : i32, i32, i32
  }
}

</mosaic_0001>

<llo_original>
// kernel: tpu_custom_call.1
$region0: #{tpu_custom_call.1}
  #allocation0 [shape = 'u32[]', space=smem, size = 0x4, offset = 0x4, fixed_abs, tag = 'smem constant byte address 0x4 - core index']
  #allocation1 [shape = 'u32[144,128]{1,0:T(1,128)}', space=vmem, size = 0x12000, scoped, tag = 'internal scratch']
  %s0 = inlined_call_operand.vmem [shape: f32[16,160], index: 0, kind: input, shape index: {}]
  %s1 = inlined_call_operand.vmem [shape: bf16[6,32,16], index: 1, kind: input, shape index: {}]
  %s2 = inlined_call_operand.hbm [shape: bf16[160,2688], index: 2, kind: input, shape index: {}]
  %s3 = inlined_call_operand.vmem [shape: f32[1,2688], index: 3, kind: input, shape index: {}]
  %s4 = inlined_call_operand.vmem [shape: bf16[16,896], index: 4, kind: input, shape index: {}]
  %s5 = inlined_call_operand.vmem [shape: bf16[896,16], index: 5, kind: input, shape index: {}]
  %s6 = inlined_call_operand.hbm [shape: f32[3,16,896], index: 6, kind: output, shape index: {0}]
  %s7 = inlined_call_operand.hbm [shape: f32[3,16,16], index: 7, kind: output, shape index: {1}]
  %8 = xla_tuple %s6, %s7
  %s9 = sld [smem:[#allocation0]]
  $region69: #{tpu_custom_call.1} parent=0
    _
  %s11 = ssub.s32 1, %s9
  %s12 = scalar_select 0, %s11, %s9
  $region1: #{tpu_custom_call.1} parent=0
    #allocation2 [shape = 'u8[860160]{0}', space=vmem, size = 0xd2000, scoped, tag = 'input window, operand 2, single buffered']
    #allocation3 [shape = 's32[2]{0}', space=sflag, size = 0x8, scoped, tag = 'scoped memory for tpu_custom_call.1']
    #allocation4 [shape = 's32[2]{0}', space=sflag, size = 0x8, scoped, tag = 'scoped memory for tpu_custom_call.1']
    #allocation5 [shape = 'u8[172032]{0}', space=vmem, size = 0x2a000, scoped, tag = 'output window, operand 0']
    #allocation6 [shape = 'u8[24576]{0}', space=vmem, size = 0x6000, scoped, tag = 'output window, operand 1']
    #allocation7 [shape = 's32[2]{0}', space=sflag, size = 0x8, scoped, tag = 'scoped memory for tpu_custom_call.1']
    %13 = vsyncpa [#allocation3], 0
    %14 = vsyncpa [#allocation4], 0
    %s15 = scalar_lea.sflag [#allocation4], 1
    %16 = vsyncpa %s15, 0
    %17 = vsyncpa [#allocation7], 0
    %s18 = scalar_lea.sflag [#allocation7], 1
    %19 = vsyncpa %s18, 0
    loop: start=0, step=1, limit=4
    $region2: #{tpu_custom_call.1} parent=1 // loop_pre_header
      _
    $region3: #{tpu_custom_call.1} parent=1 // loop_header
      %s21 = sphi 0, %s25
      %p22 = scmp.ge.s32.totalorder %s21, 4
      %s31 = sphi 0, %s33
      %s34 = sphi 0, %s31
      %s35 = sphi 0, %s34
      %s51 = sphi 0, %s35
      %s57 = sphi 0, %s59
      %s60 = sphi 0, %s57
      %s61 = sphi 0, %s60
      %s77 = sphi 0, %s61
      %s81 = sphi 0, %s81
      %s83 = sphi 0, %s81
      %s84 = sphi 0, %s83
      %s98 = sphi 0, %s84
      %s102 = sphi 0, %s102
      %s104 = sphi 0, %s102
      %s105 = sphi 0, %s104
      %s119 = sphi 0, %s105
      %s123 = sphi 0, %s123
      %s125 = sphi 0, %s123
      %s126 = sphi 0, %s125
      %s140 = sphi 0, %s126
      %s144 = sphi 0, %s144
      %s146 = sphi 0, %s144
      %s147 = sphi 0, %s146
      %s161 = sphi 0, %s147
      %s167 = sphi 0, %s169
      %s170 = sphi 0, %s167
      %s171 = sphi 0, %s170
      %s187 = sphi 0, %s171
      %s193 = sphi 0, %s195
      %s196 = sphi 0, %s193
      %s197 = sphi 0, %s196
      %s213 = sphi 0, %s197
    $region4: #{tpu_custom_call.1} parent=1 // loop_header_branch
      %24 = sbr.rel (%p22) target = $region8
    $region5: #{tpu_custom_call.1} parent=1 // loop_body
      %s26 = ssub.s32 %s21, 1
      %s27 = ssub.s32 %s21, 2
      %s28 = sadd.s32 %s21, 1
      %s29 = ssub.s32 %s21, %s28
      %p30 = scmp.eq.s32.totalorder %s29, 0
      %s32 = sadd.s32 %s31, 1
      %s33 = scalar_select %p30, %s31, %s32
      %p36 = pneg %p30
      %p37 = scmp.eq.s32.totalorder %s21, 1
      %p38 = por %p36, %p37
      %p39 = scmp.ne.s32.totalorder %s31, %s34
      %p40 = scmp.eq.s32.totalorder %s21, 0
      %p41 = por %p39, %p40
      %p42 = scmp.ne.s32.totalorder %s31, %s34
      %p43 = scmp.eq.s32.totalorder %s26, 1
      %p44 = por %p42, %p43
      %p45 = scmp.ne.s32.totalorder %s34, %s35
      %p46 = scmp.eq.s32.totalorder %s26, 0
      %p47 = por %p45, %p46
      %p48 = scmp.ne.s32.totalorder %s34, %s35
      %p49 = scmp.eq.s32.totalorder %s27, 1
      %p50 = por %p48, %p49
      %p52 = scmp.ne.s32.totalorder %s35, %s51
      %p53 = scmp.eq.s32.totalorder %s27, 0
      %p54 = por %p52, %p53
      %s55 = ssub.s32 %s21, %s28
      %p56 = scmp.eq.s32.totalorder %s55, 0
      %s58 = sadd.s32 %s57, 1
      %s59 = scalar_select %p56, %s57, %s58
      %p62 = pneg %p56
      %p63 = scmp.eq.s32.totalorder %s21, 1
      %p64 = por %p62, %p63
      %p65 = scmp.ne.s32.totalorder %s57, %s60
      %p66 = scmp.eq.s32.totalorder %s21, 0
      %p67 = por %p65, %p66
      %p68 = scmp.ne.s32.totalorder %s57, %s60
      %p69 = scmp.eq.s32.totalorder %s26, 1
      %p70 = por %p68, %p69
      %p71 = scmp.ne.s32.totalorder %s60, %s61
      %p72 = scmp.eq.s32.totalorder %s26, 0
      %p73 = por %p71, %p72
      %p74 = scmp.ne.s32.totalorder %s60, %s61
      %p75 = scmp.eq.s32.totalorder %s27, 1
      %p76 = por %p74, %p75
      %p78 = scmp.ne.s32.totalorder %s61, %s77
      %p79 = scmp.eq.s32.totalorder %s27, 0
      %p80 = por %p78, %p79
      %s82 = sadd.s32 %s81, 1
      %p85 = scmp.eq.s32.totalorder %s21, 1
      %p86 = scmp.ne.s32.totalorder %s81, %s83
      %p87 = scmp.eq.s32.totalorder %s21, 0
      %p88 = por %p86, %p87
      %p89 = scmp.ne.s32.totalorder %s81, %s83
      %p90 = scmp.eq.s32.totalorder %s26, 1
      %p91 = por %p89, %p90
      %p92 = scmp.ne.s32.totalorder %s83, %s84
      %p93 = scmp.eq.s32.totalorder %s26, 0
      %p94 = por %p92, %p93
      %p95 = scmp.ne.s32.totalorder %s83, %s84
      %p96 = scmp.eq.s32.totalorder %s27, 1
      %p97 = por %p95, %p96
      %p99 = scmp.ne.s32.totalorder %s84, %s98
      %p100 = scmp.eq.s32.totalorder %s27, 0
      %p101 = por %p99, %p100
      %s103 = sadd.s32 %s102, 1
      %p106 = scmp.eq.s32.totalorder %s21, 1
      %p107 = scmp.ne.s32.totalorder %s102, %s104
      %p108 = scmp.eq.s32.totalorder %s21, 0
      %p109 = por %p107, %p108
      %p110 = scmp.ne.s32.totalorder %s102, %s104
      %p111 = scmp.eq.s32.totalorder %s26, 1
      %p112 = por %p110, %p111
      %p113 = scmp.ne.s32.totalorder %s104, %s105
      %p114 = scmp.eq.s32.totalorder %s26, 0
      %p115 = por %p113, %p114
      %p116 = scmp.ne.s32.totalorder %s104, %s105
      %p117 = scmp.eq.s32.totalorder %s27, 1
      %p118 = por %p116, %p117
      %p120 = scmp.ne.s32.totalorder %s105, %s119
      %p121 = scmp.eq.s32.totalorder %s27, 0
      %p122 = por %p120, %p121
      %s124 = sadd.s32 %s123, 1
      %p127 = scmp.eq.s32.totalorder %s21, 1
      %p128 = scmp.ne.s32.totalorder %s123, %s125
      %p129 = scmp.eq.s32.totalorder %s21, 0
      %p130 = por %p128, %p129
      %p131 = scmp.ne.s32.totalorder %s123, %s125
      %p132 = scmp.eq.s32.totalorder %s26, 1
      %p133 = por %p131, %p132
      %p134 = scmp.ne.s32.totalorder %s125, %s126
      %p135 = scmp.eq.s32.totalorder %s26, 0
      %p136 = por %p134, %p135
      %p137 = scmp.ne.s32.totalorder %s125, %s126
      %p138 = scmp.eq.s32.totalorder %s27, 1
      %p139 = por %p137, %p138
      %p141 = scmp.ne.s32.totalorder %s126, %s140
      %p142 = scmp.eq.s32.totalorder %s27, 0
      %p143 = por %p141, %p142
      %s145 = sadd.s32 %s144, 1
      %p148 = scmp.eq.s32.totalorder %s21, 1
      %p149 = scmp.ne.s32.totalorder %s144, %s146
      %p150 = scmp.eq.s32.totalorder %s21, 0
      %p151 = por %p149, %p150
      %p152 = scmp.ne.s32.totalorder %s144, %s146
      %p153 = scmp.eq.s32.totalorder %s26, 1
      %p154 = por %p152, %p153
      %p155 = scmp.ne.s32.totalorder %s146, %s147
      %p156 = scmp.eq.s32.totalorder %s26, 0
      %p157 = por %p155, %p156
      %p158 = scmp.ne.s32.totalorder %s146, %s147
      %p159 = scmp.eq.s32.totalorder %s27, 1
      %p160 = por %p158, %p159
      %p162 = scmp.ne.s32.totalorder %s147, %s161
      %p163 = scmp.eq.s32.totalorder %s27, 0
      %p164 = por %p162, %p163
      %s165 = ssub.s32 %s21, %s28
      %p166 = scmp.eq.s32.totalorder %s165, 0
      %s168 = sadd.s32 %s167, 1
      %s169 = scalar_select %p166, %s167, %s168
      %p172 = pneg %p166
      %p173 = scmp.eq.s32.totalorder %s21, 1
      %p174 = por %p172, %p173
      %p175 = scmp.ne.s32.totalorder %s167, %s170
      %p176 = scmp.eq.s32.totalorder %s21, 0
      %p177 = por %p175, %p176
      %p178 = scmp.ne.s32.totalorder %s167, %s170
      %p179 = scmp.eq.s32.totalorder %s26, 1
      %p180 = por %p178, %p179
      %p181 = scmp.ne.s32.totalorder %s170, %s171
      %p182 = scmp.eq.s32.totalorder %s26, 0
      %p183 = por %p181, %p182
      %p184 = scmp.ne.s32.totalorder %s170, %s171
      %p185 = scmp.eq.s32.totalorder %s27, 1
      %p186 = por %p184, %p185
      %p188 = scmp.ne.s32.totalorder %s171, %s187
      %p189 = scmp.eq.s32.totalorder %s27, 0
      %p190 = por %p188, %p189
      %s191 = ssub.s32 %s21, %s28
      %p192 = scmp.eq.s32.totalorder %s191, 0
      %s194 = sadd.s32 %s193, 1
      %s195 = scalar_select %p192, %s193, %s194
      %p198 = pneg %p192
      %p199 = scmp.eq.s32.totalorder %s21, 1
      %p200 = por %p198, %p199
      %p201 = scmp.ne.s32.totalorder %s193, %s196
      %p202 = scmp.eq.s32.totalorder %s21, 0
      %p203 = por %p201, %p202
      %p204 = scmp.ne.s32.totalorder %s193, %s196
      %p205 = scmp.eq.s32.totalorder %s26, 1
      %p206 = por %p204, %p205
      %p207 = scmp.ne.s32.totalorder %s196, %s197
      %p208 = scmp.eq.s32.totalorder %s26, 0
      %p209 = por %p207, %p208
      %p210 = scmp.ne.s32.totalorder %s196, %s197
      %p211 = scmp.eq.s32.totalorder %s27, 1
      %p212 = por %p210, %p211
      %p214 = scmp.ne.s32.totalorder %s197, %s213
      %p215 = scmp.eq.s32.totalorder %s27, 0
      %p216 = por %p214, %p215
      %p217 = scmp.le.s32.totalorder 1, %s21
      %p218 = scmp.lt.s32.totalorder %s21, 3
      %p219 = pnand %p217, %p218
      %p220 = pneg %p219
      // Predicated region
      $region9: #{tpu_custom_call.1} parent=5 // pred_check
        _
      $region10: #{tpu_custom_call.1} parent=5 // pred_check_branch
        %222 = sbr.rel (%p219) target = $region12
      $region11: #{tpu_custom_call.1} parent=5 // pred_region
        %s223 = ssub.s32 %s21, 1
        // Predicated region
        $region13: #{tpu_custom_call.1} parent=11 // pred_check
          %p224 = pneg %p94
        $region14: #{tpu_custom_call.1} parent=11 // pred_check_branch
          %226 = sbr.rel (%p224) target = $region16
        $region15: #{tpu_custom_call.1} parent=11 // pred_region
          %s228 = ssub.s32 26880, 26880
          %229 = vsyncadd [#allocation3], %s228
          %s230 = sshll.u32 [#allocation2], 4
          %s231 = int_to_ptr.vmem [resolvable:$true] %s230
          %236 = dma.hbm_to_vmem [thread:$0]  %s2, 26880, %s231, [#allocation3], 1344, 1344, 84
        $region16: #{tpu_custom_call.1} parent=11 // pred_fallthru
          _
        // Predicated region
        $region17: #{tpu_custom_call.1} parent=11 // pred_check
          %p237 = pneg %p115
        $region18: #{tpu_custom_call.1} parent=11 // pred_check_branch
          %239 = sbr.rel (%p237) target = $region20
        $region19: #{tpu_custom_call.1} parent=11 // pred_region
          _
        $region20: #{tpu_custom_call.1} parent=11 // pred_fallthru
          _
        // Predicated region
        $region21: #{tpu_custom_call.1} parent=11 // pred_check
          %p240 = pneg %p136
        $region22: #{tpu_custom_call.1} parent=11 // pred_check_branch
          %242 = sbr.rel (%p240) target = $region24
        $region23: #{tpu_custom_call.1} parent=11 // pred_region
          _
        $region24: #{tpu_custom_call.1} parent=11 // pred_fallthru
          _
        // Predicated region
        $region25: #{tpu_custom_call.1} parent=11 // pred_check
          %p243 = pneg %p157
        $region26: #{tpu_custom_call.1} parent=11 // pred_check_branch
          %245 = sbr.rel (%p243) target = $region28
        $region27: #{tpu_custom_call.1} parent=11 // pred_region
          _
        $region28: #{tpu_custom_call.1} parent=11 // pred_fallthru
          _
      $region12: #{tpu_custom_call.1} parent=5 // pred_fallthru
        _
      %p246 = scmp.lt.s32.totalorder %s21, 2
      // Predicated region
      $region29: #{tpu_custom_call.1} parent=5 // pred_check
        %p247 = pneg %p246
      $region30: #{tpu_custom_call.1} parent=5 // pred_check_branch
        %249 = sbr.rel (%p247) target = $region32
      $region31: #{tpu_custom_call.1} parent=5 // pred_region
        // Predicated region
        $region33: #{tpu_custom_call.1} parent=31 // pred_check
          %p250 = pneg %p41
        $region34: #{tpu_custom_call.1} parent=31 // pred_check_branch
          %252 = sbr.rel (%p250) target = $region36
        $region35: #{tpu_custom_call.1} parent=31 // pred_region
          %p253 = scmp.lt.s32.totalorder %s21, 1
          %s254 = scalar_select %p253, %s21, 1
          %s255 = smul.addr %s254, 2
          %s256 = smul.addr %s255, 8
          %s257 = scalar_lea.vmem %s0, %s256
        $region36: #{tpu_custom_call.1} parent=31 // pred_fallthru
          _
        // Predicated region
        $region37: #{tpu_custom_call.1} parent=31 // pred_check
          %p258 = pneg %p67
        $region38: #{tpu_custom_call.1} parent=31 // pred_check_branch
          %260 = sbr.rel (%p258) target = $region40
        $region39: #{tpu_custom_call.1} parent=31 // pred_region
          %s261 = smul.u32 3, %s21
          %p262 = scmp.lt.s32.totalorder %s261, 5
          %s263 = scalar_select %p262, %s261, 5
          %s264 = smul.addr %s263, 4
          %s265 = smul.addr %s264, 4
          %s266 = scalar_lea.vmem %s1, %s265
          %s267 = smul.u32 3, %s21
        $region40: #{tpu_custom_call.1} parent=31 // pred_fallthru
          _
      $region32: #{tpu_custom_call.1} parent=5 // pred_fallthru
        _
      %p268 = scmp.le.s32.totalorder 1, %s21
      %p269 = scmp.lt.s32.totalorder %s21, 3
      %p270 = pnand %p268, %p269
      %p271 = pneg %p270
      // Predicated region
      $region41: #{tpu_custom_call.1} parent=5 // pred_check
        _
      $region42: #{tpu_custom_call.1} parent=5 // pred_check_branch
        %273 = sbr.rel (%p270) target = $region44
      $region43: #{tpu_custom_call.1} parent=5 // pred_region
        %s274 = ssub.s32 %s21, 1
        // Predicated region
        $region45: #{tpu_custom_call.1} parent=43 // pred_check
          %p275 = pneg %p94
        $region46: #{tpu_custom_call.1} parent=43 // pred_check_branch
          %277 = sbr.rel (%p275) target = $region48
        $region47: #{tpu_custom_call.1} parent=43 // pred_region
          %278 = dma.done [#allocation3], 26880
        $region48: #{tpu_custom_call.1} parent=43 // pred_fallthru
          _
        %p279 = scmp.lt.s32.totalorder %s26, 1
        %s280 = scalar_select %p279, %s26, 1
        %s281 = smul.addr %s280, 2
        %s282 = smul.addr %s281, 8
        %s283 = scalar_lea.vmem %s0, %s282
        %p284 = pneg %p47
        %p285 = pneg %p44
        %s286 = smul.u32 3, %s26
        %p287 = scmp.lt.s32.totalorder %s286, 5
        %s288 = scalar_select %p287, %s286, 5
        %s289 = smul.addr %s288, 4
        %s290 = smul.addr %s289, 4
        %s291 = scalar_lea.vmem %s1, %s290
        %p292 = pneg %p73
        %p293 = pneg %p70
        %p294 = pneg %p94
        %p295 = pneg %p91
        %p296 = pneg %p115
        %p297 = pneg %p112
        %p298 = pneg %p136
        %p299 = pneg %p133
        %p300 = pneg %p157
        %p301 = pneg %p154
        %p302 = pneg %p183
        %p303 = pneg %p180
        %s304 = sand.u32 %s170, 1
        %s305 = scalar_lea.sflag [#allocation4], %s304
        %s306 = sand.u32 %s170, 1
        %s307 = smul.addr %s306, 168
        %s308 = scalar_lea.vmem [#allocation5], %s307
        %p309 = pneg %p209
        %p310 = pneg %p206
        %s311 = sand.u32 %s196, 1
        %s312 = scalar_lea.sflag [#allocation7], %s311
        %s313 = sand.u32 %s196, 1
        %s314 = smul.addr %s313, 24
        %s315 = scalar_lea.vmem [#allocation6], %s314
        %p316 = scmp.lt.s32.totalorder %s26, 1
        %s317 = scalar_select %p316, %s26, 1
        %s318 = smul.addr %s317, 2
        %s319 = smul.addr %s318, 8
        %s320 = scalar_lea.vmem %s0, %s319
        %s321 = smul.u32 3, %s26
        %p322 = scmp.lt.s32.totalorder %s321, 5
        %s323 = scalar_select %p322, %s321, 5
        %s324 = smul.addr %s323, 4
        %s325 = smul.addr %s324, 4
        %s326 = scalar_lea.vmem %s1, %s325
        %s327 = smul.u32 3, %s26
        %v329 = vld [vmem:[%s320] sm:$0xff]
        %v330 = vld [vmem:[%s320 + $0x8] sm:$0xff]
        %v331 = vpack.c.bf16 %v329, %v329
        %v332 = vpack.c.bf16 %v330, %v330
        %v333 = vld [vmem:[#allocation2] sm:$0xff]
        %v334 = vld [vmem:[#allocation2 + $0x8] sm:$0xff]
        %v335 = vld [vmem:[#allocation2 + $0x10] sm:$0xff]
        %v336 = vld [vmem:[#allocation2 + $0x18] sm:$0xff]
        %v337 = vld [vmem:[#allocation2 + $0x20] sm:$0xff]
        %v338 = vld [vmem:[#allocation2 + $0x28] sm:$0xff]
        %v339 = vld [vmem:[#allocation2 + $0x30] sm:$0xff]
        %v340 = vld [vmem:[#allocation2 + $0x38] sm:$0xff]
        %v341 = vld [vmem:[#allocation2 + $0x40] sm:$0xff]
        %v342 = vld [vmem:[#allocation2 + $0x48] sm:$0xff]
        %v343 = vld [vmem:[#allocation2 + $0x50] sm:$0xf]
        %v344 = vld [vmem:[#allocation2 + $0x54] sm:$0xff]
        %v345 = vld [vmem:[#allocation2 + $0x5c] sm:$0xff]
        %v346 = vld [vmem:[#allocation2 + $0x64] sm:$0xff]
        %v347 = vld [vmem:[#allocation2 + $0x6c] sm:$0xff]
        %v348 = vld [vmem:[#allocation2 + $0x74] sm:$0xff]
        %v349 = vld [vmem:[#allocation2 + $0x7c] sm:$0xff]
        %v350 = vld [vmem:[#allocation2 + $0x84] sm:$0xff]
        %v351 = vld [vmem:[#allocation2 + $0x8c] sm:$0xff]
        %v352 = vld [vmem:[#allocation2 + $0x94] sm:$0xff]
        %v353 = vld [vmem:[#allocation2 + $0x9c] sm:$0xff]
        %v354 = vld [vmem:[#allocation2 + $0xa4] sm:$0xf]
        %v355 = vld [vmem:[#allocation2 + $0xa8] sm:$0xff]
        %v356 = vld [vmem:[#allocation2 + $0xb0] sm:$0xff]
        %v357 = vld [vmem:[#allocation2 + $0xb8] sm:$0xff]
        %v358 = vld [vmem:[#allocation2 + $0xc0] sm:$0xff]
        %v359 = vld [vmem:[#allocation2 + $0xc8] sm:$0xff]
        %v360 = vld [vmem:[#allocation2 + $0xd0] sm:$0xff]
        %v361 = vld [vmem:[#allocation2 + $0xd8] sm:$0xff]
        %v362 = vld [vmem:[#allocation2 + $0xe0] sm:$0xff]
        %v363 = vld [vmem:[#allocation2 + $0xe8] sm:$0xff]
        %v364 = vld [vmem:[#allocation2 + $0xf0] sm:$0xff]
        %v365 = vld [vmem:[#allocation2 + $0xf8] sm:$0xf]
        %v366 = vld [vmem:[#allocation2 + $0xfc] sm:$0xff]
        %v367 = vld [vmem:[#allocation2 + $0x104] sm:$0xff]
        %v368 = vld [vmem:[#allocation2 + $0x10c] sm:$0xff]
        %v369 = vld [vmem:[#allocation2 + $0x114] sm:$0xff]
        %v370 = vld [vmem:[#allocation2 + $0x11c] sm:$0xff]
        %v371 = vld [vmem:[#allocation2 + $0x124] sm:$0xff]
        %v372 = vld [vmem:[#allocation2 + $0x12c] sm:$0xff]
        %v373 = vld [vmem:[#allocation2 + $0x134] sm:$0xff]
        %v374 = vld [vmem:[#allocation2 + $0x13c] sm:$0xff]
        %v375 = vld [vmem:[#allocation2 + $0x144] sm:$0xff]
        %v376 = vld [vmem:[#allocation2 + $0x14c] sm:$0xf]
        %v377 = vld [vmem:[#allocation2 + $0x150] sm:$0xff]
        %v378 = vld [vmem:[#allocation2 + $0x158] sm:$0xff]
        %v379 = vld [vmem:[#allocation2 + $0x160] sm:$0xff]
        %v380 = vld [vmem:[#allocation2 + $0x168] sm:$0xff]
        %v381 = vld [vmem:[#allocation2 + $0x170] sm:$0xff]
        %v382 = vld [vmem:[#allocation2 + $0x178] sm:$0xff]
        %v383 = vld [vmem:[#allocation2 + $0x180] sm:$0xff]
        %v384 = vld [vmem:[#allocation2 + $0x188] sm:$0xff]
        %v385 = vld [vmem:[#allocation2 + $0x190] sm:$0xff]
        %v386 = vld [vmem:[#allocation2 + $0x198] sm:$0xff]
        %v387 = vld [vmem:[#allocation2 + $0x1a0] sm:$0xf]
        %v388 = vld [vmem:[#allocation2 + $0x1a4] sm:$0xff]
        %v389 = vld [vmem:[#allocation2 + $0x1ac] sm:$0xff]
        %v390 = vld [vmem:[#allocation2 + $0x1b4] sm:$0xff]
        %v391 = vld [vmem:[#allocation2 + $0x1bc] sm:$0xff]
        %v392 = vld [vmem:[#allocation2 + $0x1c4] sm:$0xff]
        %v393 = vld [vmem:[#allocation2 + $0x1cc] sm:$0xff]
        %v394 = vld [vmem:[#allocation2 + $0x1d4] sm:$0xff]
        %v395 = vld [vmem:[#allocation2 + $0x1dc] sm:$0xff]
        %v396 = vld [vmem:[#allocation2 + $0x1e4] sm:$0xff]
        %v397 = vld [vmem:[#allocation2 + $0x1ec] sm:$0xff]
        %v398 = vld [vmem:[#allocation2 + $0x1f4] sm:$0xf]
        %v399 = vld [vmem:[#allocation2 + $0x1f8] sm:$0xff]
        %v400 = vld [vmem:[#allocation2 + $0x200] sm:$0xff]
        %v401 = vld [vmem:[#allocation2 + $0x208] sm:$0xff]
        %v402 = vld [vmem:[#allocation2 + $0x210] sm:$0xff]
        %v403 = vld [vmem:[#allocation2 + $0x218] sm:$0xff]
        %v404 = vld [vmem:[#allocation2 + $0x220] sm:$0xff]
        %v405 = vld [vmem:[#allocation2 + $0x228] sm:$0xff]
        %v406 = vld [vmem:[#allocation2 + $0x230] sm:$0xff]
        %v407 = vld [vmem:[#allocation2 + $0x238] sm:$0xff]
        %v408 = vld [vmem:[#allocation2 + $0x240] sm:$0xff]
        %v409 = vld [vmem:[#allocation2 + $0x248] sm:$0xf]
        %v410 = vld [vmem:[#allocation2 + $0x24c] sm:$0xff]
        %v411 = vld [vmem:[#allocation2 + $0x254] sm:$0xff]
        %v412 = vld [vmem:[#allocation2 + $0x25c] sm:$0xff]
        %v413 = vld [vmem:[#allocation2 + $0x264] sm:$0xff]
        %v414 = vld [vmem:[#allocation2 + $0x26c] sm:$0xff]
        %v415 = vld [vmem:[#allocation2 + $0x274] sm:$0xff]
        %v416 = vld [vmem:[#allocation2 + $0x27c] sm:$0xff]
        %v417 = vld [vmem:[#allocation2 + $0x284] sm:$0xff]
        %v418 = vld [vmem:[#allocation2 + $0x28c] sm:$0xff]
        %v419 = vld [vmem:[#allocation2 + $0x294] sm:$0xff]
        %v420 = vld [vmem:[#allocation2 + $0x29c] sm:$0xf]
        %v421 = vld [vmem:[#allocation2 + $0x2a0] sm:$0xff]
        %v422 = vld [vmem:[#allocation2 + $0x2a8] sm:$0xff]
        %v423 = vld [vmem:[#allocation2 + $0x2b0] sm:$0xff]
        %v424 = vld [vmem:[#allocation2 + $0x2b8] sm:$0xff]
        %v425 = vld [vmem:[#allocation2 + $0x2c0] sm:$0xff]
        %v426 = vld [vmem:[#allocation2 + $0x2c8] sm:$0xff]
        %v427 = vld [vmem:[#allocation2 + $0x2d0] sm:$0xff]
        %v428 = vld [vmem:[#allocation2 + $0x2d8] sm:$0xff]
        %v429 = vld [vmem:[#allocation2 + $0x2e0] sm:$0xff]
        %v430 = vld [vmem:[#allocation2 + $0x2e8] sm:$0xff]
        %v431 = vld [vmem:[#allocation2 + $0x2f0] sm:$0xf]
        %v432 = vld [vmem:[#allocation2 + $0x2f4] sm:$0xff]
        %v433 = vld [vmem:[#allocation2 + $0x2fc] sm:$0xff]
        %v434 = vld [vmem:[#allocation2 + $0x304] sm:$0xff]
        %v435 = vld [vmem:[#allocation2 + $0x30c] sm:$0xff]
        %v436 = vld [vmem:[#allocation2 + $0x314] sm:$0xff]
        %v437 = vld [vmem:[#allocation2 + $0x31c] sm:$0xff]
        %v438 = vld [vmem:[#allocation2 + $0x324] sm:$0xff]
        %v439 = vld [vmem:[#allocation2 + $0x32c] sm:$0xff]
        %v440 = vld [vmem:[#allocation2 + $0x334] sm:$0xff]
        %v441 = vld [vmem:[#allocation2 + $0x33c] sm:$0xff]
        %v442 = vld [vmem:[#allocation2 + $0x344] sm:$0xf]
        %v443 = vld [vmem:[#allocation2 + $0x348] sm:$0xff]
        %v444 = vld [vmem:[#allocation2 + $0x350] sm:$0xff]
        %v445 = vld [vmem:[#allocation2 + $0x358] sm:$0xff]
        %v446 = vld [vmem:[#allocation2 + $0x360] sm:$0xff]
        %v447 = vld [vmem:[#allocation2 + $0x368] sm:$0xff]
        %v448 = vld [vmem:[#allocation2 + $0x370] sm:$0xff]
        %v449 = vld [vmem:[#allocation2 + $0x378] sm:$0xff]
        %v450 = vld [vmem:[#allocation2 + $0x380] sm:$0xff]
        %v451 = vld [vmem:[#allocation2 + $0x388] sm:$0xff]
        %v452 = vld [vmem:[#allocation2 + $0x390] sm:$0xff]
        %v453 = vld [vmem:[#allocation2 + $0x398] sm:$0xf]
        %v454 = vld [vmem:[#allocation2 + $0x39c] sm:$0xff]
        %v455 = vld [vmem:[#allocation2 + $0x3a4] sm:$0xff]
        %v456 = vld [vmem:[#allocation2 + $0x3ac] sm:$0xff]
        %v457 = vld [vmem:[#allocation2 + $0x3b4] sm:$0xff]
        %v458 = vld [vmem:[#allocation2 + $0x3bc] sm:$0xff]
        %v459 = vld [vmem:[#allocation2 + $0x3c4] sm:$0xff]
        %v460 = vld [vmem:[#allocation2 + $0x3cc] sm:$0xff]
        %v461 = vld [vmem:[#allocation2 + $0x3d4] sm:$0xff]
        %v462 = vld [vmem:[#allocation2 + $0x3dc] sm:$0xff]
        %v463 = vld [vmem:[#allocation2 + $0x3e4] sm:$0xff]
        %v464 = vld [vmem:[#allocation2 + $0x3ec] sm:$0xf]
        %v465 = vld [vmem:[#allocation2 + $0x3f0] sm:$0xff]
        %v466 = vld [vmem:[#allocation2 + $0x3f8] sm:$0xff]
        %v467 = vld [vmem:[#allocation2 + $0x400] sm:$0xff]
        %v468 = vld [vmem:[#allocation2 + $0x408] sm:$0xff]
        %v469 = vld [vmem:[#allocation2 + $0x410] sm:$0xff]
        %v470 = vld [vmem:[#allocation2 + $0x418] sm:$0xff]
        %v471 = vld [vmem:[#allocation2 + $0x420] sm:$0xff]
        %v472 = vld [vmem:[#allocation2 + $0x428] sm:$0xff]
        %v473 = vld [vmem:[#allocation2 + $0x430] sm:$0xff]
        %v474 = vld [vmem:[#allocation2 + $0x438] sm:$0xff]
        %v475 = vld [vmem:[#allocation2 + $0x440] sm:$0xf]
        %v476 = vld [vmem:[#allocation2 + $0x444] sm:$0xff]
        %v477 = vld [vmem:[#allocation2 + $0x44c] sm:$0xff]
        %v478 = vld [vmem:[#allocation2 + $0x454] sm:$0xff]
        %v479 = vld [vmem:[#allocation2 + $0x45c] sm:$0xff]
        %v480 = vld [vmem:[#allocation2 + $0x464] sm:$0xff]
        %v481 = vld [vmem:[#allocation2 + $0x46c] sm:$0xff]
        %v482 = vld [vmem:[#allocation2 + $0x474] sm:$0xff]
        %v483 = vld [vmem:[#allocation2 + $0x47c] sm:$0xff]
        %v484 = vld [vmem:[#allocation2 + $0x484] sm:$0xff]
        %v485 = vld [vmem:[#allocation2 + $0x48c] sm:$0xff]
        %v486 = vld [vmem:[#allocation2 + $0x494] sm:$0xf]
        %v487 = vld [vmem:[#allocation2 + $0x498] sm:$0xff]
        %v488 = vld [vmem:[#allocation2 + $0x4a0] sm:$0xff]
        %v489 = vld [vmem:[#allocation2 + $0x4a8] sm:$0xff]
        %v490 = vld [vmem:[#allocation2 + $0x4b0] sm:$0xff]
        %v491 = vld [vmem:[#allocation2 + $0x4b8] sm:$0xff]
        %v492 = vld [vmem:[#allocation2 + $0x4c0] sm:$0xff]
        %v493 = vld [vmem:[#allocation2 + $0x4c8] sm:$0xff]
        %v494 = vld [vmem:[#allocation2 + $0x4d0] sm:$0xff]
        %v495 = vld [vmem:[#allocation2 + $0x4d8] sm:$0xff]
        %v496 = vld [vmem:[#allocation2 + $0x4e0] sm:$0xff]
        %v497 = vld [vmem:[#allocation2 + $0x4e8] sm:$0xf]
        %v498 = vld [vmem:[#allocation2 + $0x4ec] sm:$0xff]
        %v499 = vld [vmem:[#allocation2 + $0x4f4] sm:$0xff]
        %v500 = vld [vmem:[#allocation2 + $0x4fc] sm:$0xff]
        %v501 = vld [vmem:[#allocation2 + $0x504] sm:$0xff]
        %v502 = vld [vmem:[#allocation2 + $0x50c] sm:$0xff]
        %v503 = vld [vmem:[#allocation2 + $0x514] sm:$0xff]
        %v504 = vld [vmem:[#allocation2 + $0x51c] sm:$0xff]
        %v505 = vld [vmem:[#allocation2 + $0x524] sm:$0xff]
        %v506 = vld [vmem:[#allocation2 + $0x52c] sm:$0xff]
        %v507 = vld [vmem:[#allocation2 + $0x534] sm:$0xff]
        %v508 = vld [vmem:[#allocation2 + $0x53c] sm:$0xf]
        %v509 = vld [vmem:[#allocation2 + $0x540] sm:$0xff]
        %v510 = vld [vmem:[#allocation2 + $0x548] sm:$0xff]
        %v511 = vld [vmem:[#allocation2 + $0x550] sm:$0xff]
        %v512 = vld [vmem:[#allocation2 + $0x558] sm:$0xff]
        %v513 = vld [vmem:[#allocation2 + $0x560] sm:$0xff]
        %v514 = vld [vmem:[#allocation2 + $0x568] sm:$0xff]
        %v515 = vld [vmem:[#allocation2 + $0x570] sm:$0xff]
        %v516 = vld [vmem:[#allocation2 + $0x578] sm:$0xff]
        %v517 = vld [vmem:[#allocation2 + $0x580] sm:$0xff]
        %v518 = vld [vmem:[#allocation2 + $0x588] sm:$0xff]
        %v519 = vld [vmem:[#allocation2 + $0x590] sm:$0xf]
        %v520 = vld [vmem:[#allocation2 + $0x594] sm:$0xff]
        %v521 = vld [vmem:[#allocation2 + $0x59c] sm:$0xff]
        %v522 = vld [vmem:[#allocation2 + $0x5a4] sm:$0xff]
        %v523 = vld [vmem:[#allocation2 + $0x5ac] sm:$0xff]
        %v524 = vld [vmem:[#allocation2 + $0x5b4] sm:$0xff]
        %v525 = vld [vmem:[#allocation2 + $0x5bc] sm:$0xff]
        %v526 = vld [vmem:[#allocation2 + $0x5c4] sm:$0xff]
        %v527 = vld [vmem:[#allocation2 + $0x5cc] sm:$0xff]
        %v528 = vld [vmem:[#allocation2 + $0x5d4] sm:$0xff]
        %v529 = vld [vmem:[#allocation2 + $0x5dc] sm:$0xff]
        %v530 = vld [vmem:[#allocation2 + $0x5e4] sm:$0xf]
        %v531 = vld [vmem:[#allocation2 + $0x5e8] sm:$0xff]
        %v532 = vld [vmem:[#allocation2 + $0x5f0] sm:$0xff]
        %v533 = vld [vmem:[#allocation2 + $0x5f8] sm:$0xff]
        %v534 = vld [vmem:[#allocation2 + $0x600] sm:$0xff]
        %v535 = vld [vmem:[#allocation2 + $0x608] sm:$0xff]
        %v536 = vld [vmem:[#allocation2 + $0x610] sm:$0xff]
        %v537 = vld [vmem:[#allocation2 + $0x618] sm:$0xff]
        %v538 = vld [vmem:[#allocation2 + $0x620] sm:$0xff]
        %v539 = vld [vmem:[#allocation2 + $0x628] sm:$0xff]
        %v540 = vld [vmem:[#allocation2 + $0x630] sm:$0xff]
        %v541 = vld [vmem:[#allocation2 + $0x638] sm:$0xf]
        %v542 = vld [vmem:[#allocation2 + $0x63c] sm:$0xff]
        %v543 = vld [vmem:[#allocation2 + $0x644] sm:$0xff]
        %v544 = vld [vmem:[#allocation2 + $0x64c] sm:$0xff]
        %v545 = vld [vmem:[#allocation2 + $0x654] sm:$0xff]
        %v546 = vld [vmem:[#allocation2 + $0x65c] sm:$0xff]
        %v547 = vld [vmem:[#allocation2 + $0x664] sm:$0xff]
        %v548 = vld [vmem:[#allocation2 + $0x66c] sm:$0xff]
        %v549 = vld [vmem:[#allocation2 + $0x674] sm:$0xff]
        %v550 = vld [vmem:[#allocation2 + $0x67c] sm:$0xff]
        %v551 = vld [vmem:[#allocation2 + $0x684] sm:$0xff]
        %v552 = vld [vmem:[#allocation2 + $0x68c] sm:$0xf]
        %v553 = vld [vmem:[%s3] sm:$0xff]
        %v554 = vld [vmem:[%s3 + $0x8] sm:$0xff]
        %v555 = vld [vmem:[%s3 + $0x10] sm:$0x1f]
        %v559 = vlaneseq
        %v560 = vshrl.u32 %v559, 7
        %v561 = vsub.s32 0, %v560
        %v562 = vrot.slane %v553, %v561
        %v563 = vlaneseq
        %v564 = vshrl.u32 %v563, 7
        %v565 = vsub.s32 1, %v564
        %v566 = vrot.slane %v553, %v565
        %v567 = vlaneseq
        %v568 = vshrl.u32 %v567, 7
        %v569 = vsub.s32 2, %v568
        %v570 = vrot.slane %v553, %v569
        %v571 = vlaneseq
        %v572 = vshrl.u32 %v571, 7
        %v573 = vsub.s32 3, %v572
        %v574 = vrot.slane %v553, %v573
        %v575 = vlaneseq
        %v576 = vshrl.u32 %v575, 7
        %v577 = vsub.s32 4, %v576
        %v578 = vrot.slane %v553, %v577
        %v579 = vlaneseq
        %v580 = vshrl.u32 %v579, 7
        %v581 = vsub.s32 5, %v580
        %v582 = vrot.slane %v553, %v581
        %v583 = vlaneseq
        %v584 = vshrl.u32 %v583, 7
        %v585 = vsub.s32 6, %v584
        %v586 = vrot.slane %v553, %v585
        %v587 = vlaneseq
        %v588 = vshrl.u32 %v587, 7
        %v589 = vsub.s32 7, %v588
        %v590 = vrot.slane %v553, %v589
        %v591 = vlaneseq
        %v592 = vshrl.u32 %v591, 7
        %v593 = vsub.s32 0, %v592
        %v594 = vrot.slane %v554, %v593
        %v595 = vlaneseq
        %v596 = vshrl.u32 %v595, 7
        %v597 = vsub.s32 1, %v596
        %v598 = vrot.slane %v554, %v597
        %v599 = vlaneseq
        %v600 = vshrl.u32 %v599, 7
        %v601 = vsub.s32 2, %v600
        %v602 = vrot.slane %v554, %v601
        %v603 = vlaneseq
        %v604 = vshrl.u32 %v603, 7
        %v605 = vsub.s32 3, %v604
        %v606 = vrot.slane %v554, %v605
        %v607 = vlaneseq
        %v608 = vshrl.u32 %v607, 7
        %v609 = vsub.s32 4, %v608
        %v610 = vrot.slane %v554, %v609
        %v611 = vlaneseq
        %v612 = vshrl.u32 %v611, 7
        %v613 = vsub.s32 5, %v612
        %v614 = vrot.slane %v554, %v613
        %v615 = vlaneseq
        %v616 = vshrl.u32 %v615, 7
        %v617 = vsub.s32 6, %v616
        %v618 = vrot.slane %v554, %v617
        %v619 = vlaneseq
        %v620 = vshrl.u32 %v619, 7
        %v621 = vsub.s32 7, %v620
        %v622 = vrot.slane %v554, %v621
        %v623 = vlaneseq
        %v624 = vshrl.u32 %v623, 7
        %v625 = vsub.s32 0, %v624
        %v626 = vrot.slane %v555, %v625
        %v627 = vlaneseq
        %v628 = vshrl.u32 %v627, 7
        %v629 = vsub.s32 1, %v628
        %v630 = vrot.slane %v555, %v629
        %v631 = vlaneseq
        %v632 = vshrl.u32 %v631, 7
        %v633 = vsub.s32 2, %v632
        %v634 = vrot.slane %v555, %v633
        %v635 = vlaneseq
        %v636 = vshrl.u32 %v635, 7
        %v637 = vsub.s32 3, %v636
        %v638 = vrot.slane %v555, %v637
        %v639 = vlaneseq
        %v640 = vshrl.u32 %v639, 7
        %v641 = vsub.s32 4, %v640
        %v642 = vrot.slane %v555, %v641
        %v884 = vunpack.c.l.b16 %v333
        %v885 = vunpack.c.h.b16 %v333
        %v886 = vunpack.c.l.b16 %v334
        %v887 = vunpack.c.h.b16 %v334
        %v888 = vunpack.c.l.b16 %v335
        %v889 = vunpack.c.h.b16 %v335
        %v890 = vunpack.c.l.b16 %v336
        %v891 = vunpack.c.h.b16 %v336
        %v892 = vunpack.c.l.b16 %v337
        %v893 = vunpack.c.h.b16 %v337
        %v894 = vunpack.c.l.b16 %v338
        %v895 = vunpack.c.h.b16 %v338
        %v896 = vunpack.c.l.b16 %v339
        %v897 = vunpack.c.h.b16 %v339
        %v898 = vunpack.c.l.b16 %v340
        %v899 = vunpack.c.h.b16 %v340
        %v900 = vunpack.c.l.b16 %v341
        %v901 = vunpack.c.h.b16 %v341
        %v902 = vunpack.c.l.b16 %v342
        %v903 = vunpack.c.h.b16 %v342
        %v904 = vunpack.c.l.b16 %v343
        %v905 = vunpack.c.l.b16 %v344
        %v906 = vunpack.c.h.b16 %v344
        %v907 = vunpack.c.l.b16 %v345
        %v908 = vunpack.c.h.b16 %v345
        %v909 = vunpack.c.l.b16 %v346
        %v910 = vunpack.c.h.b16 %v346
        %v911 = vunpack.c.l.b16 %v347
        %v912 = vunpack.c.h.b16 %v347
        %v913 = vunpack.c.l.b16 %v348
        %v914 = vunpack.c.h.b16 %v348
        %v915 = vunpack.c.l.b16 %v349
        %v916 = vunpack.c.h.b16 %v349
        %v917 = vunpack.c.l.b16 %v350
        %v918 = vunpack.c.h.b16 %v350
        %v919 = vunpack.c.l.b16 %v351
        %v920 = vunpack.c.h.b16 %v351
        %v921 = vunpack.c.l.b16 %v352
        %v922 = vunpack.c.h.b16 %v352
        %v923 = vunpack.c.l.b16 %v353
        %v924 = vunpack.c.h.b16 %v353
        %v925 = vunpack.c.l.b16 %v354
        %v926 = vunpack.c.l.b16 %v355
        %v927 = vunpack.c.h.b16 %v355
        %v928 = vunpack.c.l.b16 %v356
        %v929 = vunpack.c.h.b16 %v356
        %v930 = vunpack.c.l.b16 %v357
        %v931 = vunpack.c.h.b16 %v357
        %v932 = vunpack.c.l.b16 %v358
        %v933 = vunpack.c.h.b16 %v358
        %v934 = vunpack.c.l.b16 %v359
        %v935 = vunpack.c.h.b16 %v359
        %v936 = vunpack.c.l.b16 %v360
        %v937 = vunpack.c.h.b16 %v360
        %v938 = vunpack.c.l.b16 %v361
        %v939 = vunpack.c.h.b16 %v361
        %v940 = vunpack.c.l.b16 %v362
        %v941 = vunpack.c.h.b16 %v362
        %v942 = vunpack.c.l.b16 %v363
        %v943 = vunpack.c.h.b16 %v363
        %v944 = vunpack.c.l.b16 %v364
        %v945 = vunpack.c.h.b16 %v364
        %v946 = vunpack.c.l.b16 %v365
        %v947 = vunpack.c.l.b16 %v366
        %v948 = vunpack.c.h.b16 %v366
        %v949 = vunpack.c.l.b16 %v367
        %v950 = vunpack.c.h.b16 %v367
        %v951 = vunpack.c.l.b16 %v368
        %v952 = vunpack.c.h.b16 %v368
        %v953 = vunpack.c.l.b16 %v369
        %v954 = vunpack.c.h.b16 %v369
        %v955 = vunpack.c.l.b16 %v370
        %v956 = vunpack.c.h.b16 %v370
        %v957 = vunpack.c.l.b16 %v371
        %v958 = vunpack.c.h.b16 %v371
        %v959 = vunpack.c.l.b16 %v372
        %v960 = vunpack.c.h.b16 %v372
        %v961 = vunpack.c.l.b16 %v373
        %v962 = vunpack.c.h.b16 %v373
        %v963 = vunpack.c.l.b16 %v374
        %v964 = vunpack.c.h.b16 %v374
        %v965 = vunpack.c.l.b16 %v375
        %v966 = vunpack.c.h.b16 %v375
        %v967 = vunpack.c.l.b16 %v376
        %v968 = vunpack.c.l.b16 %v377
        %v969 = vunpack.c.h.b16 %v377
        %v970 = vunpack.c.l.b16 %v378
        %v971 = vunpack.c.h.b16 %v378
        %v972 = vunpack.c.l.b16 %v379
        %v973 = vunpack.c.h.b16 %v379
        %v974 = vunpack.c.l.b16 %v380
        %v975 = vunpack.c.h.b16 %v380
        %v976 = vunpack.c.l.b16 %v381
        %v977 = vunpack.c.h.b16 %v381
        %v978 = vunpack.c.l.b16 %v382
        %v979 = vunpack.c.h.b16 %v382
        %v980 = vunpack.c.l.b16 %v383
        %v981 = vunpack.c.h.b16 %v383
        %v982 = vunpack.c.l.b16 %v384
        %v983 = vunpack.c.h.b16 %v384
        %v984 = vunpack.c.l.b16 %v385
        %v985 = vunpack.c.h.b16 %v385
        %v986 = vunpack.c.l.b16 %v386
        %v987 = vunpack.c.h.b16 %v386
        %v988 = vunpack.c.l.b16 %v387
        %v989 = vunpack.c.l.b16 %v388
        %v990 = vunpack.c.h.b16 %v388
        %v991 = vunpack.c.l.b16 %v389
        %v992 = vunpack.c.h.b16 %v389
        %v993 = vunpack.c.l.b16 %v390
        %v994 = vunpack.c.h.b16 %v390
        %v995 = vunpack.c.l.b16 %v391
        %v996 = vunpack.c.h.b16 %v391
        %v997 = vunpack.c.l.b16 %v392
        %v998 = vunpack.c.h.b16 %v392
        %v999 = vunpack.c.l.b16 %v393
        %v1000 = vunpack.c.h.b16 %v393
        %v1001 = vunpack.c.l.b16 %v394
        %v1002 = vunpack.c.h.b16 %v394
        %v1003 = vunpack.c.l.b16 %v395
        %v1004 = vunpack.c.h.b16 %v395
        %v1005 = vunpack.c.l.b16 %v396
        %v1006 = vunpack.c.h.b16 %v396
        %v1007 = vunpack.c.l.b16 %v397
        %v1008 = vunpack.c.h.b16 %v397
        %v1009 = vunpack.c.l.b16 %v398
        %v1010 = vunpack.c.l.b16 %v399
        %v1011 = vunpack.c.h.b16 %v399
        %v1012 = vunpack.c.l.b16 %v400
        %v1013 = vunpack.c.h.b16 %v400
        %v1014 = vunpack.c.l.b16 %v401
        %v1015 = vunpack.c.h.b16 %v401
        %v1016 = vunpack.c.l.b16 %v402
        %v1017 = vunpack.c.h.b16 %v402
        %v1018 = vunpack.c.l.b16 %v403
        %v1019 = vunpack.c.h.b16 %v403
        %v1020 = vunpack.c.l.b16 %v404
        %v1021 = vunpack.c.h.b16 %v404
        %v1022 = vunpack.c.l.b16 %v405
        %v1023 = vunpack.c.h.b16 %v405
        %v1024 = vunpack.c.l.b16 %v406
        %v1025 = vunpack.c.h.b16 %v406
        %v1026 = vunpack.c.l.b16 %v407
        %v1027 = vunpack.c.h.b16 %v407
        %v1028 = vunpack.c.l.b16 %v408
        %v1029 = vunpack.c.h.b16 %v408
        %v1030 = vunpack.c.l.b16 %v409
        %v1031 = vunpack.c.l.b16 %v410
        %v1032 = vunpack.c.h.b16 %v410
        %v1033 = vunpack.c.l.b16 %v411
        %v1034 = vunpack.c.h.b16 %v411
        %v1035 = vunpack.c.l.b16 %v412
        %v1036 = vunpack.c.h.b16 %v412
        %v1037 = vunpack.c.l.b16 %v413
        %v1038 = vunpack.c.h.b16 %v413
        %v1039 = vunpack.c.l.b16 %v414
        %v1040 = vunpack.c.h.b16 %v414
        %v1041 = vunpack.c.l.b16 %v415
        %v1042 = vunpack.c.h.b16 %v415
        %v1043 = vunpack.c.l.b16 %v416
        %v1044 = vunpack.c.h.b16 %v416
        %v1045 = vunpack.c.l.b16 %v417
        %v1046 = vunpack.c.h.b16 %v417
        %v1047 = vunpack.c.l.b16 %v418
        %v1048 = vunpack.c.h.b16 %v418
        %v1049 = vunpack.c.l.b16 %v419
        %v1050 = vunpack.c.h.b16 %v419
        %v1051 = vunpack.c.l.b16 %v420
        %v1052 = vunpack.c.l.b16 %v421
        %v1053 = vunpack.c.h.b16 %v421
        %v1054 = vunpack.c.l.b16 %v422
        %v1055 = vunpack.c.h.b16 %v422
        %v1056 = vunpack.c.l.b16 %v423
        %v1057 = vunpack.c.h.b16 %v423
        %v1058 = vunpack.c.l.b16 %v424
        %v1059 = vunpack.c.h.b16 %v424
        %v1060 = vunpack.c.l.b16 %v425
        %v1061 = vunpack.c.h.b16 %v425
        %v1062 = vunpack.c.l.b16 %v426
        %v1063 = vunpack.c.h.b16 %v426
        %v1064 = vunpack.c.l.b16 %v427
        %v1065 = vunpack.c.h.b16 %v427
        %v1066 = vunpack.c.l.b16 %v428
        %v1067 = vunpack.c.h.b16 %v428
        %v1068 = vunpack.c.l.b16 %v429
        %v1069 = vunpack.c.h.b16 %v429
        %v1070 = vunpack.c.l.b16 %v430
        %v1071 = vunpack.c.h.b16 %v430
        %v1072 = vunpack.c.l.b16 %v431
        %v1073 = vunpack.c.l.b16 %v432
        %v1074 = vunpack.c.h.b16 %v432
        %v1075 = vunpack.c.l.b16 %v433
        %v1076 = vunpack.c.h.b16 %v433
        %v1077 = vunpack.c.l.b16 %v434
        %v1078 = vunpack.c.h.b16 %v434
        %v1079 = vunpack.c.l.b16 %v435
        %v1080 = vunpack.c.h.b16 %v435
        %v1081 = vunpack.c.l.b16 %v436
        %v1082 = vunpack.c.h.b16 %v436
        %v1083 = vunpack.c.l.b16 %v437
        %v1084 = vunpack.c.h.b16 %v437
        %v1085 = vunpack.c.l.b16 %v438
        %v1086 = vunpack.c.h.b16 %v438
        %v1087 = vunpack.c.l.b16 %v439
        %v1088 = vunpack.c.h.b16 %v439
        %v1089 = vunpack.c.l.b16 %v440
        %v1090 = vunpack.c.h.b16 %v440
        %v1091 = vunpack.c.l.b16 %v441
        %v1092 = vunpack.c.h.b16 %v441
        %v1093 = vunpack.c.l.b16 %v442
        %v1094 = vunpack.c.l.b16 %v443
        %v1095 = vunpack.c.h.b16 %v443
        %v1096 = vunpack.c.l.b16 %v444
        %v1097 = vunpack.c.h.b16 %v444
        %v1098 = vunpack.c.l.b16 %v445
        %v1099 = vunpack.c.h.b16 %v445
        %v1100 = vunpack.c.l.b16 %v446
        %v1101 = vunpack.c.h.b16 %v446
        %v1102 = vunpack.c.l.b16 %v447
        %v1103 = vunpack.c.h.b16 %v447
        %v1104 = vunpack.c.l.b16 %v448
        %v1105 = vunpack.c.h.b16 %v448
        %v1106 = vunpack.c.l.b16 %v449
        %v1107 = vunpack.c.h.b16 %v449
        %v1108 = vunpack.c.l.b16 %v450
        %v1109 = vunpack.c.h.b16 %v450
        %v1110 = vunpack.c.l.b16 %v451
        %v1111 = vunpack.c.h.b16 %v451
        %v1112 = vunpack.c.l.b16 %v452
        %v1113 = vunpack.c.h.b16 %v452
        %v1114 = vunpack.c.l.b16 %v453
        %v1115 = vunpack.c.l.b16 %v454
        %v1116 = vunpack.c.h.b16 %v454
        %v1117 = vunpack.c.l.b16 %v455
        %v1118 = vunpack.c.h.b16 %v455
        %v1119 = vunpack.c.l.b16 %v456
        %v1120 = vunpack.c.h.b16 %v456
        %v1121 = vunpack.c.l.b16 %v457
        %v1122 = vunpack.c.h.b16 %v457
        %v1123 = vunpack.c.l.b16 %v458
        %v1124 = vunpack.c.h.b16 %v458
        %v1125 = vunpack.c.l.b16 %v459
        %v1126 = vunpack.c.h.b16 %v459
        %v1127 = vunpack.c.l.b16 %v460
        %v1128 = vunpack.c.h.b16 %v460
        %v1129 = vunpack.c.l.b16 %v461
        %v1130 = vunpack.c.h.b16 %v461
        %v1131 = vunpack.c.l.b16 %v462
        %v1132 = vunpack.c.h.b16 %v462
        %v1133 = vunpack.c.l.b16 %v463
        %v1134 = vunpack.c.h.b16 %v463
        %v1135 = vunpack.c.l.b16 %v464
        %v1136 = vunpack.c.l.b16 %v465
        %v1137 = vunpack.c.h.b16 %v465
        %v1138 = vunpack.c.l.b16 %v466
        %v1139 = vunpack.c.h.b16 %v466
        %v1140 = vunpack.c.l.b16 %v467
        %v1141 = vunpack.c.h.b16 %v467
        %v1142 = vunpack.c.l.b16 %v468
        %v1143 = vunpack.c.h.b16 %v468
        %v1144 = vunpack.c.l.b16 %v469
        %v1145 = vunpack.c.h.b16 %v469
        %v1146 = vunpack.c.l.b16 %v470
        %v1147 = vunpack.c.h.b16 %v470
        %v1148 = vunpack.c.l.b16 %v471
        %v1149 = vunpack.c.h.b16 %v471
        %v1150 = vunpack.c.l.b16 %v472
        %v1151 = vunpack.c.h.b16 %v472
        %v1152 = vunpack.c.l.b16 %v473
        %v1153 = vunpack.c.h.b16 %v473
        %v1154 = vunpack.c.l.b16 %v474
        %v1155 = vunpack.c.h.b16 %v474
        %v1156 = vunpack.c.l.b16 %v475
        %v1157 = vunpack.c.l.b16 %v476
        %v1158 = vunpack.c.h.b16 %v476
        %v1159 = vunpack.c.l.b16 %v477
        %v1160 = vunpack.c.h.b16 %v477
        %v1161 = vunpack.c.l.b16 %v478
        %v1162 = vunpack.c.h.b16 %v478
        %v1163 = vunpack.c.l.b16 %v479
        %v1164 = vunpack.c.h.b16 %v479
        %v1165 = vunpack.c.l.b16 %v480
        %v1166 = vunpack.c.h.b16 %v480
        %v1167 = vunpack.c.l.b16 %v481
        %v1168 = vunpack.c.h.b16 %v481
        %v1169 = vunpack.c.l.b16 %v482
        %v1170 = vunpack.c.h.b16 %v482
        %v1171 = vunpack.c.l.b16 %v483
        %v1172 = vunpack.c.h.b16 %v483
        %v1173 = vunpack.c.l.b16 %v484
        %v1174 = vunpack.c.h.b16 %v484
        %v1175 = vunpack.c.l.b16 %v485
        %v1176 = vunpack.c.h.b16 %v485
        %v1177 = vunpack.c.l.b16 %v486
        %v1178 = vunpack.c.l.b16 %v487
        %v1179 = vunpack.c.h.b16 %v487
        %v1180 = vunpack.c.l.b16 %v488
        %v1181 = vunpack.c.h.b16 %v488
        %v1182 = vunpack.c.l.b16 %v489
        %v1183 = vunpack.c.h.b16 %v489
        %v1184 = vunpack.c.l.b16 %v490
        %v1185 = vunpack.c.h.b16 %v490
        %v1186 = vunpack.c.l.b16 %v491
        %v1187 = vunpack.c.h.b16 %v491
        %v1188 = vunpack.c.l.b16 %v492
        %v1189 = vunpack.c.h.b16 %v492
        %v1190 = vunpack.c.l.b16 %v493
        %v1191 = vunpack.c.h.b16 %v493
        %v1192 = vunpack.c.l.b16 %v494
        %v1193 = vunpack.c.h.b16 %v494
        %v1194 = vunpack.c.l.b16 %v495
        %v1195 = vunpack.c.h.b16 %v495
        %v1196 = vunpack.c.l.b16 %v496
        %v1197 = vunpack.c.h.b16 %v496
        %v1198 = vunpack.c.l.b16 %v497
        %v1199 = vunpack.c.l.b16 %v498
        %v1200 = vunpack.c.h.b16 %v498
        %v1201 = vunpack.c.l.b16 %v499
        %v1202 = vunpack.c.h.b16 %v499
        %v1203 = vunpack.c.l.b16 %v500
        %v1204 = vunpack.c.h.b16 %v500
        %v1205 = vunpack.c.l.b16 %v501
        %v1206 = vunpack.c.h.b16 %v501
        %v1207 = vunpack.c.l.b16 %v502
        %v1208 = vunpack.c.h.b16 %v502
        %v1209 = vunpack.c.l.b16 %v503
        %v1210 = vunpack.c.h.b16 %v503
        %v1211 = vunpack.c.l.b16 %v504
        %v1212 = vunpack.c.h.b16 %v504
        %v1213 = vunpack.c.l.b16 %v505
        %v1214 = vunpack.c.h.b16 %v505
        %v1215 = vunpack.c.l.b16 %v506
        %v1216 = vunpack.c.h.b16 %v506
        %v1217 = vunpack.c.l.b16 %v507
        %v1218 = vunpack.c.h.b16 %v507
        %v1219 = vunpack.c.l.b16 %v508
        %v1220 = vunpack.c.l.b16 %v509
        %v1221 = vunpack.c.h.b16 %v509
        %v1222 = vunpack.c.l.b16 %v510
        %v1223 = vunpack.c.h.b16 %v510
        %v1224 = vunpack.c.l.b16 %v511
        %v1225 = vunpack.c.h.b16 %v511
        %v1226 = vunpack.c.l.b16 %v512
        %v1227 = vunpack.c.h.b16 %v512
        %v1228 = vunpack.c.l.b16 %v513
        %v1229 = vunpack.c.h.b16 %v513
        %v1230 = vunpack.c.l.b16 %v514
        %v1231 = vunpack.c.h.b16 %v514
        %v1232 = vunpack.c.l.b16 %v515
        %v1233 = vunpack.c.h.b16 %v515
        %v1234 = vunpack.c.l.b16 %v516
        %v1235 = vunpack.c.h.b16 %v516
        %v1236 = vunpack.c.l.b16 %v517
        %v1237 = vunpack.c.h.b16 %v517
        %v1238 = vunpack.c.l.b16 %v518
        %v1239 = vunpack.c.h.b16 %v518
        %v1240 = vunpack.c.l.b16 %v519
        %v1241 = vunpack.c.l.b16 %v520
        %v1242 = vunpack.c.h.b16 %v520
        %v1243 = vunpack.c.l.b16 %v521
        %v1244 = vunpack.c.h.b16 %v521
        %v1245 = vunpack.c.l.b16 %v522
        %v1246 = vunpack.c.h.b16 %v522
        %v1247 = vunpack.c.l.b16 %v523
        %v1248 = vunpack.c.h.b16 %v523
        %v1249 = vunpack.c.l.b16 %v524
        %v1250 = vunpack.c.h.b16 %v524
        %v1251 = vunpack.c.l.b16 %v525
        %v1252 = vunpack.c.h.b16 %v525
        %v1253 = vunpack.c.l.b16 %v526
        %v1254 = vunpack.c.h.b16 %v526
        %v1255 = vunpack.c.l.b16 %v527
        %v1256 = vunpack.c.h.b16 %v527
        %v1257 = vunpack.c.l.b16 %v528
        %v1258 = vunpack.c.h.b16 %v528
        %v1259 = vunpack.c.l.b16 %v529
        %v1260 = vunpack.c.h.b16 %v529
        %v1261 = vunpack.c.l.b16 %v530
        %v1262 = vunpack.c.l.b16 %v531
        %v1263 = vunpack.c.h.b16 %v531
        %v1264 = vunpack.c.l.b16 %v532
        %v1265 = vunpack.c.h.b16 %v532
        %v1266 = vunpack.c.l.b16 %v533
        %v1267 = vunpack.c.h.b16 %v533
        %v1268 = vunpack.c.l.b16 %v534
        %v1269 = vunpack.c.h.b16 %v534
        %v1270 = vunpack.c.l.b16 %v535
        %v1271 = vunpack.c.h.b16 %v535
        %v1272 = vunpack.c.l.b16 %v536
        %v1273 = vunpack.c.h.b16 %v536
        %v1274 = vunpack.c.l.b16 %v537
        %v1275 = vunpack.c.h.b16 %v537
        %v1276 = vunpack.c.l.b16 %v538
        %v1277 = vunpack.c.h.b16 %v538
        %v1278 = vunpack.c.l.b16 %v539
        %v1279 = vunpack.c.h.b16 %v539
        %v1280 = vunpack.c.l.b16 %v540
        %v1281 = vunpack.c.h.b16 %v540
        %v1282 = vunpack.c.l.b16 %v541
        %v1283 = vunpack.c.l.b16 %v542
        %v1284 = vunpack.c.h.b16 %v542
        %v1285 = vunpack.c.l.b16 %v543
        %v1286 = vunpack.c.h.b16 %v543
        %v1287 = vunpack.c.l.b16 %v544
        %v1288 = vunpack.c.h.b16 %v544
        %v1289 = vunpack.c.l.b16 %v545
        %v1290 = vunpack.c.h.b16 %v545
        %v1291 = vunpack.c.l.b16 %v546
        %v1292 = vunpack.c.h.b16 %v546
        %v1293 = vunpack.c.l.b16 %v547
        %v1294 = vunpack.c.h.b16 %v547
        %v1295 = vunpack.c.l.b16 %v548
        %v1296 = vunpack.c.h.b16 %v548
        %v1297 = vunpack.c.l.b16 %v549
        %v1298 = vunpack.c.h.b16 %v549
        %v1299 = vunpack.c.l.b16 %v550
        %v1300 = vunpack.c.h.b16 %v550
        %v1301 = vunpack.c.l.b16 %v551
        %v1302 = vunpack.c.h.b16 %v551
        %v1303 = vunpack.c.l.b16 %v552
        %v1304 = vpack.c.b16 %v905, %v884
        %v1305 = vpack.c.b16 %v906, %v885
        %v1306 = vpack.c.b16 %v907, %v886
        %v1307 = vpack.c.b16 %v908, %v887
        %v1308 = vpack.c.b16 %v909, %v888
        %v1309 = vpack.c.b16 %v910, %v889
        %v1310 = vpack.c.b16 %v911, %v890
        %v1311 = vpack.c.b16 %v912, %v891
        %v1312 = vpack.c.b16 %v913, %v892
        %v1313 = vpack.c.b16 %v914, %v893
        %v1314 = vpack.c.b16 %v915, %v894
        %v1315 = vpack.c.b16 %v916, %v895
        %v1316 = vpack.c.b16 %v917, %v896
        %v1317 = vpack.c.b16 %v918, %v897
        %v1318 = vpack.c.b16 %v919, %v898
        %v1319 = vpack.c.b16 %v920, %v899
        %v1320 = vpack.c.b16 %v921, %v900
        %v1321 = vpack.c.b16 %v922, %v901
        %v1322 = vpack.c.b16 %v923, %v902
        %v1323 = vpack.c.b16 %v924, %v903
        %v1324 = vpack.c.b16 %v925, %v904
        %v1325 = vpack.c.b16 %v947, %v926
        %v1326 = vpack.c.b16 %v948, %v927
        %v1327 = vpack.c.b16 %v949, %v928
        %v1328 = vpack.c.b16 %v950, %v929
        %v1329 = vpack.c.b16 %v951, %v930
        %v1330 = vpack.c.b16 %v952, %v931
        %v1331 = vpack.c.b16 %v953, %v932
        %v1332 = vpack.c.b16 %v954, %v933
        %v1333 = vpack.c.b16 %v955, %v934
        %v1334 = vpack.c.b16 %v956, %v935
        %v1335 = vpack.c.b16 %v957, %v936
        %v1336 = vpack.c.b16 %v958, %v937
        %v1337 = vpack.c.b16 %v959, %v938
        %v1338 = vpack.c.b16 %v960, %v939
        %v1339 = vpack.c.b16 %v961, %v940
        %v1340 = vpack.c.b16 %v962, %v941
        %v1341 = vpack.c.b16 %v963, %v942
        %v1342 = vpack.c.b16 %v964, %v943
        %v1343 = vpack.c.b16 %v965, %v944
        %v1344 = vpack.c.b16 %v966, %v945
        %v1345 = vpack.c.b16 %v967, %v946
        %v1346 = vpack.c.b16 %v989, %v968
        %v1347 = vpack.c.b16 %v990, %v969
        %v1348 = vpack.c.b16 %v991, %v970
        %v1349 = vpack.c.b16 %v992, %v971
        %v1350 = vpack.c.b16 %v993, %v972
        %v1351 = vpack.c.b16 %v994, %v973
        %v1352 = vpack.c.b16 %v995, %v974
        %v1353 = vpack.c.b16 %v996, %v975
        %v1354 = vpack.c.b16 %v997, %v976
        %v1355 = vpack.c.b16 %v998, %v977
        %v1356 = vpack.c.b16 %v999, %v978
        %v1357 = vpack.c.b16 %v1000, %v979
        %v1358 = vpack.c.b16 %v1001, %v980
        %v1359 = vpack.c.b16 %v1002, %v981
        %v1360 = vpack.c.b16 %v1003, %v982
        %v1361 = vpack.c.b16 %v1004, %v983
        %v1362 = vpack.c.b16 %v1005, %v984
        %v1363 = vpack.c.b16 %v1006, %v985
        %v1364 = vpack.c.b16 %v1007, %v986
        %v1365 = vpack.c.b16 %v1008, %v987
        %v1366 = vpack.c.b16 %v1009, %v988
        %v1367 = vpack.c.b16 %v1031, %v1010
        %v1368 = vpack.c.b16 %v1032, %v1011
        %v1369 = vpack.c.b16 %v1033, %v1012
        %v1370 = vpack.c.b16 %v1034, %v1013
        %v1371 = vpack.c.b16 %v1035, %v1014
        %v1372 = vpack.c.b16 %v1036, %v1015
        %v1373 = vpack.c.b16 %v1037, %v1016
        %v1374 = vpack.c.b16 %v1038, %v1017
        %v1375 = vpack.c.b16 %v1039, %v1018
        %v1376 = vpack.c.b16 %v1040, %v1019
        %v1377 = vpack.c.b16 %v1041, %v1020
        %v1378 = vpack.c.b16 %v1042, %v1021
        %v1379 = vpack.c.b16 %v1043, %v1022
        %v1380 = vpack.c.b16 %v1044, %v1023
        %v1381 = vpack.c.b16 %v1045, %v1024
        %v1382 = vpack.c.b16 %v1046, %v1025
        %v1383 = vpack.c.b16 %v1047, %v1026
        %v1384 = vpack.c.b16 %v1048, %v1027
        %v1385 = vpack.c.b16 %v1049, %v1028
        %v1386 = vpack.c.b16 %v1050, %v1029
        %v1387 = vpack.c.b16 %v1051, %v1030
        %v1388 = vpack.c.b16 %v1073, %v1052
        %v1389 = vpack.c.b16 %v1074, %v1053
        %v1390 = vpack.c.b16 %v1075, %v1054
        %v1391 = vpack.c.b16 %v1076, %v1055
        %v1392 = vpack.c.b16 %v1077, %v1056
        %v1393 = vpack.c.b16 %v1078, %v1057
        %v1394 = vpack.c.b16 %v1079, %v1058
        %v1395 = vpack.c.b16 %v1080, %v1059
        %v1396 = vpack.c.b16 %v1081, %v1060
        %v1397 = vpack.c.b16 %v1082, %v1061
        %v1398 = vpack.c.b16 %v1083, %v1062
        %v1399 = vpack.c.b16 %v1084, %v1063
        %v1400 = vpack.c.b16 %v1085, %v1064
        %v1401 = vpack.c.b16 %v1086, %v1065
        %v1402 = vpack.c.b16 %v1087, %v1066
        %v1403 = vpack.c.b16 %v1088, %v1067
        %v1404 = vpack.c.b16 %v1089, %v1068
        %v1405 = vpack.c.b16 %v1090, %v1069
        %v1406 = vpack.c.b16 %v1091, %v1070
        %v1407 = vpack.c.b16 %v1092, %v1071
        %v1408 = vpack.c.b16 %v1093, %v1072
        %v1409 = vpack.c.b16 %v1115, %v1094
        %v1410 = vpack.c.b16 %v1116, %v1095
        %v1411 = vpack.c.b16 %v1117, %v1096
        %v1412 = vpack.c.b16 %v1118, %v1097
        %v1413 = vpack.c.b16 %v1119, %v1098
        %v1414 = vpack.c.b16 %v1120, %v1099
        %v1415 = vpack.c.b16 %v1121, %v1100
        %v1416 = vpack.c.b16 %v1122, %v1101
        %v1417 = vpack.c.b16 %v1123, %v1102
        %v1418 = vpack.c.b16 %v1124, %v1103
        %v1419 = vpack.c.b16 %v1125, %v1104
        %v1420 = vpack.c.b16 %v1126, %v1105
        %v1421 = vpack.c.b16 %v1127, %v1106
        %v1422 = vpack.c.b16 %v1128, %v1107
        %v1423 = vpack.c.b16 %v1129, %v1108
        %v1424 = vpack.c.b16 %v1130, %v1109
        %v1425 = vpack.c.b16 %v1131, %v1110
        %v1426 = vpack.c.b16 %v1132, %v1111
        %v1427 = vpack.c.b16 %v1133, %v1112
        %v1428 = vpack.c.b16 %v1134, %v1113
        %v1429 = vpack.c.b16 %v1135, %v1114
        %v1430 = vpack.c.b16 %v1157, %v1136
        %v1431 = vpack.c.b16 %v1158, %v1137
        %v1432 = vpack.c.b16 %v1159, %v1138
        %v1433 = vpack.c.b16 %v1160, %v1139
        %v1434 = vpack.c.b16 %v1161, %v1140
        %v1435 = vpack.c.b16 %v1162, %v1141
        %v1436 = vpack.c.b16 %v1163, %v1142
        %v1437 = vpack.c.b16 %v1164, %v1143
        %v1438 = vpack.c.b16 %v1165, %v1144
        %v1439 = vpack.c.b16 %v1166, %v1145
        %v1440 = vpack.c.b16 %v1167, %v1146
        %v1441 = vpack.c.b16 %v1168, %v1147
        %v1442 = vpack.c.b16 %v1169, %v1148
        %v1443 = vpack.c.b16 %v1170, %v1149
        %v1444 = vpack.c.b16 %v1171, %v1150
        %v1445 = vpack.c.b16 %v1172, %v1151
        %v1446 = vpack.c.b16 %v1173, %v1152
        %v1447 = vpack.c.b16 %v1174, %v1153
        %v1448 = vpack.c.b16 %v1175, %v1154
        %v1449 = vpack.c.b16 %v1176, %v1155
        %v1450 = vpack.c.b16 %v1177, %v1156
        %v1451 = vpack.c.b16 %v1199, %v1178
        %v1452 = vpack.c.b16 %v1200, %v1179
        %v1453 = vpack.c.b16 %v1201, %v1180
        %v1454 = vpack.c.b16 %v1202, %v1181
        %v1455 = vpack.c.b16 %v1203, %v1182
        %v1456 = vpack.c.b16 %v1204, %v1183
        %v1457 = vpack.c.b16 %v1205, %v1184
        %v1458 = vpack.c.b16 %v1206, %v1185
        %v1459 = vpack.c.b16 %v1207, %v1186
        %v1460 = vpack.c.b16 %v1208, %v1187
        %v1461 = vpack.c.b16 %v1209, %v1188
        %v1462 = vpack.c.b16 %v1210, %v1189
        %v1463 = vpack.c.b16 %v1211, %v1190
        %v1464 = vpack.c.b16 %v1212, %v1191
        %v1465 = vpack.c.b16 %v1213, %v1192
        %v1466 = vpack.c.b16 %v1214, %v1193
        %v1467 = vpack.c.b16 %v1215, %v1194
        %v1468 = vpack.c.b16 %v1216, %v1195
        %v1469 = vpack.c.b16 %v1217, %v1196
        %v1470 = vpack.c.b16 %v1218, %v1197
        %v1471 = vpack.c.b16 %v1219, %v1198
        %v1472 = vpack.c.b16 %v1241, %v1220
        %v1473 = vpack.c.b16 %v1242, %v1221
        %v1474 = vpack.c.b16 %v1243, %v1222
        %v1475 = vpack.c.b16 %v1244, %v1223
        %v1476 = vpack.c.b16 %v1245, %v1224
        %v1477 = vpack.c.b16 %v1246, %v1225
        %v1478 = vpack.c.b16 %v1247, %v1226
        %v1479 = vpack.c.b16 %v1248, %v1227
        %v1480 = vpack.c.b16 %v1249, %v1228
        %v1481 = vpack.c.b16 %v1250, %v1229
        %v1482 = vpack.c.b16 %v1251, %v1230
        %v1483 = vpack.c.b16 %v1252, %v1231
        %v1484 = vpack.c.b16 %v1253, %v1232
        %v1485 = vpack.c.b16 %v1254, %v1233
        %v1486 = vpack.c.b16 %v1255, %v1234
        %v1487 = vpack.c.b16 %v1256, %v1235
        %v1488 = vpack.c.b16 %v1257, %v1236
        %v1489 = vpack.c.b16 %v1258, %v1237
        %v1490 = vpack.c.b16 %v1259, %v1238
        %v1491 = vpack.c.b16 %v1260, %v1239
        %v1492 = vpack.c.b16 %v1261, %v1240
        %v1493 = vpack.c.b16 %v1283, %v1262
        %v1494 = vpack.c.b16 %v1284, %v1263
        %v1495 = vpack.c.b16 %v1285, %v1264
        %v1496 = vpack.c.b16 %v1286, %v1265
        %v1497 = vpack.c.b16 %v1287, %v1266
        %v1498 = vpack.c.b16 %v1288, %v1267
        %v1499 = vpack.c.b16 %v1289, %v1268
        %v1500 = vpack.c.b16 %v1290, %v1269
        %v1501 = vpack.c.b16 %v1291, %v1270
        %v1502 = vpack.c.b16 %v1292, %v1271
        %v1503 = vpack.c.b16 %v1293, %v1272
        %v1504 = vpack.c.b16 %v1294, %v1273
        %v1505 = vpack.c.b16 %v1295, %v1274
        %v1506 = vpack.c.b16 %v1296, %v1275
        %v1507 = vpack.c.b16 %v1297, %v1276
        %v1508 = vpack.c.b16 %v1298, %v1277
        %v1509 = vpack.c.b16 %v1299, %v1278
        %v1510 = vpack.c.b16 %v1300, %v1279
        %v1511 = vpack.c.b16 %v1301, %v1280
        %v1512 = vpack.c.b16 %v1302, %v1281
        %v1513 = vpack.c.b16 %v1303, %v1282
        %vm1724 = vcmask 261120
        %v1726 = vsel %vm1724, %v332, 0
        %1728 = vmatprep.subr.bf16.mxu0 %v1305
        %1729 = vmatpush1.bf16.msra.mxu0 %v1304
        %1730 = vmatprep.subr.bf16.mxu0 %v1326
        %1731 = vmatpush1.bf16.msra.mxu0 %v1325
        %1732 = vmatprep.subr.bf16.mxu0 %v1347
        %1733 = vmatpush1.bf16.msra.mxu0 %v1346
        %1734 = vmatprep.subr.bf16.mxu0 %v1368
        %1735 = vmatpush1.bf16.msra.mxu0 %v1367
        %1736 = vmatprep.subr.bf16.mxu0 %v1389
        %1737 = vmatpush1.bf16.msra.mxu0 %v1388
        %1738 = vmatprep.subr.bf16.mxu0 %v1410
        %1739 = vmatpush1.bf16.msra.mxu0 %v1409
        %1740 = vmatprep.subr.bf16.mxu0 %v1431
        %1741 = vmatpush1.bf16.msra.mxu0 %v1430
        %1742 = vmatprep.subr.bf16.mxu0 %v1452
        %1743 = vmatpush1.bf16.msra.mxu0 %v1451
        %1744 = vmatprep.subr.bf16.mxu0 %v1473
        %1745 = vmatpush1.bf16.msra.mxu0 %v1472
        %1746 = vmatprep.subr.bf16.mxu0 %v1494
        %1747 = vmatpush1.bf16.msra.mxu0 %v1493
        %1748 = vmatprep.subr.bf16.mxu0 0
        %1749 = vmatpush1.bf16.msra.mxu0 0
        %1750 = vmatprep.subr.bf16.mxu0 0
        %1751 = vmatpush1.bf16.msra.mxu0 0
        %1752 = vmatprep.subr.bf16.mxu0 0
        %1753 = vmatpush1.bf16.msra.mxu0 0
        %1754 = vmatprep.subr.bf16.mxu0 0
        %1755 = vmatpush1.bf16.msra.mxu0 0
        %1756 = vmatprep.subr.bf16.mxu0 0
        %1757 = vmatpush1.bf16.msra.mxu0 0
        %1758 = vmatprep.subr.bf16.mxu0 0
        %1759 = vmatpush1.bf16.msra.mxu0 0
        %1760 = vmatprep.mubr.bf16.mxu0 %v1726
        %1761 = vmatmul.mubr.bf16.gmra.mrb[0].mxu0 %v331
        %v1762 = vpop.f32.mrb[0].mxu0
        %v1763 = vadd.f32 %v562, %v1762
        %v1764 = vpop.f32.mrb[0].mxu0
        %v1765 = vadd.f32 %v566, %v1764
        %v1766 = vpop.f32.mrb[0].mxu0
        %v1767 = vpop.f32.mrb[0].mxu0
        %1768 = vdwg.mxu0
        %1769 = vmatprep.subr.bf16.mxu0 %v1307
        %1770 = vmatpush1.bf16.msra.mxu0 %v1306
        %1771 = vmatprep.subr.bf16.mxu0 %v1328
        %1772 = vmatpush1.bf16.msra.mxu0 %v1327
        %1773 = vmatprep.subr.bf16.mxu0 %v1349
        %1774 = vmatpush1.bf16.msra.mxu0 %v1348
        %1775 = vmatprep.subr.bf16.mxu0 %v1370
        %1776 = vmatpush1.bf16.msra.mxu0 %v1369
        %1777 = vmatprep.subr.bf16.mxu0 %v1391
        %1778 = vmatpush1.bf16.msra.mxu0 %v1390
        %1779 = vmatprep.subr.bf16.mxu0 %v1412
        %1780 = vmatpush1.bf16.msra.mxu0 %v1411
        %1781 = vmatprep.subr.bf16.mxu0 %v1433
        %1782 = vmatpush1.bf16.msra.mxu0 %v1432
        %1783 = vmatprep.subr.bf16.mxu0 %v1454
        %1784 = vmatpush1.bf16.msra.mxu0 %v1453
        %1785 = vmatprep.subr.bf16.mxu0 %v1475
        %1786 = vmatpush1.bf16.msra.mxu0 %v1474
        %1787 = vmatprep.subr.bf16.mxu0 %v1496
        %1788 = vmatpush1.bf16.msra.mxu0 %v1495
        %1789 = vmatprep.subr.bf16.mxu0 0
        %1790 = vmatpush1.bf16.msra.mxu0 0
        %1791 = vmatprep.subr.bf16.mxu0 0
        %1792 = vmatpush1.bf16.msra.mxu0 0
        %1793 = vmatprep.subr.bf16.mxu0 0
        %1794 = vmatpush1.bf16.msra.mxu0 0
        %1795 = vmatprep.subr.bf16.mxu0 0
        %1796 = vmatpush1.bf16.msra.mxu0 0
        %1797 = vmatprep.subr.bf16.mxu0 0
        %1798 = vmatpush1.bf16.msra.mxu0 0
        %1799 = vmatprep.subr.bf16.mxu0 0
        %1800 = vmatpush1.bf16.msra.mxu0 0
        %1801 = vmatprep.mubr.bf16.mxu0 %v1726
        %1802 = vmatmul.mubr.bf16.gmra.mrb[0].mxu0 %v331
        %v1803 = vpop.f32.mrb[0].mxu0
        %v1804 = vadd.f32 %v570, %v1803
        %v1805 = vpop.f32.mrb[0].mxu0
        %v1806 = vadd.f32 %v574, %v1805
        %v1807 = vpop.f32.mrb[0].mxu0
        %v1808 = vpop.f32.mrb[0].mxu0
        %1809 = vdwg.mxu0
        %1810 = vmatprep.subr.bf16.mxu0 %v1309
        %1811 = vmatpush1.bf16.msra.mxu0 %v1308
        %1812 = vmatprep.subr.bf16.mxu0 %v1330
        %1813 = vmatpush1.bf16.msra.mxu0 %v1329
        %1814 = vmatprep.subr.bf16.mxu0 %v1351
        %1815 = vmatpush1.bf16.msra.mxu0 %v1350
        %1816 = vmatprep.subr.bf16.mxu0 %v1372
        %1817 = vmatpush1.bf16.msra.mxu0 %v1371
        %1818 = vmatprep.subr.bf16.mxu0 %v1393
        %1819 = vmatpush1.bf16.msra.mxu0 %v1392
        %1820 = vmatprep.subr.bf16.mxu0 %v1414
        %1821 = vmatpush1.bf16.msra.mxu0 %v1413
        %1822 = vmatprep.subr.bf16.mxu0 %v1435
        %1823 = vmatpush1.bf16.msra.mxu0 %v1434
        %1824 = vmatprep.subr.bf16.mxu0 %v1456
        %1825 = vmatpush1.bf16.msra.mxu0 %v1455
        %1826 = vmatprep.subr.bf16.mxu0 %v1477
        %1827 = vmatpush1.bf16.msra.mxu0 %v1476
        %1828 = vmatprep.subr.bf16.mxu0 %v1498
        %1829 = vmatpush1.bf16.msra.mxu0 %v1497
        %1830 = vmatprep.subr.bf16.mxu0 0
        %1831 = vmatpush1.bf16.msra.mxu0 0
        %1832 = vmatprep.subr.bf16.mxu0 0
        %1833 = vmatpush1.bf16.msra.mxu0 0
        %1834 = vmatprep.subr.bf16.mxu0 0
        %1835 = vmatpush1.bf16.msra.mxu0 0
        %1836 = vmatprep.subr.bf16.mxu0 0
        %1837 = vmatpush1.bf16.msra.mxu0 0
        %1838 = vmatprep.subr.bf16.mxu0 0
        %1839 = vmatpush1.bf16.msra.mxu0 0
        %1840 = vmatprep.subr.bf16.mxu0 0
        %1841 = vmatpush1.bf16.msra.mxu0 0
        %1842 = vmatprep.mubr.bf16.mxu0 %v1726
        %1843 = vmatmul.mubr.bf16.gmra.mrb[0].mxu0 %v331
        %v1844 = vpop.f32.mrb[0].mxu0
        %v1845 = vadd.f32 %v578, %v1844
        %v1846 = vpop.f32.mrb[0].mxu0
        %v1847 = vadd.f32 %v582, %v1846
        %v1848 = vpop.f32.mrb[0].mxu0
        %v1849 = vpop.f32.mrb[0].mxu0
        %1850 = vdwg.mxu0
        %1851 = vmatprep.subr.bf16.mxu0 %v1311
        %1852 = vmatpush1.bf16.msra.mxu0 %v1310
        %1853 = vmatprep.subr.bf16.mxu0 %v1332
        %1854 = vmatpush1.bf16.msra.mxu0 %v1331
        %1855 = vmatprep.subr.bf16.mxu0 %v1353
        %1856 = vmatpush1.bf16.msra.mxu0 %v1352
        %1857 = vmatprep.subr.bf16.mxu0 %v1374
        %1858 = vmatpush1.bf16.msra.mxu0 %v1373
        %1859 = vmatprep.subr.bf16.mxu0 %v1395
        %1860 = vmatpush1.bf16.msra.mxu0 %v1394
        %1861 = vmatprep.subr.bf16.mxu0 %v1416
        %1862 = vmatpush1.bf16.msra.mxu0 %v1415
        %1863 = vmatprep.subr.bf16.mxu0 %v1437
        %1864 = vmatpush1.bf16.msra.mxu0 %v1436
        %1865 = vmatprep.subr.bf16.mxu0 %v1458
        %1866 = vmatpush1.bf16.msra.mxu0 %v1457
        %1867 = vmatprep.subr.bf16.mxu0 %v1479
        %1868 = vmatpush1.bf16.msra.mxu0 %v1478
        %1869 = vmatprep.subr.bf16.mxu0 %v1500
        %1870 = vmatpush1.bf16.msra.mxu0 %v1499
        %1871 = vmatprep.subr.bf16.mxu0 0
        %1872 = vmatpush1.bf16.msra.mxu0 0
        %1873 = vmatprep.subr.bf16.mxu0 0
        %1874 = vmatpush1.bf16.msra.mxu0 0
        %1875 = vmatprep.subr.bf16.mxu0 0
        %1876 = vmatpush1.bf16.msra.mxu0 0
        %1877 = vmatprep.subr.bf16.mxu0 0
        %1878 = vmatpush1.bf16.msra.mxu0 0
        %1879 = vmatprep.subr.bf16.mxu0 0
        %1880 = vmatpush1.bf16.msra.mxu0 0
        %1881 = vmatprep.subr.bf16.mxu0 0
        %1882 = vmatpush1.bf16.msra.mxu0 0
        %1883 = vmatprep.mubr.bf16.mxu0 %v1726
        %1884 = vmatmul.mubr.bf16.gmra.mrb[0].mxu0 %v331
        %v1885 = vpop.f32.mrb[0].mxu0
        %v1886 = vadd.f32 %v586, %v1885
        %v1887 = vpop.f32.mrb[0].mxu0
        %v1888 = vadd.f32 %v590, %v1887
        %v1889 = vpop.f32.mrb[0].mxu0
        %v1890 = vpop.f32.mrb[0].mxu0
        %1891 = vdwg.mxu0
        %1892 = vmatprep.subr.bf16.mxu0 %v1313
        %1893 = vmatpush1.bf16.msra.mxu0 %v1312
        %1894 = vmatprep.subr.bf16.mxu0 %v1334
        %1895 = vmatpush1.bf16.msra.mxu0 %v1333
        %1896 = vmatprep.subr.bf16.mxu0 %v1355
        %1897 = vmatpush1.bf16.msra.mxu0 %v1354
        %1898 = vmatprep.subr.bf16.mxu0 %v1376
        %1899 = vmatpush1.bf16.msra.mxu0 %v1375
        %1900 = vmatprep.subr.bf16.mxu0 %v1397
        %1901 = vmatpush1.bf16.msra.mxu0 %v1396
        %1902 = vmatprep.subr.bf16.mxu0 %v1418
        %1903 = vmatpush1.bf16.msra.mxu0 %v1417
        %1904 = vmatprep.subr.bf16.mxu0 %v1439
        %1905 = vmatpush1.bf16.msra.mxu0 %v1438
        %1906 = vmatprep.subr.bf16.mxu0 %v1460
        %1907 = vmatpush1.bf16.msra.mxu0 %v1459
        %1908 = vmatprep.subr.bf16.mxu0 %v1481
        %1909 = vmatpush1.bf16.msra.mxu0 %v1480
        %1910 = vmatprep.subr.bf16.mxu0 %v1502
        %1911 = vmatpush1.bf16.msra.mxu0 %v1501
        %1912 = vmatprep.subr.bf16.mxu0 0
        %1913 = vmatpush1.bf16.msra.mxu0 0
        %1914 = vmatprep.subr.bf16.mxu0 0
        %1915 = vmatpush1.bf16.msra.mxu0 0
        %1916 = vmatprep.subr.bf16.mxu0 0
        %1917 = vmatpush1.bf16.msra.mxu0 0
        %1918 = vmatprep.subr.bf16.mxu0 0
        %1919 = vmatpush1.bf16.msra.mxu0 0
        %1920 = vmatprep.subr.bf16.mxu0 0
        %1921 = vmatpush1.bf16.msra.mxu0 0
        %1922 = vmatprep.subr.bf16.mxu0 0
        %1923 = vmatpush1.bf16.msra.mxu0 0
        %1924 = vmatprep.mubr.bf16.mxu0 %v1726
        %1925 = vmatmul.mubr.bf16.gmra.mrb[0].mxu0 %v331
        %v1926 = vpop.f32.mrb[0].mxu0
        %v1927 = vadd.f32 %v594, %v1926
        %v1928 = vpop.f32.mrb[0].mxu0
        %v1929 = vadd.f32 %v598, %v1928
        %v1930 = vpop.f32.mrb[0].mxu0
        %v1931 = vpop.f32.mrb[0].mxu0
        %1932 = vdwg.mxu0
        %1933 = vmatprep.subr.bf16.mxu0 %v1315
        %1934 = vmatpush1.bf16.msra.mxu0 %v1314
        %1935 = vmatprep.subr.bf16.mxu0 %v1336
        %1936 = vmatpush1.bf16.msra.mxu0 %v1335
        %1937 = vmatprep.subr.bf16.mxu0 %v1357
        %1938 = vmatpush1.bf16.msra.mxu0 %v1356
        %1939 = vmatprep.subr.bf16.mxu0 %v1378
        %1940 = vmatpush1.bf16.msra.mxu0 %v1377
        %1941 = vmatprep.subr.bf16.mxu0 %v1399
        %1942 = vmatpush1.bf16.msra.mxu0 %v1398
        %1943 = vmatprep.subr.bf16.mxu0 %v1420
        %1944 = vmatpush1.bf16.msra.mxu0 %v1419
        %1945 = vmatprep.subr.bf16.mxu0 %v1441
        %1946 = vmatpush1.bf16.msra.mxu0 %v1440
        %1947 = vmatprep.subr.bf16.mxu0 %v1462
        %1948 = vmatpush1.bf16.msra.mxu0 %v1461
        %1949 = vmatprep.subr.bf16.mxu0 %v1483
        %1950 = vmatpush1.bf16.msra.mxu0 %v1482
        %1951 = vmatprep.subr.bf16.mxu0 %v1504
        %1952 = vmatpush1.bf16.msra.mxu0 %v1503
        %1953 = vmatprep.subr.bf16.mxu0 0
        %1954 = vmatpush1.bf16.msra.mxu0 0
        %1955 = vmatprep.subr.bf16.mxu0 0
        %1956 = vmatpush1.bf16.msra.mxu0 0
        %1957 = vmatprep.subr.bf16.mxu0 0
        %1958 = vmatpush1.bf16.msra.mxu0 0
        %1959 = vmatprep.subr.bf16.mxu0 0
        %1960 = vmatpush1.bf16.msra.mxu0 0
        %1961 = vmatprep.subr.bf16.mxu0 0
        %1962 = vmatpush1.bf16.msra.mxu0 0
        %1963 = vmatprep.subr.bf16.mxu0 0
        %1964 = vmatpush1.bf16.msra.mxu0 0
        %1965 = vmatprep.mubr.bf16.mxu0 %v1726
        %1966 = vmatmul.mubr.bf16.gmra.mrb[0].mxu0 %v331
        %v1967 = vpop.f32.mrb[0].mxu0
        %v1968 = vadd.f32 %v602, %v1967
        %v1969 = vpop.f32.mrb[0].mxu0
        %v1970 = vadd.f32 %v606, %v1969
        %v1971 = vpop.f32.mrb[0].mxu0
        %v1972 = vpop.f32.mrb[0].mxu0
        %1973 = vdwg.mxu0
        %1974 = vmatprep.subr.bf16.mxu0 %v1317
        %1975 = vmatpush1.bf16.msra.mxu0 %v1316
        %1976 = vmatprep.subr.bf16.mxu0 %v1338
        %1977 = vmatpush1.bf16.msra.mxu0 %v1337
        %1978 = vmatprep.subr.bf16.mxu0 %v1359
        %1979 = vmatpush1.bf16.msra.mxu0 %v1358
        %1980 = vmatprep.subr.bf16.mxu0 %v1380
        %1981 = vmatpush1.bf16.msra.mxu0 %v1379
        %1982 = vmatprep.subr.bf16.mxu0 %v1401
        %1983 = vmatpush1.bf16.msra.mxu0 %v1400
        %1984 = vmatprep.subr.bf16.mxu0 %v1422
        %1985 = vmatpush1.bf16.msra.mxu0 %v1421
        %1986 = vmatprep.subr.bf16.mxu0 %v1443
        %1987 = vmatpush1.bf16.msra.mxu0 %v1442
        %1988 = vmatprep.subr.bf16.mxu0 %v1464
        %1989 = vmatpush1.bf16.msra.mxu0 %v1463
        %1990 = vmatprep.subr.bf16.mxu0 %v1485
        %1991 = vmatpush1.bf16.msra.mxu0 %v1484
        %1992 = vmatprep.subr.bf16.mxu0 %v1506
        %1993 = vmatpush1.bf16.msra.mxu0 %v1505
        %1994 = vmatprep.subr.bf16.mxu0 0
        %1995 = vmatpush1.bf16.msra.mxu0 0
        %1996 = vmatprep.subr.bf16.mxu0 0
        %1997 = vmatpush1.bf16.msra.mxu0 0
        %1998 = vmatprep.subr.bf16.mxu0 0
        %1999 = vmatpush1.bf16.msra.mxu0 0
        %2000 = vmatprep.subr.bf16.mxu0 0
        %2001 = vmatpush1.bf16.msra.mxu0 0
        %2002 = vmatprep.subr.bf16.mxu0 0
        %2003 = vmatpush1.bf16.msra.mxu0 0
        %2004 = vmatprep.subr.bf16.mxu0 0
        %2005 = vmatpush1.bf16.msra.mxu0 0
        %2006 = vmatprep.mubr.bf16.mxu0 %v1726
        %2007 = vmatmul.mubr.bf16.gmra.mrb[0].mxu0 %v331
        %v2008 = vpop.f32.mrb[0].mxu0
        %v2009 = vadd.f32 %v610, %v2008
        %v2010 = vpop.f32.mrb[0].mxu0
        %v2011 = vadd.f32 %v614, %v2010
        %v2012 = vpop.f32.mrb[0].mxu0
        %v2013 = vpop.f32.mrb[0].mxu0
        %2014 = vdwg.mxu0
        %2015 = vmatprep.subr.bf16.mxu0 %v1319
        %2016 = vmatpush1.bf16.msra.mxu0 %v1318
        %2017 = vmatprep.subr.bf16.mxu0 %v1340
        %2018 = vmatpush1.bf16.msra.mxu0 %v1339
        %2019 = vmatprep.subr.bf16.mxu0 %v1361
        %2020 = vmatpush1.bf16.msra.mxu0 %v1360
        %2021 = vmatprep.subr.bf16.mxu0 %v1382
        %2022 = vmatpush1.bf16.msra.mxu0 %v1381
        %2023 = vmatprep.subr.bf16.mxu0 %v1403
        %2024 = vmatpush1.bf16.msra.mxu0 %v1402
        %2025 = vmatprep.subr.bf16.mxu0 %v1424
        %2026 = vmatpush1.bf16.msra.mxu0 %v1423
        %2027 = vmatprep.subr.bf16.mxu0 %v1445
        %2028 = vmatpush1.bf16.msra.mxu0 %v1444
        %2029 = vmatprep.subr.bf16.mxu0 %v1466
        %2030 = vmatpush1.bf16.msra.mxu0 %v1465
        %2031 = vmatprep.subr.bf16.mxu0 %v1487
        %2032 = vmatpush1.bf16.msra.mxu0 %v1486
        %2033 = vmatprep.subr.bf16.mxu0 %v1508
        %2034 = vmatpush1.bf16.msra.mxu0 %v1507
        %2035 = vmatprep.subr.bf16.mxu0 0
        %2036 = vmatpush1.bf16.msra.mxu0 0
        %2037 = vmatprep.subr.bf16.mxu0 0
        %2038 = vmatpush1.bf16.msra.mxu0 0
        %2039 = vmatprep.subr.bf16.mxu0 0
        %2040 = vmatpush1.bf16.msra.mxu0 0
        %2041 = vmatprep.subr.bf16.mxu0 0
        %2042 = vmatpush1.bf16.msra.mxu0 0
        %2043 = vmatprep.subr.bf16.mxu0 0
        %2044 = vmatpush1.bf16.msra.mxu0 0
        %2045 = vmatprep.subr.bf16.mxu0 0
        %2046 = vmatpush1.bf16.msra.mxu0 0
        %2047 = vmatprep.mubr.bf16.mxu0 %v1726
        %2048 = vmatmul.mubr.bf16.gmra.mrb[0].mxu0 %v331
        %v2049 = vpop.f32.mrb[0].mxu0
        %v2050 = vadd.f32 %v618, %v2049
        %v2051 = vpop.f32.mrb[0].mxu0
        %v2052 = vadd.f32 %v622, %v2051
        %v2053 = vpop.f32.mrb[0].mxu0
        %v2054 = vpop.f32.mrb[0].mxu0
        %2055 = vdwg.mxu0
        %2056 = vmatprep.subr.bf16.mxu0 %v1321
        %2057 = vmatpush1.bf16.msra.mxu0 %v1320
        %2058 = vmatprep.subr.bf16.mxu0 %v1342
        %2059 = vmatpush1.bf16.msra.mxu0 %v1341
        %2060 = vmatprep.subr.bf16.mxu0 %v1363
        %2061 = vmatpush1.bf16.msra.mxu0 %v1362
        %2062 = vmatprep.subr.bf16.mxu0 %v1384
        %2063 = vmatpush1.bf16.msra.mxu0 %v1383
        %2064 = vmatprep.subr.bf16.mxu0 %v1405
        %2065 = vmatpush1.bf16.msra.mxu0 %v1404
        %2066 = vmatprep.subr.bf16.mxu0 %v1426
        %2067 = vmatpush1.bf16.msra.mxu0 %v1425
        %2068 = vmatprep.subr.bf16.mxu0 %v1447
        %2069 = vmatpush1.bf16.msra.mxu0 %v1446
        %2070 = vmatprep.subr.bf16.mxu0 %v1468
        %2071 = vmatpush1.bf16.msra.mxu0 %v1467
        %2072 = vmatprep.subr.bf16.mxu0 %v1489
        %2073 = vmatpush1.bf16.msra.mxu0 %v1488
        %2074 = vmatprep.subr.bf16.mxu0 %v1510
        %2075 = vmatpush1.bf16.msra.mxu0 %v1509
        %2076 = vmatprep.subr.bf16.mxu0 0
        %2077 = vmatpush1.bf16.msra.mxu0 0
        %2078 = vmatprep.subr.bf16.mxu0 0
        %2079 = vmatpush1.bf16.msra.mxu0 0
        %2080 = vmatprep.subr.bf16.mxu0 0
        %2081 = vmatpush1.bf16.msra.mxu0 0
        %2082 = vmatprep.subr.bf16.mxu0 0
        %2083 = vmatpush1.bf16.msra.mxu0 0
        %2084 = vmatprep.subr.bf16.mxu0 0
        %2085 = vmatpush1.bf16.msra.mxu0 0
        %2086 = vmatprep.subr.bf16.mxu0 0
        %2087 = vmatpush1.bf16.msra.mxu0 0
        %2088 = vmatprep.mubr.bf16.mxu0 %v1726
        %2089 = vmatmul.mubr.bf16.gmra.mrb[0].mxu0 %v331
        %v2090 = vpop.f32.mrb[0].mxu0
        %v2091 = vadd.f32 %v626, %v2090
        %v2092 = vpop.f32.mrb[0].mxu0
        %v2093 = vadd.f32 %v630, %v2092
        %v2094 = vpop.f32.mrb[0].mxu0
        %v2095 = vpop.f32.mrb[0].mxu0
        %2096 = vdwg.mxu0
        %2097 = vmatprep.subr.bf16.mxu0 %v1323
        %2098 = vmatpush1.bf16.msra.mxu0 %v1322
        %2099 = vmatprep.subr.bf16.mxu0 %v1344
        %2100 = vmatpush1.bf16.msra.mxu0 %v1343
        %2101 = vmatprep.subr.bf16.mxu0 %v1365
        %2102 = vmatpush1.bf16.msra.mxu0 %v1364
        %2103 = vmatprep.subr.bf16.mxu0 %v1386
        %2104 = vmatpush1.bf16.msra.mxu0 %v1385
        %2105 = vmatprep.subr.bf16.mxu0 %v1407
        %2106 = vmatpush1.bf16.msra.mxu0 %v1406
        %2107 = vmatprep.subr.bf16.mxu0 %v1428
        %2108 = vmatpush1.bf16.msra.mxu0 %v1427
        %2109 = vmatprep.subr.bf16.mxu0 %v1449
        %2110 = vmatpush1.bf16.msra.mxu0 %v1448
        %2111 = vmatprep.subr.bf16.mxu0 %v1470
        %2112 = vmatpush1.bf16.msra.mxu0 %v1469
        %2113 = vmatprep.subr.bf16.mxu0 %v1491
        %2114 = vmatpush1.bf16.msra.mxu0 %v1490
        %2115 = vmatprep.subr.bf16.mxu0 %v1512
        %2116 = vmatpush1.bf16.msra.mxu0 %v1511
        %2117 = vmatprep.subr.bf16.mxu0 0
        %2118 = vmatpush1.bf16.msra.mxu0 0
        %2119 = vmatprep.subr.bf16.mxu0 0
        %2120 = vmatpush1.bf16.msra.mxu0 0
        %2121 = vmatprep.subr.bf16.mxu0 0
        %2122 = vmatpush1.bf16.msra.mxu0 0
        %2123 = vmatprep.subr.bf16.mxu0 0
        %2124 = vmatpush1.bf16.msra.mxu0 0
        %2125 = vmatprep.subr.bf16.mxu0 0
        %2126 = vmatpush1.bf16.msra.mxu0 0
        %2127 = vmatprep.subr.bf16.mxu0 0
        %2128 = vmatpush1.bf16.msra.mxu0 0
        %2129 = vmatprep.mubr.bf16.mxu0 %v1726
        %2130 = vmatmul.mubr.bf16.gmra.mrb[0].mxu0 %v331
        %v2131 = vpop.f32.mrb[0].mxu0
        %v2132 = vadd.f32 %v634, %v2131
        %v2133 = vpop.f32.mrb[0].mxu0
        %v2134 = vadd.f32 %v638, %v2133
        %v2135 = vpop.f32.mrb[0].mxu0
        %v2136 = vpop.f32.mrb[0].mxu0
        %2137 = vdwg.mxu0
        %2138 = vmatprep.subr.bf16.mxu0 0
        %2139 = vmatpush1.bf16.msra.mxu0 %v1324
        %2140 = vmatprep.subr.bf16.mxu0 0
        %2141 = vmatpush1.bf16.msra.mxu0 %v1345
        %2142 = vmatprep.subr.bf16.mxu0 0
        %2143 = vmatpush1.bf16.msra.mxu0 %v1366
        %2144 = vmatprep.subr.bf16.mxu0 0
        %2145 = vmatpush1.bf16.msra.mxu0 %v1387
        %2146 = vmatprep.subr.bf16.mxu0 0
        %2147 = vmatpush1.bf16.msra.mxu0 %v1408
        %2148 = vmatprep.subr.bf16.mxu0 0
        %2149 = vmatpush1.bf16.msra.mxu0 %v1429
        %2150 = vmatprep.subr.bf16.mxu0 0
        %2151 = vmatpush1.bf16.msra.mxu0 %v1450
        %2152 = vmatprep.subr.bf16.mxu0 0
        %2153 = vmatpush1.bf16.msra.mxu0 %v1471
        %2154 = vmatprep.subr.bf16.mxu0 0
        %2155 = vmatpush1.bf16.msra.mxu0 %v1492
        %2156 = vmatprep.subr.bf16.mxu0 0
        %2157 = vmatpush1.bf16.msra.mxu0 %v1513
        %2158 = vmatprep.subr.bf16.mxu0 0
        %2159 = vmatpush1.bf16.msra.mxu0 0
        %2160 = vmatprep.subr.bf16.mxu0 0
        %2161 = vmatpush1.bf16.msra.mxu0 0
        %2162 = vmatprep.subr.bf16.mxu0 0
        %2163 = vmatpush1.bf16.msra.mxu0 0
        %2164 = vmatprep.subr.bf16.mxu0 0
        %2165 = vmatpush1.bf16.msra.mxu0 0
        %2166 = vmatprep.subr.bf16.mxu0 0
        %2167 = vmatpush1.bf16.msra.mxu0 0
        %2168 = vmatprep.subr.bf16.mxu0 0
        %2169 = vmatpush1.bf16.msra.mxu0 0
        %2170 = vmatprep.mubr.bf16.mxu0 %v1726
        %2171 = vmatmul.mubr.bf16.gmra.mrb[0].mxu0 %v331
        %v2172 = vpop.f32.mrb[0].mxu0
        %v2173 = vadd.f32 %v642, %v2172
        %v2174 = vpop.f32.mrb[0].mxu0
        %v2175 = vpop.f32.mrb[0].mxu0
        %v2176 = vpop.f32.mrb[0].mxu0
        %2177 = vdwg.mxu0
        %v2178 = vld [vmem:[%s4] sm:$0xff]
        %v2179 = vld [vmem:[%s4 + $0x8] sm:$0xff]
        %v2180 = vld [vmem:[%s4 + $0x10] sm:$0xff]
        %v2181 = vld [vmem:[%s4 + $0x18] sm:$0xf]
        %v2182 = vld [vmem:[%s4 + $0x1c] sm:$0xff]
        %v2183 = vld [vmem:[%s4 + $0x24] sm:$0xff]
        %v2184 = vld [vmem:[%s4 + $0x2c] sm:$0xff]
        %v2185 = vld [vmem:[%s4 + $0x34] sm:$0xf]
        %v2186 = vld [vmem:[%s326] sm:$0xf]
        %v2187 = vld [vmem:[%s326 + $0x4] sm:$0xf]
        %v2188 = vld [vmem:[%s326 + $0x8] sm:$0xf]
        %v2189 = vld [vmem:[%s326 + $0xc] sm:$0xf]
        %v2194 = vunpack.c.l.b16 %v2186
        %v2195 = vunpack.c.l.b16 %v2187
        %v2196 = vunpack.c.l.b16 %v2188
        %v2197 = vunpack.c.l.b16 %v2189
        %v2198 = vpack.c.b16 %v2195, %v2194
        %v2199 = vpack.c.b16 %v2197, %v2196
        %v2208 = vunpack.c.l.b16 %v2178
        %v2209 = vunpack.c.h.b16 %v2178
        %v2210 = vunpack.c.l.b16 %v2179
        %v2211 = vunpack.c.h.b16 %v2179
        %v2212 = vunpack.c.l.b16 %v2180
        %v2213 = vunpack.c.h.b16 %v2180
        %v2214 = vunpack.c.l.b16 %v2181
        %v2215 = vunpack.c.l.b16 %v2182
        %v2216 = vunpack.c.h.b16 %v2182
        %v2217 = vunpack.c.l.b16 %v2183
        %v2218 = vunpack.c.h.b16 %v2183
        %v2219 = vunpack.c.l.b16 %v2184
        %v2220 = vunpack.c.h.b16 %v2184
        %v2221 = vunpack.c.l.b16 %v2185
        %v2222 = vpack.c.b16 %v2215, %v2208
        %v2223 = vpack.c.b16 %v2216, %v2209
        %v2224 = vpack.c.b16 %v2217, %v2210
        %v2225 = vpack.c.b16 %v2218, %v2211
        %v2226 = vpack.c.b16 %v2219, %v2212
        %v2227 = vpack.c.b16 %v2220, %v2213
        %v2228 = vpack.c.b16 %v2221, %v2214
        %vm2236 = vcmask 130048
        %v2238 = vsel %vm2236, %v2198, 0
        %v2241 = vsel %vm2236, %v2199, 0
        %2243 = vmatprep.subr.bf16.mxu0 %v2223
        %2244 = vmatpush1.bf16.msra.mxu0 %v2222
        %2245 = vmatprep.subr.bf16.mxu0 0
        %2246 = vmatpush1.bf16.msra.mxu0 0
        %2247 = vmatprep.subr.bf16.mxu0 0
        %2248 = vmatpush1.bf16.msra.mxu0 0
        %2249 = vmatprep.subr.bf16.mxu0 0
        %2250 = vmatpush1.bf16.msra.mxu0 0
        %2251 = vmatprep.subr.bf16.mxu0 0
        %2252 = vmatpush1.bf16.msra.mxu0 0
        %2253 = vmatprep.subr.bf16.mxu0 0
        %2254 = vmatpush1.bf16.msra.mxu0 0
        %2255 = vmatprep.subr.bf16.mxu0 0
        %2256 = vmatpush1.bf16.msra.mxu0 0
        %2257 = vmatprep.subr.bf16.mxu0 0
        %2258 = vmatpush1.bf16.msra.mxu0 0
        %2259 = vmatprep.subr.bf16.mxu0 0
        %2260 = vmatpush1.bf16.msra.mxu0 0
        %2261 = vmatprep.subr.bf16.mxu0 0
        %2262 = vmatpush1.bf16.msra.mxu0 0
        %2263 = vmatprep.subr.bf16.mxu0 0
        %2264 = vmatpush1.bf16.msra.mxu0 0
        %2265 = vmatprep.subr.bf16.mxu0 0
        %2266 = vmatpush1.bf16.msra.mxu0 0
        %2267 = vmatprep.subr.bf16.mxu0 0
        %2268 = vmatpush1.bf16.msra.mxu0 0
        %2269 = vmatprep.subr.bf16.mxu0 0
        %2270 = vmatpush1.bf16.msra.mxu0 0
        %2271 = vmatprep.subr.bf16.mxu0 0
        %2272 = vmatpush1.bf16.msra.mxu0 0
        %2273 = vmatprep.subr.bf16.mxu0 0
        %2274 = vmatpush1.bf16.msra.mxu0 0
        %2275 = vmatprep.mubr.bf16.mxu0 0
        %2276 = vmatmul.mubr.bf16.gmra.mrb[0].mxu0 %v2238
        %v2277 = vpop.f32.mrb[0].mxu0
        %v2278 = vadd.f32 0.0, %v2277
        %v2279 = vpop.f32.mrb[0].mxu0
        %v2280 = vadd.f32 0.0, %v2279
        %v2281 = vpop.f32.mrb[0].mxu0
        %v2282 = vadd.f32 0.0, %v2281
        %v2283 = vpop.f32.mrb[0].mxu0
        %v2284 = vadd.f32 0.0, %v2283
        %2285 = vmatprep.mubr.bf16.mxu0 0
        %2286 = vmatmul.mubr.bf16.gmra.mrb[0].mxu0 %v2241
        %v2287 = vpop.f32.mrb[0].mxu0
        %v2288 = vadd.f32 0.0, %v2287
        %v2289 = vpop.f32.mrb[0].mxu0
        %v2290 = vadd.f32 0.0, %v2289
        %v2291 = vpop.f32.mrb[0].mxu0
        %v2292 = vadd.f32 0.0, %v2291
        %v2293 = vpop.f32.mrb[0].mxu0
        %v2294 = vadd.f32 0.0, %v2293
        %2295 = vdwg.mxu0
        %2296 = vmatprep.subr.bf16.mxu0 %v2225
        %2297 = vmatpush1.bf16.msra.mxu0 %v2224
        %2298 = vmatprep.subr.bf16.mxu0 0
        %2299 = vmatpush1.bf16.msra.mxu0 0
        %2300 = vmatprep.subr.bf16.mxu0 0
        %2301 = vmatpush1.bf16.msra.mxu0 0
        %2302 = vmatprep.subr.bf16.mxu0 0
        %2303 = vmatpush1.bf16.msra.mxu0 0
        %2304 = vmatprep.subr.bf16.mxu0 0
        %2305 = vmatpush1.bf16.msra.mxu0 0
        %2306 = vmatprep.subr.bf16.mxu0 0
        %2307 = vmatpush1.bf16.msra.mxu0 0
        %2308 = vmatprep.subr.bf16.mxu0 0
        %2309 = vmatpush1.bf16.msra.mxu0 0
        %2310 = vmatprep.subr.bf16.mxu0 0
        %2311 = vmatpush1.bf16.msra.mxu0 0
        %2312 = vmatprep.subr.bf16.mxu0 0
        %2313 = vmatpush1.bf16.msra.mxu0 0
        %2314 = vmatprep.subr.bf16.mxu0 0
        %2315 = vmatpush1.bf16.msra.mxu0 0
        %2316 = vmatprep.subr.bf16.mxu0 0
        %2317 = vmatpush1.bf16.msra.mxu0 0
        %2318 = vmatprep.subr.bf16.mxu0 0
        %2319 = vmatpush1.bf16.msra.mxu0 0
        %2320 = vmatprep.subr.bf16.mxu0 0
        %2321 = vmatpush1.bf16.msra.mxu0 0
        %2322 = vmatprep.subr.bf16.mxu0 0
        %2323 = vmatpush1.bf16.msra.mxu0 0
        %2324 = vmatprep.subr.bf16.mxu0 0
        %2325 = vmatpush1.bf16.msra.mxu0 0
        %2326 = vmatprep.subr.bf16.mxu0 0
        %2327 = vmatpush1.bf16.msra.mxu0 0
        %2328 = vmatprep.mubr.bf16.mxu0 0
        %2329 = vmatmul.mubr.bf16.gmra.mrb[0].mxu0 %v2238
        %v2330 = vpop.f32.mrb[0].mxu0
        %v2331 = vadd.f32 0.0, %v2330
        %v2332 = vpop.f32.mrb[0].mxu0
        %v2333 = vadd.f32 0.0, %v2332
        %v2334 = vpop.f32.mrb[0].mxu0
        %v2335 = vadd.f32 0.0, %v2334
        %v2336 = vpop.f32.mrb[0].mxu0
        %v2337 = vadd.f32 0.0, %v2336
        %2338 = vmatprep.mubr.bf16.mxu0 0
        %2339 = vmatmul.mubr.bf16.gmra.mrb[0].mxu0 %v2241
        %v2340 = vpop.f32.mrb[0].mxu0
        %v2341 = vadd.f32 0.0, %v2340
        %v2342 = vpop.f32.mrb[0].mxu0
        %v2343 = vadd.f32 0.0, %v2342
        %v2344 = vpop.f32.mrb[0].mxu0
        %v2345 = vadd.f32 0.0, %v2344
        %v2346 = vpop.f32.mrb[0].mxu0
        %v2347 = vadd.f32 0.0, %v2346
        %2348 = vdwg.mxu0
        %2349 = vmatprep.subr.bf16.mxu0 %v2227
        %2350 = vmatpush1.bf16.msra.mxu0 %v2226
        %2351 = vmatprep.subr.bf16.mxu0 0
        %2352 = vmatpush1.bf16.msra.mxu0 0
        %2353 = vmatprep.subr.bf16.mxu0 0
        %2354 = vmatpush1.bf16.msra.mxu0 0
        %2355 = vmatprep.subr.bf16.mxu0 0
        %2356 = vmatpush1.bf16.msra.mxu0 0
        %2357 = vmatprep.subr.bf16.mxu0 0
        %2358 = vmatpush1.bf16.msra.mxu0 0
        %2359 = vmatprep.subr.bf16.mxu0 0
        %2360 = vmatpush1.bf16.msra.mxu0 0
        %2361 = vmatprep.subr.bf16.mxu0 0
        %2362 = vmatpush1.bf16.msra.mxu0 0
        %2363 = vmatprep.subr.bf16.mxu0 0
        %2364 = vmatpush1.bf16.msra.mxu0 0
        %2365 = vmatprep.subr.bf16.mxu0 0
        %2366 = vmatpush1.bf16.msra.mxu0 0
        %2367 = vmatprep.subr.bf16.mxu0 0
        %2368 = vmatpush1.bf16.msra.mxu0 0
        %2369 = vmatprep.subr.bf16.mxu0 0
        %2370 = vmatpush1.bf16.msra.mxu0 0
        %2371 = vmatprep.subr.bf16.mxu0 0
        %2372 = vmatpush1.bf16.msra.mxu0 0
        %2373 = vmatprep.subr.bf16.mxu0 0
        %2374 = vmatpush1.bf16.msra.mxu0 0
        %2375 = vmatprep.subr.bf16.mxu0 0
        %2376 = vmatpush1.bf16.msra.mxu0 0
        %2377 = vmatprep.subr.bf16.mxu0 0
        %2378 = vmatpush1.bf16.msra.mxu0 0
        %2379 = vmatprep.subr.bf16.mxu0 0
        %2380 = vmatpush1.bf16.msra.mxu0 0
        %2381 = vmatprep.mubr.bf16.mxu0 0
        %2382 = vmatmul.mubr.bf16.gmra.mrb[0].mxu0 %v2238
        %v2383 = vpop.f32.mrb[0].mxu0
        %v2384 = vadd.f32 0.0, %v2383
        %v2385 = vpop.f32.mrb[0].mxu0
        %v2386 = vadd.f32 0.0, %v2385
        %v2387 = vpop.f32.mrb[0].mxu0
        %v2388 = vadd.f32 0.0, %v2387
        %v2389 = vpop.f32.mrb[0].mxu0
        %v2390 = vadd.f32 0.0, %v2389
        %2391 = vmatprep.mubr.bf16.mxu0 0
        %2392 = vmatmul.mubr.bf16.gmra.mrb[0].mxu0 %v2241
        %v2393 = vpop.f32.mrb[0].mxu0
        %v2394 = vadd.f32 0.0, %v2393
        %v2395 = vpop.f32.mrb[0].mxu0
        %v2396 = vadd.f32 0.0, %v2395
        %v2397 = vpop.f32.mrb[0].mxu0
        %v2398 = vadd.f32 0.0, %v2397
        %v2399 = vpop.f32.mrb[0].mxu0
        %v2400 = vadd.f32 0.0, %v2399
        %2401 = vdwg.mxu0
        %2402 = vmatprep.subr.bf16.mxu0 0
        %2403 = vmatpush1.bf16.msra.mxu0 %v2228
        %2404 = vmatprep.subr.bf16.mxu0 0
        %2405 = vmatpush1.bf16.msra.mxu0 0
        %2406 = vmatprep.subr.bf16.mxu0 0
        %2407 = vmatpush1.bf16.msra.mxu0 0
        %2408 = vmatprep.subr.bf16.mxu0 0
        %2409 = vmatpush1.bf16.msra.mxu0 0
        %2410 = vmatprep.subr.bf16.mxu0 0
        %2411 = vmatpush1.bf16.msra.mxu0 0
        %2412 = vmatprep.subr.bf16.mxu0 0
        %2413 = vmatpush1.bf16.msra.mxu0 0
        %2414 = vmatprep.subr.bf16.mxu0 0
        %2415 = vmatpush1.bf16.msra.mxu0 0
        %2416 = vmatprep.subr.bf16.mxu0 0
        %2417 = vmatpush1.bf16.msra.mxu0 0
        %2418 = vmatprep.subr.bf16.mxu0 0
        %2419 = vmatpush1.bf16.msra.mxu0 0
        %2420 = vmatprep.subr.bf16.mxu0 0
        %2421 = vmatpush1.bf16.msra.mxu0 0
        %2422 = vmatprep.subr.bf16.mxu0 0
        %2423 = vmatpush1.bf16.msra.mxu0 0
        %2424 = vmatprep.subr.bf16.mxu0 0
        %2425 = vmatpush1.bf16.msra.mxu0 0
        %2426 = vmatprep.subr.bf16.mxu0 0
        %2427 = vmatpush1.bf16.msra.mxu0 0
        %2428 = vmatprep.subr.bf16.mxu0 0
        %2429 = vmatpush1.bf16.msra.mxu0 0
        %2430 = vmatprep.subr.bf16.mxu0 0
        %2431 = vmatpush1.bf16.msra.mxu0 0
        %2432 = vmatprep.subr.bf16.mxu0 0
        %2433 = vmatpush1.bf16.msra.mxu0 0
        %2434 = vmatprep.mubr.bf16.mxu0 0
        %2435 = vmatmul.mubr.bf16.gmra.mrb[0].mxu0 %v2238
        %v2436 = vpop.f32.mrb[0].mxu0
        %v2437 = vadd.f32 0.0, %v2436
        %v2438 = vpop.f32.mrb[0].mxu0
        %v2439 = vpop.f32.mrb[0].mxu0
        %v2440 = vadd.f32 0.0, %v2439
        %v2441 = vpop.f32.mrb[0].mxu0
        %2442 = vmatprep.mubr.bf16.mxu0 0
        %2443 = vmatmul.mubr.bf16.gmra.mrb[0].mxu0 %v2241
        %v2444 = vpop.f32.mrb[0].mxu0
        %v2445 = vadd.f32 0.0, %v2444
        %v2446 = vpop.f32.mrb[0].mxu0
        %v2447 = vpop.f32.mrb[0].mxu0
        %v2448 = vadd.f32 0.0, %v2447
        %v2449 = vpop.f32.mrb[0].mxu0
        %2450 = vdwg.mxu0
        %v2451 = vmul.f32 %v2278, %v1763
        %v2452 = vmul.f32 %v2280, %v1765
        %v2453 = vmul.f32 %v2331, %v1804
        %v2454 = vmul.f32 %v2333, %v1806
        %v2455 = vmul.f32 %v2384, %v1845
        %v2456 = vmul.f32 %v2386, %v1847
        %v2457 = vmul.f32 %v2437, %v1886
        %v2458 = vmul.f32 %v2282, %v1888
        %v2459 = vmul.f32 %v2284, %v1927
        %v2460 = vmul.f32 %v2335, %v1929
        %v2461 = vmul.f32 %v2337, %v1968
        %v2462 = vmul.f32 %v2388, %v1970
        %v2463 = vmul.f32 %v2390, %v2009
        %v2464 = vmul.f32 %v2440, %v2011
        %v2465 = vadd.f32 %v2451, %v2458
        %v2466 = vadd.f32 %v2452, %v2459
        %v2467 = vadd.f32 %v2453, %v2460
        %v2468 = vadd.f32 %v2454, %v2461
        %v2469 = vadd.f32 %v2455, %v2462
        %v2470 = vadd.f32 %v2456, %v2463
        %v2471 = vadd.f32 %v2457, %v2464
        %v2472 = vmul.f32 %v2288, %v2050
        %v2473 = vmul.f32 %v2290, %v2052
        %v2474 = vmul.f32 %v2341, %v2091
        %v2475 = vmul.f32 %v2343, %v2093
        %v2476 = vmul.f32 %v2394, %v2132
        %v2477 = vmul.f32 %v2396, %v2134
        %v2478 = vmul.f32 %v2445, %v2173
        %v2479 = vadd.f32 %v2465, %v2472
        %v2480 = vadd.f32 %v2466, %v2473
        %v2481 = vadd.f32 %v2467, %v2474
        %v2482 = vadd.f32 %v2468, %v2475
        %v2483 = vadd.f32 %v2469, %v2476
        %v2484 = vadd.f32 %v2470, %v2477
        %v2485 = vadd.f32 %v2471, %v2478
        %v2486 = vadd.f32 %v2479, %v2292
        %v2487 = vadd.f32 %v2480, %v2294
        %v2488 = vadd.f32 %v2481, %v2345
        %v2489 = vadd.f32 %v2482, %v2347
        %v2490 = vadd.f32 %v2483, %v2398
        %v2491 = vadd.f32 %v2484, %v2400
        %v2492 = vadd.f32 %v2485, %v2448
        %2493 = vst [vmem:[%s308] sm:$0xff] %v2486
        %2494 = vst [vmem:[%s308 + $0x8] sm:$0xff] %v2487
        %2495 = vst [vmem:[%s308 + $0x10] sm:$0xff] %v2488
        %2496 = vst [vmem:[%s308 + $0x18] sm:$0xff] %v2489
        %2497 = vst [vmem:[%s308 + $0x20] sm:$0xff] %v2490
        %2498 = vst [vmem:[%s308 + $0x28] sm:$0xff] %v2491
        %2499 = vst [vmem:[%s308 + $0x30] sm:$0xff] %v2492
        %s2500 = scalar_lea.vmem %s326, 16
        %v2501 = vld [vmem:[%s2500] sm:$0xf]
        %v2502 = vld [vmem:[%s2500 + $0x4] sm:$0xf]
        %v2503 = vld [vmem:[%s2500 + $0x8] sm:$0xf]
        %v2504 = vld [vmem:[%s2500 + $0xc] sm:$0xf]
        %v2509 = vunpack.c.l.b16 %v2501
        %v2510 = vunpack.c.l.b16 %v2502
        %v2511 = vunpack.c.l.b16 %v2503
        %v2512 = vunpack.c.l.b16 %v2504
        %v2513 = vpack.c.b16 %v2510, %v2509
        %v2514 = vpack.c.b16 %v2512, %v2511
        %v2516 = vsel %vm2236, %v2513, 0
        %v2519 = vsel %vm2236, %v2514, 0
        %2521 = vmatprep.subr.bf16.mxu0 %v2223
        %2522 = vmatpush1.bf16.msra.mxu0 %v2222
        %2523 = vmatprep.subr.bf16.mxu0 0
        %2524 = vmatpush1.bf16.msra.mxu0 0
        %2525 = vmatprep.subr.bf16.mxu0 0
        %2526 = vmatpush1.bf16.msra.mxu0 0
        %2527 = vmatprep.subr.bf16.mxu0 0
        %2528 = vmatpush1.bf16.msra.mxu0 0
        %2529 = vmatprep.subr.bf16.mxu0 0
        %2530 = vmatpush1.bf16.msra.mxu0 0
        %2531 = vmatprep.subr.bf16.mxu0 0
        %2532 = vmatpush1.bf16.msra.mxu0 0
        %2533 = vmatprep.subr.bf16.mxu0 0
        %2534 = vmatpush1.bf16.msra.mxu0 0
        %2535 = vmatprep.subr.bf16.mxu0 0
        %2536 = vmatpush1.bf16.msra.mxu0 0
        %2537 = vmatprep.subr.bf16.mxu0 0
        %2538 = vmatpush1.bf16.msra.mxu0 0
        %2539 = vmatprep.subr.bf16.mxu0 0
        %2540 = vmatpush1.bf16.msra.mxu0 0
        %2541 = vmatprep.subr.bf16.mxu0 0
        %2542 = vmatpush1.bf16.msra.mxu0 0
        %2543 = vmatprep.subr.bf16.mxu0 0
        %2544 = vmatpush1.bf16.msra.mxu0 0
        %2545 = vmatprep.subr.bf16.mxu0 0
        %2546 = vmatpush1.bf16.msra.mxu0 0
        %2547 = vmatprep.subr.bf16.mxu0 0
        %2548 = vmatpush1.bf16.msra.mxu0 0
        %2549 = vmatprep.subr.bf16.mxu0 0
        %2550 = vmatpush1.bf16.msra.mxu0 0
        %2551 = vmatprep.subr.bf16.mxu0 0
        %2552 = vmatpush1.bf16.msra.mxu0 0
        %2553 = vmatprep.mubr.bf16.mxu0 0
        %2554 = vmatmul.mubr.bf16.gmra.mrb[0].mxu0 %v2516
        %v2555 = vpop.f32.mrb[0].mxu0
        %v2556 = vadd.f32 0.0, %v2555
        %v2557 = vpop.f32.mrb[0].mxu0
        %v2558 = vadd.f32 0.0, %v2557
        %v2559 = vpop.f32.mrb[0].mxu0
        %v2560 = vadd.f32 0.0, %v2559
        %v2561 = vpop.f32.mrb[0].mxu0
        %v2562 = vadd.f32 0.0, %v2561
        %2563 = vmatprep.mubr.bf16.mxu0 0
        %2564 = vmatmul.mubr.bf16.gmra.mrb[0].mxu0 %v2519
        %v2565 = vpop.f32.mrb[0].mxu0
        %v2566 = vadd.f32 0.0, %v2565
        %v2567 = vpop.f32.mrb[0].mxu0
        %v2568 = vadd.f32 0.0, %v2567
        %v2569 = vpop.f32.mrb[0].mxu0
        %v2570 = vadd.f32 0.0, %v2569
        %v2571 = vpop.f32.mrb[0].mxu0
        %v2572 = vadd.f32 0.0, %v2571
        %2573 = vdwg.mxu0
        %2574 = vmatprep.subr.bf16.mxu0 %v2225
        %2575 = vmatpush1.bf16.msra.mxu0 %v2224
        %2576 = vmatprep.subr.bf16.mxu0 0
        %2577 = vmatpush1.bf16.msra.mxu0 0
        %2578 = vmatprep.subr.bf16.mxu0 0
        %2579 = vmatpush1.bf16.msra.mxu0 0
        %2580 = vmatprep.subr.bf16.mxu0 0
        %2581 = vmatpush1.bf16.msra.mxu0 0
        %2582 = vmatprep.subr.bf16.mxu0 0
        %2583 = vmatpush1.bf16.msra.mxu0 0
        %2584 = vmatprep.subr.bf16.mxu0 0
        %2585 = vmatpush1.bf16.msra.mxu0 0
        %2586 = vmatprep.subr.bf16.mxu0 0
        %2587 = vmatpush1.bf16.msra.mxu0 0
        %2588 = vmatprep.subr.bf16.mxu0 0
        %2589 = vmatpush1.bf16.msra.mxu0 0
        %2590 = vmatprep.subr.bf16.mxu0 0
        %2591 = vmatpush1.bf16.msra.mxu0 0
        %2592 = vmatprep.subr.bf16.mxu0 0
        %2593 = vmatpush1.bf16.msra.mxu0 0
        %2594 = vmatprep.subr.bf16.mxu0 0
        %2595 = vmatpush1.bf16.msra.mxu0 0
        %2596 = vmatprep.subr.bf16.mxu0 0
        %2597 = vmatpush1.bf16.msra.mxu0 0
        %2598 = vmatprep.subr.bf16.mxu0 0
        %2599 = vmatpush1.bf16.msra.mxu0 0
        %2600 = vmatprep.subr.bf16.mxu0 0
        %2601 = vmatpush1.bf16.msra.mxu0 0
        %2602 = vmatprep.subr.bf16.mxu0 0
        %2603 = vmatpush1.bf16.msra.mxu0 0
        %2604 = vmatprep.subr.bf16.mxu0 0
        %2605 = vmatpush1.bf16.msra.mxu0 0
        %2606 = vmatprep.mubr.bf16.mxu0 0
        %2607 = vmatmul.mubr.bf16.gmra.mrb[0].mxu0 %v2516
        %v2608 = vpop.f32.mrb[0].mxu0
        %v2609 = vadd.f32 0.0, %v2608
        %v2610 = vpop.f32.mrb[0].mxu0
        %v2611 = vadd.f32 0.0, %v2610
        %v2612 = vpop.f32.mrb[0].mxu0
        %v2613 = vadd.f32 0.0, %v2612
        %v2614 = vpop.f32.mrb[0].mxu0
        %v2615 = vadd.f32 0.0, %v2614
        %2616 = vmatprep.mubr.bf16.mxu0 0
        %2617 = vmatmul.mubr.bf16.gmra.mrb[0].mxu0 %v2519
        %v2618 = vpop.f32.mrb[0].mxu0
        %v2619 = vadd.f32 0.0, %v2618
        %v2620 = vpop.f32.mrb[0].mxu0
        %v2621 = vadd.f32 0.0, %v2620
        %v2622 = vpop.f32.mrb[0].mxu0
        %v2623 = vadd.f32 0.0, %v2622
        %v2624 = vpop.f32.mrb[0].mxu0
        %v2625 = vadd.f32 0.0, %v2624
        %2626 = vdwg.mxu0
        %2627 = vmatprep.subr.bf16.mxu0 %v2227
        %2628 = vmatpush1.bf16.msra.mxu0 %v2226
        %2629 = vmatprep.subr.bf16.mxu0 0
        %2630 = vmatpush1.bf16.msra.mxu0 0
        %2631 = vmatprep.subr.bf16.mxu0 0
        %2632 = vmatpush1.bf16.msra.mxu0 0
        %2633 = vmatprep.subr.bf16.mxu0 0
        %2634 = vmatpush1.bf16.msra.mxu0 0
        %2635 = vmatprep.subr.bf16.mxu0 0
        %2636 = vmatpush1.bf16.msra.mxu0 0
        %2637 = vmatprep.subr.bf16.mxu0 0
        %2638 = vmatpush1.bf16.msra.mxu0 0
        %2639 = vmatprep.subr.bf16.mxu0 0
        %2640 = vmatpush1.bf16.msra.mxu0 0
        %2641 = vmatprep.subr.bf16.mxu0 0
        %2642 = vmatpush1.bf16.msra.mxu0 0
        %2643 = vmatprep.subr.bf16.mxu0 0
        %2644 = vmatpush1.bf16.msra.mxu0 0
        %2645 = vmatprep.subr.bf16.mxu0 0
        %2646 = vmatpush1.bf16.msra.mxu0 0
        %2647 = vmatprep.subr.bf16.mxu0 0
        %2648 = vmatpush1.bf16.msra.mxu0 0
        %2649 = vmatprep.subr.bf16.mxu0 0
        %2650 = vmatpush1.bf16.msra.mxu0 0
        %2651 = vmatprep.subr.bf16.mxu0 0
        %2652 = vmatpush1.bf16.msra.mxu0 0
        %2653 = vmatprep.subr.bf16.mxu0 0
        %2654 = vmatpush1.bf16.msra.mxu0 0
        %2655 = vmatprep.subr.bf16.mxu0 0
        %2656 = vmatpush1.bf16.msra.mxu0 0
        %2657 = vmatprep.subr.bf16.mxu0 0
        %2658 = vmatpush1.bf16.msra.mxu0 0
        %2659 = vmatprep.mubr.bf16.mxu0 0
        %2660 = vmatmul.mubr.bf16.gmra.mrb[0].mxu0 %v2516
        %v2661 = vpop.f32.mrb[0].mxu0
        %v2662 = vadd.f32 0.0, %v2661
        %v2663 = vpop.f32.mrb[0].mxu0
        %v2664 = vadd.f32 0.0, %v2663
        %v2665 = vpop.f32.mrb[0].mxu0
        %v2666 = vadd.f32 0.0, %v2665
        %v2667 = vpop.f32.mrb[0].mxu0
        %v2668 = vadd.f32 0.0, %v2667
        %2669 = vmatprep.mubr.bf16.mxu0 0
        %2670 = vmatmul.mubr.bf16.gmra.mrb[0].mxu0 %v2519
        %v2671 = vpop.f32.mrb[0].mxu0
        %v2672 = vadd.f32 0.0, %v2671
        %v2673 = vpop.f32.mrb[0].mxu0
        %v2674 = vadd.f32 0.0, %v2673
        %v2675 = vpop.f32.mrb[0].mxu0
        %v2676 = vadd.f32 0.0, %v2675
        %v2677 = vpop.f32.mrb[0].mxu0
        %v2678 = vadd.f32 0.0, %v2677
        %2679 = vdwg.mxu0
        %2680 = vmatprep.subr.bf16.mxu0 0
        %2681 = vmatpush1.bf16.msra.mxu0 %v2228
        %2682 = vmatprep.subr.bf16.mxu0 0
        %2683 = vmatpush1.bf16.msra.mxu0 0
        %2684 = vmatprep.subr.bf16.mxu0 0
        %2685 = vmatpush1.bf16.msra.mxu0 0
        %2686 = vmatprep.subr.bf16.mxu0 0
        %2687 = vmatpush1.bf16.msra.mxu0 0
        %2688 = vmatprep.subr.bf16.mxu0 0
        %2689 = vmatpush1.bf16.msra.mxu0 0
        %2690 = vmatprep.subr.bf16.mxu0 0
        %2691 = vmatpush1.bf16.msra.mxu0 0
        %2692 = vmatprep.subr.bf16.mxu0 0
        %2693 = vmatpush1.bf16.msra.mxu0 0
        %2694 = vmatprep.subr.bf16.mxu0 0
        %2695 = vmatpush1.bf16.msra.mxu0 0
        %2696 = vmatprep.subr.bf16.mxu0 0
        %2697 = vmatpush1.bf16.msra.mxu0 0
        %2698 = vmatprep.subr.bf16.mxu0 0
        %2699 = vmatpush1.bf16.msra.mxu0 0
        %2700 = vmatprep.subr.bf16.mxu0 0
        %2701 = vmatpush1.bf16.msra.mxu0 0
        %2702 = vmatprep.subr.bf16.mxu0 0
        %2703 = vmatpush1.bf16.msra.mxu0 0
        %2704 = vmatprep.subr.bf16.mxu0 0
        %2705 = vmatpush1.bf16.msra.mxu0 0
        %2706 = vmatprep.subr.bf16.mxu0 0
        %2707 = vmatpush1.bf16.msra.mxu0 0
        %2708 = vmatprep.subr.bf16.mxu0 0
        %2709 = vmatpush1.bf16.msra.mxu0 0
        %2710 = vmatprep.subr.bf16.mxu0 0
        %2711 = vmatpush1.bf16.msra.mxu0 0
        %2712 = vmatprep.mubr.bf16.mxu0 0
        %2713 = vmatmul.mubr.bf16.gmra.mrb[0].mxu0 %v2516
        %v2714 = vpop.f32.mrb[0].mxu0
        %v2715 = vadd.f32 0.0, %v2714
        %v2716 = vpop.f32.mrb[0].mxu0
        %v2717 = vpop.f32.mrb[0].mxu0
        %v2718 = vadd.f32 0.0, %v2717
        %v2719 = vpop.f32.mrb[0].mxu0
        %2720 = vmatprep.mubr.bf16.mxu0 0
        %2721 = vmatmul.mubr.bf16.gmra.mrb[0].mxu0 %v2519
        %v2722 = vpop.f32.mrb[0].mxu0
        %v2723 = vadd.f32 0.0, %v2722
        %v2724 = vpop.f32.mrb[0].mxu0
        %v2725 = vpop.f32.mrb[0].mxu0
        %v2726 = vadd.f32 0.0, %v2725
        %v2727 = vpop.f32.mrb[0].mxu0
        %2728 = vdwg.mxu0
        %v2729 = vmul.f32 %v2556, %v1763
        %v2730 = vmul.f32 %v2558, %v1765
        %v2731 = vmul.f32 %v2609, %v1804
        %v2732 = vmul.f32 %v2611, %v1806
        %v2733 = vmul.f32 %v2662, %v1845
        %v2734 = vmul.f32 %v2664, %v1847
        %v2735 = vmul.f32 %v2715, %v1886
        %v2736 = vmul.f32 %v2560, %v1888
        %v2737 = vmul.f32 %v2562, %v1927
        %v2738 = vmul.f32 %v2613, %v1929
        %v2739 = vmul.f32 %v2615, %v1968
        %v2740 = vmul.f32 %v2666, %v1970
        %v2741 = vmul.f32 %v2668, %v2009
        %v2742 = vmul.f32 %v2718, %v2011
        %v2743 = vadd.f32 %v2729, %v2736
        %v2744 = vadd.f32 %v2730, %v2737
        %v2745 = vadd.f32 %v2731, %v2738
        %v2746 = vadd.f32 %v2732, %v2739
        %v2747 = vadd.f32 %v2733, %v2740
        %v2748 = vadd.f32 %v2734, %v2741
        %v2749 = vadd.f32 %v2735, %v2742
        %v2750 = vmul.f32 %v2566, %v2050
        %v2751 = vmul.f32 %v2568, %v2052
        %v2752 = vmul.f32 %v2619, %v2091
        %v2753 = vmul.f32 %v2621, %v2093
        %v2754 = vmul.f32 %v2672, %v2132
        %v2755 = vmul.f32 %v2674, %v2134
        %v2756 = vmul.f32 %v2723, %v2173
        %v2757 = vadd.f32 %v2743, %v2750
        %v2758 = vadd.f32 %v2744, %v2751
        %v2759 = vadd.f32 %v2745, %v2752
        %v2760 = vadd.f32 %v2746, %v2753
        %v2761 = vadd.f32 %v2747, %v2754
        %v2762 = vadd.f32 %v2748, %v2755
        %v2763 = vadd.f32 %v2749, %v2756
        %v2764 = vadd.f32 %v2757, %v2570
        %v2765 = vadd.f32 %v2758, %v2572
        %v2766 = vadd.f32 %v2759, %v2623
        %v2767 = vadd.f32 %v2760, %v2625
        %v2768 = vadd.f32 %v2761, %v2676
        %v2769 = vadd.f32 %v2762, %v2678
        %v2770 = vadd.f32 %v2763, %v2726
        %s2771 = scalar_lea.vmem %s308, 56 [#allocation5]
        %2772 = vst [vmem:[%s2771] sm:$0xff] %v2764
        %2773 = vst [vmem:[%s2771 + $0x8] sm:$0xff] %v2765
        %2774 = vst [vmem:[%s2771 + $0x10] sm:$0xff] %v2766
        %2775 = vst [vmem:[%s2771 + $0x18] sm:$0xff] %v2767
        %2776 = vst [vmem:[%s2771 + $0x20] sm:$0xff] %v2768
        %2777 = vst [vmem:[%s2771 + $0x28] sm:$0xff] %v2769
        %2778 = vst [vmem:[%s2771 + $0x30] sm:$0xff] %v2770
        %s2779 = scalar_lea.vmem %s326, 32
        %v2780 = vld [vmem:[%s2779] sm:$0xf]
        %v2781 = vld [vmem:[%s2779 + $0x4] sm:$0xf]
        %v2782 = vld [vmem:[%s2779 + $0x8] sm:$0xf]
        %v2783 = vld [vmem:[%s2779 + $0xc] sm:$0xf]
        %v2788 = vunpack.c.l.b16 %v2780
        %v2789 = vunpack.c.l.b16 %v2781
        %v2790 = vunpack.c.l.b16 %v2782
        %v2791 = vunpack.c.l.b16 %v2783
        %v2792 = vpack.c.b16 %v2789, %v2788
        %v2793 = vpack.c.b16 %v2791, %v2790
        %v2795 = vsel %vm2236, %v2792, 0
        %v2798 = vsel %vm2236, %v2793, 0
        %2800 = vmatprep.subr.bf16.mxu0 %v2223
        %2801 = vmatpush1.bf16.msra.mxu0 %v2222
        %2802 = vmatprep.subr.bf16.mxu0 0
        %2803 = vmatpush1.bf16.msra.mxu0 0
        %2804 = vmatprep.subr.bf16.mxu0 0
        %2805 = vmatpush1.bf16.msra.mxu0 0
        %2806 = vmatprep.subr.bf16.mxu0 0
        %2807 = vmatpush1.bf16.msra.mxu0 0
        %2808 = vmatprep.subr.bf16.mxu0 0
        %2809 = vmatpush1.bf16.msra.mxu0 0
        %2810 = vmatprep.subr.bf16.mxu0 0
        %2811 = vmatpush1.bf16.msra.mxu0 0
        %2812 = vmatprep.subr.bf16.mxu0 0
        %2813 = vmatpush1.bf16.msra.mxu0 0
        %2814 = vmatprep.subr.bf16.mxu0 0
        %2815 = vmatpush1.bf16.msra.mxu0 0
        %2816 = vmatprep.subr.bf16.mxu0 0
        %2817 = vmatpush1.bf16.msra.mxu0 0
        %2818 = vmatprep.subr.bf16.mxu0 0
        %2819 = vmatpush1.bf16.msra.mxu0 0
        %2820 = vmatprep.subr.bf16.mxu0 0
        %2821 = vmatpush1.bf16.msra.mxu0 0
        %2822 = vmatprep.subr.bf16.mxu0 0
        %2823 = vmatpush1.bf16.msra.mxu0 0
        %2824 = vmatprep.subr.bf16.mxu0 0
        %2825 = vmatpush1.bf16.msra.mxu0 0
        %2826 = vmatprep.subr.bf16.mxu0 0
        %2827 = vmatpush1.bf16.msra.mxu0 0
        %2828 = vmatprep.subr.bf16.mxu0 0
        %2829 = vmatpush1.bf16.msra.mxu0 0
        %2830 = vmatprep.subr.bf16.mxu0 0
        %2831 = vmatpush1.bf16.msra.mxu0 0
        %2832 = vmatprep.mubr.bf16.mxu0 0
        %2833 = vmatmul.mubr.bf16.gmra.mrb[0].mxu0 %v2795
        %v2834 = vpop.f32.mrb[0].mxu0
        %v2835 = vadd.f32 0.0, %v2834
        %v2836 = vpop.f32.mrb[0].mxu0
        %v2837 = vadd.f32 0.0, %v2836
        %v2838 = vpop.f32.mrb[0].mxu0
        %v2839 = vadd.f32 0.0, %v2838
        %v2840 = vpop.f32.mrb[0].mxu0
        %v2841 = vadd.f32 0.0, %v2840
        %2842 = vmatprep.mubr.bf16.mxu0 0
        %2843 = vmatmul.mubr.bf16.gmra.mrb[0].mxu0 %v2798
        %v2844 = vpop.f32.mrb[0].mxu0
        %v2845 = vadd.f32 0.0, %v2844
        %v2846 = vpop.f32.mrb[0].mxu0
        %v2847 = vadd.f32 0.0, %v2846
        %v2848 = vpop.f32.mrb[0].mxu0
        %v2849 = vadd.f32 0.0, %v2848
        %v2850 = vpop.f32.mrb[0].mxu0
        %v2851 = vadd.f32 0.0, %v2850
        %2852 = vdwg.mxu0
        %2853 = vmatprep.subr.bf16.mxu0 %v2225
        %2854 = vmatpush1.bf16.msra.mxu0 %v2224
        %2855 = vmatprep.subr.bf16.mxu0 0
        %2856 = vmatpush1.bf16.msra.mxu0 0
        %2857 = vmatprep.subr.bf16.mxu0 0
        %2858 = vmatpush1.bf16.msra.mxu0 0
        %2859 = vmatprep.subr.bf16.mxu0 0
        %2860 = vmatpush1.bf16.msra.mxu0 0
        %2861 = vmatprep.subr.bf16.mxu0 0
        %2862 = vmatpush1.bf16.msra.mxu0 0
        %2863 = vmatprep.subr.bf16.mxu0 0
        %2864 = vmatpush1.bf16.msra.mxu0 0
        %2865 = vmatprep.subr.bf16.mxu0 0
        %2866 = vmatpush1.bf16.msra.mxu0 0
        %2867 = vmatprep.subr.bf16.mxu0 0
        %2868 = vmatpush1.bf16.msra.mxu0 0
        %2869 = vmatprep.subr.bf16.mxu0 0
        %2870 = vmatpush1.bf16.msra.mxu0 0
        %2871 = vmatprep.subr.bf16.mxu0 0
        %2872 = vmatpush1.bf16.msra.mxu0 0
        %2873 = vmatprep.subr.bf16.mxu0 0
        %2874 = vmatpush1.bf16.msra.mxu0 0
        %2875 = vmatprep.subr.bf16.mxu0 0
        %2876 = vmatpush1.bf16.msra.mxu0 0
        %2877 = vmatprep.subr.bf16.mxu0 0
        %2878 = vmatpush1.bf16.msra.mxu0 0
        %2879 = vmatprep.subr.bf16.mxu0 0
        %2880 = vmatpush1.bf16.msra.mxu0 0
        %2881 = vmatprep.subr.bf16.mxu0 0
        %2882 = vmatpush1.bf16.msra.mxu0 0
        %2883 = vmatprep.subr.bf16.mxu0 0
        %2884 = vmatpush1.bf16.msra.mxu0 0
        %2885 = vmatprep.mubr.bf16.mxu0 0
        %2886 = vmatmul.mubr.bf16.gmra.mrb[0].mxu0 %v2795
        %v2887 = vpop.f32.mrb[0].mxu0
        %v2888 = vadd.f32 0.0, %v2887
        %v2889 = vpop.f32.mrb[0].mxu0
        %v2890 = vadd.f32 0.0, %v2889
        %v2891 = vpop.f32.mrb[0].mxu0
        %v2892 = vadd.f32 0.0, %v2891
        %v2893 = vpop.f32.mrb[0].mxu0
        %v2894 = vadd.f32 0.0, %v2893
        %2895 = vmatprep.mubr.bf16.mxu0 0
        %2896 = vmatmul.mubr.bf16.gmra.mrb[0].mxu0 %v2798
        %v2897 = vpop.f32.mrb[0].mxu0
        %v2898 = vadd.f32 0.0, %v2897
        %v2899 = vpop.f32.mrb[0].mxu0
        %v2900 = vadd.f32 0.0, %v2899
        %v2901 = vpop.f32.mrb[0].mxu0
        %v2902 = vadd.f32 0.0, %v2901
        %v2903 = vpop.f32.mrb[0].mxu0
        %v2904 = vadd.f32 0.0, %v2903
        %2905 = vdwg.mxu0
        %2906 = vmatprep.subr.bf16.mxu0 %v2227
        %2907 = vmatpush1.bf16.msra.mxu0 %v2226
        %2908 = vmatprep.subr.bf16.mxu0 0
        %2909 = vmatpush1.bf16.msra.mxu0 0
        %2910 = vmatprep.subr.bf16.mxu0 0
        %2911 = vmatpush1.bf16.msra.mxu0 0
        %2912 = vmatprep.subr.bf16.mxu0 0
        %2913 = vmatpush1.bf16.msra.mxu0 0
        %2914 = vmatprep.subr.bf16.mxu0 0
        %2915 = vmatpush1.bf16.msra.mxu0 0
        %2916 = vmatprep.subr.bf16.mxu0 0
        %2917 = vmatpush1.bf16.msra.mxu0 0
        %2918 = vmatprep.subr.bf16.mxu0 0
        %2919 = vmatpush1.bf16.msra.mxu0 0
        %2920 = vmatprep.subr.bf16.mxu0 0
        %2921 = vmatpush1.bf16.msra.mxu0 0
        %2922 = vmatprep.subr.bf16.mxu0 0
        %2923 = vmatpush1.bf16.msra.mxu0 0
        %2924 = vmatprep.subr.bf16.mxu0 0
        %2925 = vmatpush1.bf16.msra.mxu0 0
        %2926 = vmatprep.subr.bf16.mxu0 0
        %2927 = vmatpush1.bf16.msra.mxu0 0
        %2928 = vmatprep.subr.bf16.mxu0 0
        %2929 = vmatpush1.bf16.msra.mxu0 0
        %2930 = vmatprep.subr.bf16.mxu0 0
        %2931 = vmatpush1.bf16.msra.mxu0 0
        %2932 = vmatprep.subr.bf16.mxu0 0
        %2933 = vmatpush1.bf16.msra.mxu0 0
        %2934 = vmatprep.subr.bf16.mxu0 0
        %2935 = vmatpush1.bf16.msra.mxu0 0
        %2936 = vmatprep.subr.bf16.mxu0 0
        %2937 = vmatpush1.bf16.msra.mxu0 0
        %2938 = vmatprep.mubr.bf16.mxu0 0
        %2939 = vmatmul.mubr.bf16.gmra.mrb[0].mxu0 %v2795
        %v2940 = vpop.f32.mrb[0].mxu0
        %v2941 = vadd.f32 0.0, %v2940
        %v2942 = vpop.f32.mrb[0].mxu0
        %v2943 = vadd.f32 0.0, %v2942
        %v2944 = vpop.f32.mrb[0].mxu0
        %v2945 = vadd.f32 0.0, %v2944
        %v2946 = vpop.f32.mrb[0].mxu0
        %v2947 = vadd.f32 0.0, %v2946
        %2948 = vmatprep.mubr.bf16.mxu0 0
        %2949 = vmatmul.mubr.bf16.gmra.mrb[0].mxu0 %v2798
        %v2950 = vpop.f32.mrb[0].mxu0
        %v2951 = vadd.f32 0.0, %v2950
        %v2952 = vpop.f32.mrb[0].mxu0
        %v2953 = vadd.f32 0.0, %v2952
        %v2954 = vpop.f32.mrb[0].mxu0
        %v2955 = vadd.f32 0.0, %v2954
        %v2956 = vpop.f32.mrb[0].mxu0
        %v2957 = vadd.f32 0.0, %v2956
        %2958 = vdwg.mxu0
        %2959 = vmatprep.subr.bf16.mxu0 0
        %2960 = vmatpush1.bf16.msra.mxu0 %v2228
        %2961 = vmatprep.subr.bf16.mxu0 0
        %2962 = vmatpush1.bf16.msra.mxu0 0
        %2963 = vmatprep.subr.bf16.mxu0 0
        %2964 = vmatpush1.bf16.msra.mxu0 0
        %2965 = vmatprep.subr.bf16.mxu0 0
        %2966 = vmatpush1.bf16.msra.mxu0 0
        %2967 = vmatprep.subr.bf16.mxu0 0
        %2968 = vmatpush1.bf16.msra.mxu0 0
        %2969 = vmatprep.subr.bf16.mxu0 0
        %2970 = vmatpush1.bf16.msra.mxu0 0
        %2971 = vmatprep.subr.bf16.mxu0 0
        %2972 = vmatpush1.bf16.msra.mxu0 0
        %2973 = vmatprep.subr.bf16.mxu0 0
        %2974 = vmatpush1.bf16.msra.mxu0 0
        %2975 = vmatprep.subr.bf16.mxu0 0
        %2976 = vmatpush1.bf16.msra.mxu0 0
        %2977 = vmatprep.subr.bf16.mxu0 0
        %2978 = vmatpush1.bf16.msra.mxu0 0
        %2979 = vmatprep.subr.bf16.mxu0 0
        %2980 = vmatpush1.bf16.msra.mxu0 0
        %2981 = vmatprep.subr.bf16.mxu0 0
        %2982 = vmatpush1.bf16.msra.mxu0 0
        %2983 = vmatprep.subr.bf16.mxu0 0
        %2984 = vmatpush1.bf16.msra.mxu0 0
        %2985 = vmatprep.subr.bf16.mxu0 0
        %2986 = vmatpush1.bf16.msra.mxu0 0
        %2987 = vmatprep.subr.bf16.mxu0 0
        %2988 = vmatpush1.bf16.msra.mxu0 0
        %2989 = vmatprep.subr.bf16.mxu0 0
        %2990 = vmatpush1.bf16.msra.mxu0 0
        %2991 = vmatprep.mubr.bf16.mxu0 0
        %2992 = vmatmul.mubr.bf16.gmra.mrb[0].mxu0 %v2795
        %v2993 = vpop.f32.mrb[0].mxu0
        %v2994 = vadd.f32 0.0, %v2993
        %v2995 = vpop.f32.mrb[0].mxu0
        %v2996 = vpop.f32.mrb[0].mxu0
        %v2997 = vadd.f32 0.0, %v2996
        %v2998 = vpop.f32.mrb[0].mxu0
        %2999 = vmatprep.mubr.bf16.mxu0 0
        %3000 = vmatmul.mubr.bf16.gmra.mrb[0].mxu0 %v2798
        %v3001 = vpop.f32.mrb[0].mxu0
        %v3002 = vadd.f32 0.0, %v3001
        %v3003 = vpop.f32.mrb[0].mxu0
        %v3004 = vpop.f32.mrb[0].mxu0
        %v3005 = vadd.f32 0.0, %v3004
        %v3006 = vpop.f32.mrb[0].mxu0
        %3007 = vdwg.mxu0
        %v3008 = vmul.f32 %v2835, %v1763
        %v3009 = vmul.f32 %v2837, %v1765
        %v3010 = vmul.f32 %v2888, %v1804
        %v3011 = vmul.f32 %v2890, %v1806
        %v3012 = vmul.f32 %v2941, %v1845
        %v3013 = vmul.f32 %v2943, %v1847
        %v3014 = vmul.f32 %v2994, %v1886
        %v3015 = vmul.f32 %v2839, %v1888
        %v3016 = vmul.f32 %v2841, %v1927
        %v3017 = vmul.f32 %v2892, %v1929
        %v3018 = vmul.f32 %v2894, %v1968
        %v3019 = vmul.f32 %v2945, %v1970
        %v3020 = vmul.f32 %v2947, %v2009
        %v3021 = vmul.f32 %v2997, %v2011
        %v3022 = vadd.f32 %v3008, %v3015
        %v3023 = vadd.f32 %v3009, %v3016
        %v3024 = vadd.f32 %v3010, %v3017
        %v3025 = vadd.f32 %v3011, %v3018
        %v3026 = vadd.f32 %v3012, %v3019
        %v3027 = vadd.f32 %v3013, %v3020
        %v3028 = vadd.f32 %v3014, %v3021
        %v3029 = vmul.f32 %v2845, %v2050
        %v3030 = vmul.f32 %v2847, %v2052
        %v3031 = vmul.f32 %v2898, %v2091
        %v3032 = vmul.f32 %v2900, %v2093
        %v3033 = vmul.f32 %v2951, %v2132
        %v3034 = vmul.f32 %v2953, %v2134
        %v3035 = vmul.f32 %v3002, %v2173
        %v3036 = vadd.f32 %v3022, %v3029
        %v3037 = vadd.f32 %v3023, %v3030
        %v3038 = vadd.f32 %v3024, %v3031
        %v3039 = vadd.f32 %v3025, %v3032
        %v3040 = vadd.f32 %v3026, %v3033
        %v3041 = vadd.f32 %v3027, %v3034
        %v3042 = vadd.f32 %v3028, %v3035
        %v3043 = vadd.f32 %v3036, %v2849
        %v3044 = vadd.f32 %v3037, %v2851
        %v3045 = vadd.f32 %v3038, %v2902
        %v3046 = vadd.f32 %v3039, %v2904
        %v3047 = vadd.f32 %v3040, %v2955
        %v3048 = vadd.f32 %v3041, %v2957
        %v3049 = vadd.f32 %v3042, %v3005
        %s3050 = scalar_lea.vmem %s308, 112 [#allocation5]
        %3051 = vst [vmem:[%s3050] sm:$0xff] %v3043
        %3052 = vst [vmem:[%s3050 + $0x8] sm:$0xff] %v3044
        %3053 = vst [vmem:[%s3050 + $0x10] sm:$0xff] %v3045
        %3054 = vst [vmem:[%s3050 + $0x18] sm:$0xff] %v3046
        %3055 = vst [vmem:[%s3050 + $0x20] sm:$0xff] %v3047
        %3056 = vst [vmem:[%s3050 + $0x28] sm:$0xff] %v3048
        %3057 = vst [vmem:[%s3050 + $0x30] sm:$0xff] %v3049
        %v3058 = vld [vmem:[%s308] sm:$0xff]
        %v3059 = vld [vmem:[%s308 + $0x8] sm:$0xff]
        %v3060 = vld [vmem:[%s308 + $0x10] sm:$0xff]
        %v3061 = vld [vmem:[%s308 + $0x18] sm:$0xff]
        %v3062 = vld [vmem:[%s308 + $0x20] sm:$0xff]
        %v3063 = vld [vmem:[%s308 + $0x28] sm:$0xff]
        %v3064 = vld [vmem:[%s308 + $0x30] sm:$0xff]
        %v3065 = vld [vmem:[%s308 + $0x38] sm:$0xff]
        %v3066 = vld [vmem:[%s308 + $0x40] sm:$0xff]
        %v3067 = vld [vmem:[%s308 + $0x48] sm:$0xff]
        %v3068 = vld [vmem:[%s308 + $0x50] sm:$0xff]
        %v3069 = vld [vmem:[%s308 + $0x58] sm:$0xff]
        %v3070 = vld [vmem:[%s308 + $0x60] sm:$0xff]
        %v3071 = vld [vmem:[%s308 + $0x68] sm:$0xff]
        %v3072 = vld [vmem:[%s308 + $0x70] sm:$0xff]
        %v3073 = vld [vmem:[%s308 + $0x78] sm:$0xff]
        %v3074 = vld [vmem:[%s308 + $0x80] sm:$0xff]
        %v3075 = vld [vmem:[%s308 + $0x88] sm:$0xff]
        %v3076 = vld [vmem:[%s308 + $0x90] sm:$0xff]
        %v3077 = vld [vmem:[%s308 + $0x98] sm:$0xff]
        %v3078 = vld [vmem:[%s308 + $0xa0] sm:$0xff]
        %v3079 = vpack.c.bf16 %v3065, %v3058
        %v3080 = vpack.c.bf16 %v3066, %v3059
        %v3081 = vpack.c.bf16 %v3067, %v3060
        %v3082 = vpack.c.bf16 %v3068, %v3061
        %v3083 = vpack.c.bf16 %v3069, %v3062
        %v3084 = vpack.c.bf16 %v3070, %v3063
        %v3085 = vpack.c.bf16 %v3071, %v3064
        %v3086 = vpack.c.bf16 %v3072, %v3072
        %v3087 = vpack.c.bf16 %v3073, %v3073
        %v3088 = vpack.c.bf16 %v3074, %v3074
        %v3089 = vpack.c.bf16 %v3075, %v3075
        %v3090 = vpack.c.bf16 %v3076, %v3076
        %v3091 = vpack.c.bf16 %v3077, %v3077
        %v3092 = vpack.c.bf16 %v3078, %v3078
        %v3093 = vld [vmem:[%s5] sm:$0xf]
        %v3094 = vld [vmem:[%s5 + $0x4] sm:$0xf]
        %v3095 = vld [vmem:[%s5 + $0x8] sm:$0xf]
        %v3096 = vld [vmem:[%s5 + $0xc] sm:$0xf]
        %v3097 = vld [vmem:[%s5 + $0x10] sm:$0xf]
        %v3098 = vld [vmem:[%s5 + $0x14] sm:$0xf]
        %v3099 = vld [vmem:[%s5 + $0x18] sm:$0xf]
        %v3100 = vld [vmem:[%s5 + $0x1c] sm:$0xf]
        %v3101 = vld [vmem:[%s5 + $0x20] sm:$0xf]
        %v3102 = vld [vmem:[%s5 + $0x24] sm:$0xf]
        %v3103 = vld [vmem:[%s5 + $0x28] sm:$0xf]
        %v3104 = vld [vmem:[%s5 + $0x2c] sm:$0xf]
        %v3105 = vld [vmem:[%s5 + $0x30] sm:$0xf]
        %v3106 = vld [vmem:[%s5 + $0x34] sm:$0xf]
        %v3107 = vld [vmem:[%s5 + $0x38] sm:$0xf]
        %v3108 = vld [vmem:[%s5 + $0x3c] sm:$0xf]
        %v3109 = vld [vmem:[%s5 + $0x40] sm:$0xf]
        %v3110 = vld [vmem:[%s5 + $0x44] sm:$0xf]
        %v3111 = vld [vmem:[%s5 + $0x48] sm:$0xf]
        %v3112 = vld [vmem:[%s5 + $0x4c] sm:$0xf]
        %v3113 = vld [vmem:[%s5 + $0x50] sm:$0xf]
        %v3114 = vld [vmem:[%s5 + $0x54] sm:$0xf]
        %v3115 = vld [vmem:[%s5 + $0x58] sm:$0xf]
        %v3116 = vld [vmem:[%s5 + $0x5c] sm:$0xf]
        %v3117 = vld [vmem:[%s5 + $0x60] sm:$0xf]
        %v3118 = vld [vmem:[%s5 + $0x64] sm:$0xf]
        %v3119 = vld [vmem:[%s5 + $0x68] sm:$0xf]
        %v3120 = vld [vmem:[%s5 + $0x6c] sm:$0xf]
        %v3121 = vld [vmem:[%s5 + $0x70] sm:$0xf]
        %v3122 = vld [vmem:[%s5 + $0x74] sm:$0xf]
        %v3123 = vld [vmem:[%s5 + $0x78] sm:$0xf]
        %v3124 = vld [vmem:[%s5 + $0x7c] sm:$0xf]
        %v3125 = vld [vmem:[%s5 + $0x80] sm:$0xf]
        %v3126 = vld [vmem:[%s5 + $0x84] sm:$0xf]
        %v3127 = vld [vmem:[%s5 + $0x88] sm:$0xf]
        %v3128 = vld [vmem:[%s5 + $0x8c] sm:$0xf]
        %v3129 = vld [vmem:[%s5 + $0x90] sm:$0xf]
        %v3130 = vld [vmem:[%s5 + $0x94] sm:$0xf]
        %v3131 = vld [vmem:[%s5 + $0x98] sm:$0xf]
        %v3132 = vld [vmem:[%s5 + $0x9c] sm:$0xf]
        %v3133 = vld [vmem:[%s5 + $0xa0] sm:$0xf]
        %v3134 = vld [vmem:[%s5 + $0xa4] sm:$0xf]
        %v3135 = vld [vmem:[%s5 + $0xa8] sm:$0xf]
        %v3136 = vld [vmem:[%s5 + $0xac] sm:$0xf]
        %v3137 = vld [vmem:[%s5 + $0xb0] sm:$0xf]
        %v3138 = vld [vmem:[%s5 + $0xb4] sm:$0xf]
        %v3139 = vld [vmem:[%s5 + $0xb8] sm:$0xf]
        %v3140 = vld [vmem:[%s5 + $0xbc] sm:$0xf]
        %v3141 = vld [vmem:[%s5 + $0xc0] sm:$0xf]
        %v3142 = vld [vmem:[%s5 + $0xc4] sm:$0xf]
        %v3143 = vld [vmem:[%s5 + $0xc8] sm:$0xf]
        %v3144 = vld [vmem:[%s5 + $0xcc] sm:$0xf]
        %v3145 = vld [vmem:[%s5 + $0xd0] sm:$0xf]
        %v3146 = vld [vmem:[%s5 + $0xd4] sm:$0xf]
        %v3147 = vld [vmem:[%s5 + $0xd8] sm:$0xf]
        %v3148 = vld [vmem:[%s5 + $0xdc] sm:$0xf]
        %v3149 = vld [vmem:[%s5 + $0xe0] sm:$0xf]
        %v3150 = vld [vmem:[%s5 + $0xe4] sm:$0xf]
        %v3151 = vld [vmem:[%s5 + $0xe8] sm:$0xf]
        %v3152 = vld [vmem:[%s5 + $0xec] sm:$0xf]
        %v3153 = vld [vmem:[%s5 + $0xf0] sm:$0xf]
        %v3154 = vld [vmem:[%s5 + $0xf4] sm:$0xf]
        %v3155 = vld [vmem:[%s5 + $0xf8] sm:$0xf]
        %v3156 = vld [vmem:[%s5 + $0xfc] sm:$0xf]
        %v3157 = vld [vmem:[%s5 + $0x100] sm:$0xf]
        %v3158 = vld [vmem:[%s5 + $0x104] sm:$0xf]
        %v3159 = vld [vmem:[%s5 + $0x108] sm:$0xf]
        %v3160 = vld [vmem:[%s5 + $0x10c] sm:$0xf]
        %v3161 = vld [vmem:[%s5 + $0x110] sm:$0xf]
        %v3162 = vld [vmem:[%s5 + $0x114] sm:$0xf]
        %v3163 = vld [vmem:[%s5 + $0x118] sm:$0xf]
        %v3164 = vld [vmem:[%s5 + $0x11c] sm:$0xf]
        %v3165 = vld [vmem:[%s5 + $0x120] sm:$0xf]
        %v3166 = vld [vmem:[%s5 + $0x124] sm:$0xf]
        %v3167 = vld [vmem:[%s5 + $0x128] sm:$0xf]
        %v3168 = vld [vmem:[%s5 + $0x12c] sm:$0xf]
        %v3169 = vld [vmem:[%s5 + $0x130] sm:$0xf]
        %v3170 = vld [vmem:[%s5 + $0x134] sm:$0xf]
        %v3171 = vld [vmem:[%s5 + $0x138] sm:$0xf]
        %v3172 = vld [vmem:[%s5 + $0x13c] sm:$0xf]
        %v3173 = vld [vmem:[%s5 + $0x140] sm:$0xf]
        %v3174 = vld [vmem:[%s5 + $0x144] sm:$0xf]
        %v3175 = vld [vmem:[%s5 + $0x148] sm:$0xf]
        %v3176 = vld [vmem:[%s5 + $0x14c] sm:$0xf]
        %v3177 = vld [vmem:[%s5 + $0x150] sm:$0xf]
        %v3178 = vld [vmem:[%s5 + $0x154] sm:$0xf]
        %v3179 = vld [vmem:[%s5 + $0x158] sm:$0xf]
        %v3180 = vld [vmem:[%s5 + $0x15c] sm:$0xf]
        %v3181 = vld [vmem:[%s5 + $0x160] sm:$0xf]
        %v3182 = vld [vmem:[%s5 + $0x164] sm:$0xf]
        %v3183 = vld [vmem:[%s5 + $0x168] sm:$0xf]
        %v3184 = vld [vmem:[%s5 + $0x16c] sm:$0xf]
        %v3185 = vld [vmem:[%s5 + $0x170] sm:$0xf]
        %v3186 = vld [vmem:[%s5 + $0x174] sm:$0xf]
        %v3187 = vld [vmem:[%s5 + $0x178] sm:$0xf]
        %v3188 = vld [vmem:[%s5 + $0x17c] sm:$0xf]
        %v3189 = vld [vmem:[%s5 + $0x180] sm:$0xf]
        %v3190 = vld [vmem:[%s5 + $0x184] sm:$0xf]
        %v3191 = vld [vmem:[%s5 + $0x188] sm:$0xf]
        %v3192 = vld [vmem:[%s5 + $0x18c] sm:$0xf]
        %v3193 = vld [vmem:[%s5 + $0x190] sm:$0xf]
        %v3194 = vld [vmem:[%s5 + $0x194] sm:$0xf]
        %v3195 = vld [vmem:[%s5 + $0x198] sm:$0xf]
        %v3196 = vld [vmem:[%s5 + $0x19c] sm:$0xf]
        %v3197 = vld [vmem:[%s5 + $0x1a0] sm:$0xf]
        %v3198 = vld [vmem:[%s5 + $0x1a4] sm:$0xf]
        %v3199 = vld [vmem:[%s5 + $0x1a8] sm:$0xf]
        %v3200 = vld [vmem:[%s5 + $0x1ac] sm:$0xf]
        %v3201 = vld [vmem:[%s5 + $0x1b0] sm:$0xf]
        %v3202 = vld [vmem:[%s5 + $0x1b4] sm:$0xf]
        %v3203 = vld [vmem:[%s5 + $0x1b8] sm:$0xf]
        %v3204 = vld [vmem:[%s5 + $0x1bc] sm:$0xf]
        %v3317 = vunpack.c.l.b16 %v3093
        %v3318 = vunpack.c.l.b16 %v3094
        %v3319 = vunpack.c.l.b16 %v3095
        %v3320 = vunpack.c.l.b16 %v3096
        %v3321 = vunpack.c.l.b16 %v3097
        %v3322 = vunpack.c.l.b16 %v3098
        %v3323 = vunpack.c.l.b16 %v3099
        %v3324 = vunpack.c.l.b16 %v3100
        %v3325 = vunpack.c.l.b16 %v3101
        %v3326 = vunpack.c.l.b16 %v3102
        %v3327 = vunpack.c.l.b16 %v3103
        %v3328 = vunpack.c.l.b16 %v3104
        %v3329 = vunpack.c.l.b16 %v3105
        %v3330 = vunpack.c.l.b16 %v3106
        %v3331 = vunpack.c.l.b16 %v3107
        %v3332 = vunpack.c.l.b16 %v3108
        %v3333 = vunpack.c.l.b16 %v3109
        %v3334 = vunpack.c.l.b16 %v3110
        %v3335 = vunpack.c.l.b16 %v3111
        %v3336 = vunpack.c.l.b16 %v3112
        %v3337 = vunpack.c.l.b16 %v3113
        %v3338 = vunpack.c.l.b16 %v3114
        %v3339 = vunpack.c.l.b16 %v3115
        %v3340 = vunpack.c.l.b16 %v3116
        %v3341 = vunpack.c.l.b16 %v3117
        %v3342 = vunpack.c.l.b16 %v3118
        %v3343 = vunpack.c.l.b16 %v3119
        %v3344 = vunpack.c.l.b16 %v3120
        %v3345 = vunpack.c.l.b16 %v3121
        %v3346 = vunpack.c.l.b16 %v3122
        %v3347 = vunpack.c.l.b16 %v3123
        %v3348 = vunpack.c.l.b16 %v3124
        %v3349 = vunpack.c.l.b16 %v3125
        %v3350 = vunpack.c.l.b16 %v3126
        %v3351 = vunpack.c.l.b16 %v3127
        %v3352 = vunpack.c.l.b16 %v3128
        %v3353 = vunpack.c.l.b16 %v3129
        %v3354 = vunpack.c.l.b16 %v3130
        %v3355 = vunpack.c.l.b16 %v3131
        %v3356 = vunpack.c.l.b16 %v3132
        %v3357 = vunpack.c.l.b16 %v3133
        %v3358 = vunpack.c.l.b16 %v3134
        %v3359 = vunpack.c.l.b16 %v3135
        %v3360 = vunpack.c.l.b16 %v3136
        %v3361 = vunpack.c.l.b16 %v3137
        %v3362 = vunpack.c.l.b16 %v3138
        %v3363 = vunpack.c.l.b16 %v3139
        %v3364 = vunpack.c.l.b16 %v3140
        %v3365 = vunpack.c.l.b16 %v3141
        %v3366 = vunpack.c.l.b16 %v3142
        %v3367 = vunpack.c.l.b16 %v3143
        %v3368 = vunpack.c.l.b16 %v3144
        %v3369 = vunpack.c.l.b16 %v3145
        %v3370 = vunpack.c.l.b16 %v3146
        %v3371 = vunpack.c.l.b16 %v3147
        %v3372 = vunpack.c.l.b16 %v3148
        %v3373 = vunpack.c.l.b16 %v3149
        %v3374 = vunpack.c.l.b16 %v3150
        %v3375 = vunpack.c.l.b16 %v3151
        %v3376 = vunpack.c.l.b16 %v3152
        %v3377 = vunpack.c.l.b16 %v3153
        %v3378 = vunpack.c.l.b16 %v3154
        %v3379 = vunpack.c.l.b16 %v3155
        %v3380 = vunpack.c.l.b16 %v3156
        %v3381 = vunpack.c.l.b16 %v3157
        %v3382 = vunpack.c.l.b16 %v3158
        %v3383 = vunpack.c.l.b16 %v3159
        %v3384 = vunpack.c.l.b16 %v3160
        %v3385 = vunpack.c.l.b16 %v3161
        %v3386 = vunpack.c.l.b16 %v3162
        %v3387 = vunpack.c.l.b16 %v3163
        %v3388 = vunpack.c.l.b16 %v3164
        %v3389 = vunpack.c.l.b16 %v3165
        %v3390 = vunpack.c.l.b16 %v3166
        %v3391 = vunpack.c.l.b16 %v3167
        %v3392 = vunpack.c.l.b16 %v3168
        %v3393 = vunpack.c.l.b16 %v3169
        %v3394 = vunpack.c.l.b16 %v3170
        %v3395 = vunpack.c.l.b16 %v3171
        %v3396 = vunpack.c.l.b16 %v3172
        %v3397 = vunpack.c.l.b16 %v3173
        %v3398 = vunpack.c.l.b16 %v3174
        %v3399 = vunpack.c.l.b16 %v3175
        %v3400 = vunpack.c.l.b16 %v3176
        %v3401 = vunpack.c.l.b16 %v3177
        %v3402 = vunpack.c.l.b16 %v3178
        %v3403 = vunpack.c.l.b16 %v3179
        %v3404 = vunpack.c.l.b16 %v3180
        %v3405 = vunpack.c.l.b16 %v3181
        %v3406 = vunpack.c.l.b16 %v3182
        %v3407 = vunpack.c.l.b16 %v3183
        %v3408 = vunpack.c.l.b16 %v3184
        %v3409 = vunpack.c.l.b16 %v3185
        %v3410 = vunpack.c.l.b16 %v3186
        %v3411 = vunpack.c.l.b16 %v3187
        %v3412 = vunpack.c.l.b16 %v3188
        %v3413 = vunpack.c.l.b16 %v3189
        %v3414 = vunpack.c.l.b16 %v3190
        %v3415 = vunpack.c.l.b16 %v3191
        %v3416 = vunpack.c.l.b16 %v3192
        %v3417 = vunpack.c.l.b16 %v3193
        %v3418 = vunpack.c.l.b16 %v3194
        %v3419 = vunpack.c.l.b16 %v3195
        %v3420 = vunpack.c.l.b16 %v3196
        %v3421 = vunpack.c.l.b16 %v3197
        %v3422 = vunpack.c.l.b16 %v3198
        %v3423 = vunpack.c.l.b16 %v3199
        %v3424 = vunpack.c.l.b16 %v3200
        %v3425 = vunpack.c.l.b16 %v3201
        %v3426 = vunpack.c.l.b16 %v3202
        %v3427 = vunpack.c.l.b16 %v3203
        %v3428 = vunpack.c.l.b16 %v3204
        %v3429 = vpack.c.b16 %v3318, %v3317
        %v3430 = vpack.c.b16 %v3320, %v3319
        %v3431 = vpack.c.b16 %v3322, %v3321
        %v3432 = vpack.c.b16 %v3324, %v3323
        %v3433 = vpack.c.b16 %v3326, %v3325
        %v3434 = vpack.c.b16 %v3328, %v3327
        %v3435 = vpack.c.b16 %v3330, %v3329
        %v3436 = vpack.c.b16 %v3332, %v3331
        %v3437 = vpack.c.b16 %v3334, %v3333
        %v3438 = vpack.c.b16 %v3336, %v3335
        %v3439 = vpack.c.b16 %v3338, %v3337
        %v3440 = vpack.c.b16 %v3340, %v3339
        %v3441 = vpack.c.b16 %v3342, %v3341
        %v3442 = vpack.c.b16 %v3344, %v3343
        %v3443 = vpack.c.b16 %v3346, %v3345
        %v3444 = vpack.c.b16 %v3348, %v3347
        %v3445 = vpack.c.b16 %v3350, %v3349
        %v3446 = vpack.c.b16 %v3352, %v3351
        %v3447 = vpack.c.b16 %v3354, %v3353
        %v3448 = vpack.c.b16 %v3356, %v3355
        %v3449 = vpack.c.b16 %v3358, %v3357
        %v3450 = vpack.c.b16 %v3360, %v3359
        %v3451 = vpack.c.b16 %v3362, %v3361
        %v3452 = vpack.c.b16 %v3364, %v3363
        %v3453 = vpack.c.b16 %v3366, %v3365
        %v3454 = vpack.c.b16 %v3368, %v3367
        %v3455 = vpack.c.b16 %v3370, %v3369
        %v3456 = vpack.c.b16 %v3372, %v3371
        %v3457 = vpack.c.b16 %v3374, %v3373
        %v3458 = vpack.c.b16 %v3376, %v3375
        %v3459 = vpack.c.b16 %v3378, %v3377
        %v3460 = vpack.c.b16 %v3380, %v3379
        %v3461 = vpack.c.b16 %v3382, %v3381
        %v3462 = vpack.c.b16 %v3384, %v3383
        %v3463 = vpack.c.b16 %v3386, %v3385
        %v3464 = vpack.c.b16 %v3388, %v3387
        %v3465 = vpack.c.b16 %v3390, %v3389
        %v3466 = vpack.c.b16 %v3392, %v3391
        %v3467 = vpack.c.b16 %v3394, %v3393
        %v3468 = vpack.c.b16 %v3396, %v3395
        %v3469 = vpack.c.b16 %v3398, %v3397
        %v3470 = vpack.c.b16 %v3400, %v3399
        %v3471 = vpack.c.b16 %v3402, %v3401
        %v3472 = vpack.c.b16 %v3404, %v3403
        %v3473 = vpack.c.b16 %v3406, %v3405
        %v3474 = vpack.c.b16 %v3408, %v3407
        %v3475 = vpack.c.b16 %v3410, %v3409
        %v3476 = vpack.c.b16 %v3412, %v3411
        %v3477 = vpack.c.b16 %v3414, %v3413
        %v3478 = vpack.c.b16 %v3416, %v3415
        %v3479 = vpack.c.b16 %v3418, %v3417
        %v3480 = vpack.c.b16 %v3420, %v3419
        %v3481 = vpack.c.b16 %v3422, %v3421
        %v3482 = vpack.c.b16 %v3424, %v3423
        %v3483 = vpack.c.b16 %v3426, %v3425
        %v3484 = vpack.c.b16 %v3428, %v3427
        %3541 = vmatprep.subr.bf16.mxu0 0
        %3542 = vmatpush1.bf16.msra.mxu0 %v3429
        %3543 = vmatprep.subr.bf16.mxu0 0
        %3544 = vmatpush1.bf16.msra.mxu0 %v3430
        %3545 = vmatprep.subr.bf16.mxu0 0
        %3546 = vmatpush1.bf16.msra.mxu0 %v3431
        %3547 = vmatprep.subr.bf16.mxu0 0
        %3548 = vmatpush1.bf16.msra.mxu0 %v3432
        %3549 = vmatprep.subr.bf16.mxu0 0
        %3550 = vmatpush1.bf16.msra.mxu0 %v3433
        %3551 = vmatprep.subr.bf16.mxu0 0
        %3552 = vmatpush1.bf16.msra.mxu0 %v3434
        %3553 = vmatprep.subr.bf16.mxu0 0
        %3554 = vmatpush1.bf16.msra.mxu0 %v3435
        %3555 = vmatprep.subr.bf16.mxu0 0
        %3556 = vmatpush1.bf16.msra.mxu0 %v3436
        %3557 = vmatprep.subr.bf16.mxu0 0
        %3558 = vmatpush1.bf16.msra.mxu0 %v3437
        %3559 = vmatprep.subr.bf16.mxu0 0
        %3560 = vmatpush1.bf16.msra.mxu0 %v3438
        %3561 = vmatprep.subr.bf16.mxu0 0
        %3562 = vmatpush1.bf16.msra.mxu0 %v3439
        %3563 = vmatprep.subr.bf16.mxu0 0
        %3564 = vmatpush1.bf16.msra.mxu0 %v3440
        %3565 = vmatprep.subr.bf16.mxu0 0
        %3566 = vmatpush1.bf16.msra.mxu0 %v3441
        %3567 = vmatprep.subr.bf16.mxu0 0
        %3568 = vmatpush1.bf16.msra.mxu0 %v3442
        %3569 = vmatprep.subr.bf16.mxu0 0
        %3570 = vmatpush1.bf16.msra.mxu0 %v3443
        %3571 = vmatprep.subr.bf16.mxu0 0
        %3572 = vmatpush1.bf16.msra.mxu0 %v3444
        %3573 = vmatprep.mubr.bf16.mxu0 %v3080
        %3574 = vmatmul.mubr.bf16.gmra.mrb[0].mxu0 %v3079
        %v3575 = vpop.f32.mrb[0].mxu0
        %v3576 = vadd.f32 0.0, %v3575
        %v3577 = vpop.f32.mrb[0].mxu0
        %v3578 = vpop.f32.mrb[0].mxu0
        %v3579 = vadd.f32 0.0, %v3578
        %v3580 = vpop.f32.mrb[0].mxu0
        %3581 = vmatprep.mubr.bf16.mxu0 %v3087
        %3582 = vmatmul.mubr.bf16.gmra.mrb[0].mxu0 %v3086
        %v3583 = vpop.f32.mrb[0].mxu0
        %v3584 = vadd.f32 0.0, %v3583
        %v3585 = vpop.f32.mrb[0].mxu0
        %v3586 = vpop.f32.mrb[0].mxu0
        %v3587 = vpop.f32.mrb[0].mxu0
        %3588 = vdwg.mxu0
        %3589 = vmatprep.subr.bf16.mxu0 0
        %3590 = vmatpush1.bf16.msra.mxu0 %v3445
        %3591 = vmatprep.subr.bf16.mxu0 0
        %3592 = vmatpush1.bf16.msra.mxu0 %v3446
        %3593 = vmatprep.subr.bf16.mxu0 0
        %3594 = vmatpush1.bf16.msra.mxu0 %v3447
        %3595 = vmatprep.subr.bf16.mxu0 0
        %3596 = vmatpush1.bf16.msra.mxu0 %v3448
        %3597 = vmatprep.subr.bf16.mxu0 0
        %3598 = vmatpush1.bf16.msra.mxu0 %v3449
        %3599 = vmatprep.subr.bf16.mxu0 0
        %3600 = vmatpush1.bf16.msra.mxu0 %v3450
        %3601 = vmatprep.subr.bf16.mxu0 0
        %3602 = vmatpush1.bf16.msra.mxu0 %v3451
        %3603 = vmatprep.subr.bf16.mxu0 0
        %3604 = vmatpush1.bf16.msra.mxu0 %v3452
        %3605 = vmatprep.subr.bf16.mxu0 0
        %3606 = vmatpush1.bf16.msra.mxu0 %v3453
        %3607 = vmatprep.subr.bf16.mxu0 0
        %3608 = vmatpush1.bf16.msra.mxu0 %v3454
        %3609 = vmatprep.subr.bf16.mxu0 0
        %3610 = vmatpush1.bf16.msra.mxu0 %v3455
        %3611 = vmatprep.subr.bf16.mxu0 0
        %3612 = vmatpush1.bf16.msra.mxu0 %v3456
        %3613 = vmatprep.subr.bf16.mxu0 0
        %3614 = vmatpush1.bf16.msra.mxu0 %v3457
        %3615 = vmatprep.subr.bf16.mxu0 0
        %3616 = vmatpush1.bf16.msra.mxu0 %v3458
        %3617 = vmatprep.subr.bf16.mxu0 0
        %3618 = vmatpush1.bf16.msra.mxu0 %v3459
        %3619 = vmatprep.subr.bf16.mxu0 0
        %3620 = vmatpush1.bf16.msra.mxu0 %v3460
        %3621 = vmatprep.mubr.bf16.mxu0 %v3082
        %3622 = vmatmul.mubr.bf16.gmra.mrb[0].mxu0 %v3081
        %v3623 = vpop.f32.mrb[0].mxu0
        %v3624 = vadd.f32 %v3576, %v3623
        %v3625 = vpop.f32.mrb[0].mxu0
        %v3626 = vpop.f32.mrb[0].mxu0
        %v3627 = vadd.f32 %v3579, %v3626
        %v3628 = vpop.f32.mrb[0].mxu0
        %3629 = vmatprep.mubr.bf16.mxu0 %v3089
        %3630 = vmatmul.mubr.bf16.gmra.mrb[0].mxu0 %v3088
        %v3631 = vpop.f32.mrb[0].mxu0
        %v3632 = vadd.f32 %v3584, %v3631
        %v3633 = vpop.f32.mrb[0].mxu0
        %v3634 = vpop.f32.mrb[0].mxu0
        %v3635 = vpop.f32.mrb[0].mxu0
        %3636 = vdwg.mxu0
        %3637 = vmatprep.subr.bf16.mxu0 0
        %3638 = vmatpush1.bf16.msra.mxu0 %v3461
        %3639 = vmatprep.subr.bf16.mxu0 0
        %3640 = vmatpush1.bf16.msra.mxu0 %v3462
        %3641 = vmatprep.subr.bf16.mxu0 0
        %3642 = vmatpush1.bf16.msra.mxu0 %v3463
        %3643 = vmatprep.subr.bf16.mxu0 0
        %3644 = vmatpush1.bf16.msra.mxu0 %v3464
        %3645 = vmatprep.subr.bf16.mxu0 0
        %3646 = vmatpush1.bf16.msra.mxu0 %v3465
        %3647 = vmatprep.subr.bf16.mxu0 0
        %3648 = vmatpush1.bf16.msra.mxu0 %v3466
        %3649 = vmatprep.subr.bf16.mxu0 0
        %3650 = vmatpush1.bf16.msra.mxu0 %v3467
        %3651 = vmatprep.subr.bf16.mxu0 0
        %3652 = vmatpush1.bf16.msra.mxu0 %v3468
        %3653 = vmatprep.subr.bf16.mxu0 0
        %3654 = vmatpush1.bf16.msra.mxu0 %v3469
        %3655 = vmatprep.subr.bf16.mxu0 0
        %3656 = vmatpush1.bf16.msra.mxu0 %v3470
        %3657 = vmatprep.subr.bf16.mxu0 0
        %3658 = vmatpush1.bf16.msra.mxu0 %v3471
        %3659 = vmatprep.subr.bf16.mxu0 0
        %3660 = vmatpush1.bf16.msra.mxu0 %v3472
        %3661 = vmatprep.subr.bf16.mxu0 0
        %3662 = vmatpush1.bf16.msra.mxu0 %v3473
        %3663 = vmatprep.subr.bf16.mxu0 0
        %3664 = vmatpush1.bf16.msra.mxu0 %v3474
        %3665 = vmatprep.subr.bf16.mxu0 0
        %3666 = vmatpush1.bf16.msra.mxu0 %v3475
        %3667 = vmatprep.subr.bf16.mxu0 0
        %3668 = vmatpush1.bf16.msra.mxu0 %v3476
        %3669 = vmatprep.mubr.bf16.mxu0 %v3084
        %3670 = vmatmul.mubr.bf16.gmra.mrb[0].mxu0 %v3083
        %v3671 = vpop.f32.mrb[0].mxu0
        %v3672 = vadd.f32 %v3624, %v3671
        %v3673 = vpop.f32.mrb[0].mxu0
        %v3674 = vpop.f32.mrb[0].mxu0
        %v3675 = vadd.f32 %v3627, %v3674
        %v3676 = vpop.f32.mrb[0].mxu0
        %3677 = vmatprep.mubr.bf16.mxu0 %v3091
        %3678 = vmatmul.mubr.bf16.gmra.mrb[0].mxu0 %v3090
        %v3679 = vpop.f32.mrb[0].mxu0
        %v3680 = vadd.f32 %v3632, %v3679
        %v3681 = vpop.f32.mrb[0].mxu0
        %v3682 = vpop.f32.mrb[0].mxu0
        %v3683 = vpop.f32.mrb[0].mxu0
        %3684 = vdwg.mxu0
        %3685 = vmatprep.subr.bf16.mxu0 0
        %3686 = vmatpush1.bf16.msra.mxu0 %v3477
        %3687 = vmatprep.subr.bf16.mxu0 0
        %3688 = vmatpush1.bf16.msra.mxu0 %v3478
        %3689 = vmatprep.subr.bf16.mxu0 0
        %3690 = vmatpush1.bf16.msra.mxu0 %v3479
        %3691 = vmatprep.subr.bf16.mxu0 0
        %3692 = vmatpush1.bf16.msra.mxu0 %v3480
        %3693 = vmatprep.subr.bf16.mxu0 0
        %3694 = vmatpush1.bf16.msra.mxu0 %v3481
        %3695 = vmatprep.subr.bf16.mxu0 0
        %3696 = vmatpush1.bf16.msra.mxu0 %v3482
        %3697 = vmatprep.subr.bf16.mxu0 0
        %3698 = vmatpush1.bf16.msra.mxu0 %v3483
        %3699 = vmatprep.subr.bf16.mxu0 0
        %3700 = vmatpush1.bf16.msra.mxu0 %v3484
        %3701 = vmatprep.subr.bf16.mxu0 0
        %3702 = vmatpush1.bf16.msra.mxu0 0
        %3703 = vmatprep.subr.bf16.mxu0 0
        %3704 = vmatpush1.bf16.msra.mxu0 0
        %3705 = vmatprep.subr.bf16.mxu0 0
        %3706 = vmatpush1.bf16.msra.mxu0 0
        %3707 = vmatprep.subr.bf16.mxu0 0
        %3708 = vmatpush1.bf16.msra.mxu0 0
        %3709 = vmatprep.subr.bf16.mxu0 0
        %3710 = vmatpush1.bf16.msra.mxu0 0
        %3711 = vmatprep.subr.bf16.mxu0 0
        %3712 = vmatpush1.bf16.msra.mxu0 0
        %3713 = vmatprep.subr.bf16.mxu0 0
        %3714 = vmatpush1.bf16.msra.mxu0 0
        %3715 = vmatprep.subr.bf16.mxu0 0
        %3716 = vmatpush1.bf16.msra.mxu0 0
        %3717 = vmatprep.mubr.bf16.mxu0 0
        %3718 = vmatmul.mubr.bf16.gmra.mrb[0].mxu0 %v3085
        %v3719 = vpop.f32.mrb[0].mxu0
        %v3720 = vadd.f32 %v3672, %v3719
        %v3721 = vpop.f32.mrb[0].mxu0
        %v3722 = vpop.f32.mrb[0].mxu0
        %v3723 = vadd.f32 %v3675, %v3722
        %v3724 = vpop.f32.mrb[0].mxu0
        %3725 = vmatprep.mubr.bf16.mxu0 0
        %3726 = vmatmul.mubr.bf16.gmra.mrb[0].mxu0 %v3092
        %v3727 = vpop.f32.mrb[0].mxu0
        %v3728 = vadd.f32 %v3680, %v3727
        %v3729 = vpop.f32.mrb[0].mxu0
        %v3730 = vpop.f32.mrb[0].mxu0
        %v3731 = vpop.f32.mrb[0].mxu0
        %3732 = vdwg.mxu0
        %3733 = vst.msk [vmem:[%s315] sm:$0xff] %vm2236, %v3720
        %3734 = vst.msk [vmem:[%s315 + $0x8] sm:$0xff] %vm2236, %v3723
        %3735 = vst.msk [vmem:[%s315 + $0x10] sm:$0xff] %vm2236, %v3728
        %s3736 = sand.u32 %s170, 1
        %s3737 = scalar_lea.sflag [#allocation4], %s3736
        %s3738 = sand.u32 %s170, 1
        %s3739 = smul.addr %s3738, 168
        %s3740 = scalar_lea.vmem [#allocation5], %s3739
        %s3741 = sand.u32 %s196, 1
        %s3742 = scalar_lea.sflag [#allocation7], %s3741
        %s3743 = sand.u32 %s196, 1
        %s3744 = smul.addr %s3743, 24
        %s3745 = scalar_lea.vmem [#allocation6], %s3744
        // Predicated region
        $region49: #{tpu_custom_call.1} parent=43 // pred_check
          %p3746 = pneg %p180
        $region50: #{tpu_custom_call.1} parent=43 // pred_check_branch
          %3748 = sbr.rel (%p3746) target = $region52
        $region51: #{tpu_custom_call.1} parent=43 // pred_region
          %s3750 = ssub.s32 2688, 2688
          %3751 = vsyncadd %s3737, %s3750
          %s3752 = smul.addr %s26, 7
          %s3753 = smul.addr %s3752, 128
          %s3754 = scalar_lea.hbm %s6, %s3753
          %s3755 = sshll.u32 %s3740, 4
          %s3756 = int_to_ptr.vmem [resolvable:$true] %s3755
          %3761 = dma.vmem_to_hbm [thread:$0]  %s3756, 2688, %s3754, %s3737, 896, 1792, 56
        $region52: #{tpu_custom_call.1} parent=43 // pred_fallthru
          _
        // Predicated region
        $region53: #{tpu_custom_call.1} parent=43 // pred_check
          %p3762 = pneg %p206
        $region54: #{tpu_custom_call.1} parent=43 // pred_check_branch
          %3764 = sbr.rel (%p3762) target = $region56
        $region55: #{tpu_custom_call.1} parent=43 // pred_region
          %s3766 = ssub.s32 384, 384
          %3767 = vsyncadd %s3742, %s3766
          %s3768 = smul.addr %s26, 128
          %s3769 = scalar_lea.hbm %s7, %s3768
          %s3770 = sshll.u32 %s3745, 4
          %s3771 = int_to_ptr.vmem [resolvable:$true] %s3770
          %3776 = dma.vmem_to_hbm [thread:$0]  %s3771, 384, %s3769, %s3742, 128, 256, 8
        $region56: #{tpu_custom_call.1} parent=43 // pred_fallthru
          _
      $region44: #{tpu_custom_call.1} parent=5 // pred_fallthru
        _
      %p3777 = scmp.le.s32.totalorder 2, %s21
      // Predicated region
      $region57: #{tpu_custom_call.1} parent=5 // pred_check
        %p3778 = pneg %p3777
      $region58: #{tpu_custom_call.1} parent=5 // pred_check_branch
        %3780 = sbr.rel (%p3778) target = $region60
      $region59: #{tpu_custom_call.1} parent=5 // pred_region
        %s3781 = ssub.s32 %s21, 2
        // Predicated region
        $region61: #{tpu_custom_call.1} parent=59 // pred_check
          %p3782 = pneg %p186
        $region62: #{tpu_custom_call.1} parent=59 // pred_check_branch
          %3784 = sbr.rel (%p3782) target = $region64
        $region63: #{tpu_custom_call.1} parent=59 // pred_region
          %s3785 = sand.u32 %s171, 1
          %s3786 = scalar_lea.sflag [#allocation4], %s3785
          %s3787 = sand.u32 %s171, 1
          %s3788 = smul.addr %s3787, 168
          %s3789 = scalar_lea.vmem [#allocation5], %s3788
          %3790 = dma.done %s3786, 2688
        $region64: #{tpu_custom_call.1} parent=59 // pred_fallthru
          _
        // Predicated region
        $region65: #{tpu_custom_call.1} parent=59 // pred_check
          %p3791 = pneg %p212
        $region66: #{tpu_custom_call.1} parent=59 // pred_check_branch
          %3793 = sbr.rel (%p3791) target = $region68
        $region67: #{tpu_custom_call.1} parent=59 // pred_region
          %s3794 = sand.u32 %s197, 1
          %s3795 = scalar_lea.sflag [#allocation7], %s3794
          %s3796 = sand.u32 %s197, 1
          %s3797 = smul.addr %s3796, 24
          %s3798 = scalar_lea.vmem [#allocation6], %s3797
          %3799 = dma.done %s3795, 384
        $region68: #{tpu_custom_call.1} parent=59 // pred_fallthru
          _
      $region60: #{tpu_custom_call.1} parent=5 // pred_fallthru
        _
    $region6: #{tpu_custom_call.1} parent=1 // loop_footer
      %s25 = sadd.s32 1, %s21
    $region7: #{tpu_custom_call.1} parent=1 // loop_footer_branch
      %20 = sbr.rel target = $region3
    $region8: #{tpu_custom_call.1} parent=1 // loop_exit
      _
    %3800 = vsyncpa [#allocation3], 1
    %s3801 = scalar_lea.sflag [#allocation3], 1
    %3802 = vsyncpa %s3801, 1
    %3803 = vsyncpa [#allocation4], 1
    %s3804 = scalar_lea.sflag [#allocation4], 1
    %3805 = vsyncpa %s3804, 1
    %3806 = vsyncpa [#allocation7], 1
    %s3807 = scalar_lea.sflag [#allocation7], 1
    %3808 = vsyncpa %s3807, 1

</llo_original>
